<compile_context>
chip_gen: v7x
topology: tpu7x:2x2x1
jax: 0.10.0
libtpu: 0.0.40
codegen_flags: <defaults>
</compile_context>

<pallas_src>
import functools

import jax
import jax.numpy as jnp
from jax.experimental import pallas as pl
from jax.experimental.pallas import tpu as pltpu

# ---- problem sizes (small, consistent with the module's forward) ----------
N, C, H, W = 2, 4, 16, 16        # batch, channels, spatial
K = 3                            # conv kernel size of the synthetic denoiser
L_CONST = 1.5                    # self.l (gamma-noise scale), deterministic


def _sure_gamma_kernel(w_ref, b_ref, y_ref, o_ref, ypad_ref, *, l, k):
    """w_ref:    SMEM f32[C_out*C_in*K*K] flat OIHW weights
       b_ref:    SMEM f32[C_out] bias
       y_ref:    VMEM f32[1, C_in, H, W]   (one batch element, unpadded)
       o_ref:    VMEM f32[1, C_out, H*W]   (lane-dense output slab)
       ypad_ref: VMEM f32[C_in, H+2p, W+2p] scratch (zero-padded planes)"""
    c_in, hp, wp = ypad_ref.shape
    pad = k // 2
    h, w = hp - 2 * pad, wp - 2 * pad
    c_out = b_ref.shape[0]

    # Fused zero padding: zero the scratch every step (megacore-safe: each
    # TensorCore has its own scratch), then copy the block into the interior.
    ypad_ref[...] = jnp.zeros(ypad_ref.shape, ypad_ref.dtype)
    ypad_ref[:, pad:pad + h, pad:pad + w] = y_ref[0]

    # Bias-initialised accumulators, one (h, w) plane per output channel.
    accs = [jnp.full((h, w), b_ref[co], dtype=jnp.float32) for co in range(c_out)]

    # Fully unrolled 3x3 conv on the VPU (channels are tiny; MXU would idle).
    # The kw lane shift is hoisted: 3 shifted slabs per input channel instead
    # of 9; kh is a cheap sublane-only slice of the loaded slab.
    for ci in range(c_in):
        for kw in range(k):
            slab = ypad_ref[ci, :, kw:kw + w]              # (hp, w)
            for kh in range(k):
                win = slab[kh:kh + h, :]                   # (h, w) sublane slice
                for co in range(c_out):
                    wgt = w_ref[co * (c_in * k * k) + ci * (k * k) + kh * k + kw]
                    accs[co] = accs[co] + wgt * win

    # SureGammaModel.forward: -l / model(y, physics); store lane-dense.
    denom = jnp.stack(accs, axis=0)                        # (c_out, h, w)
    o_ref[0] = ((-l) / denom).reshape(c_out, h * w)        # (c_out, h*w) slab


def sure_gamma_forward(y, weight, bias, l=L_CONST, physics=None):
    """y: f32[N, C, H, W]; weight: f32[C, C, K, K] (OIHW); bias: f32[C]."""
    del physics  # the synthetic denoiser ignores the physics operand
    n, c, h, w = y.shape
    k = weight.shape[-1]
    pad = k // 2

    w_flat = weight.reshape(-1).astype(jnp.float32)   # SMEM wants flat 1-D
    b_flat = bias.astype(jnp.float32)

    kernel = functools.partial(_sure_gamma_kernel, l=float(l), k=k)

    out_flat = pl.pallas_call(
        kernel,
        out_shape=jax.ShapeDtypeStruct((n, c, h * w), jnp.float32),
        grid_spec=pltpu.PrefetchScalarGridSpec(
            num_scalar_prefetch=0,
            grid=(n,),                                          # batch only
            in_specs=[
                pl.BlockSpec(memory_space=pltpu.MemorySpace.SMEM),   # weights
                pl.BlockSpec(memory_space=pltpu.MemorySpace.SMEM),   # bias
                pl.BlockSpec((1, c, h, w), lambda i: (i, 0, 0, 0)),  # y (unpadded)
            ],
            out_specs=pl.BlockSpec((1, c, h * w), lambda i: (i, 0, 0)),
            scratch_shapes=[
                pltpu.VMEM((c, h + 2 * pad, w + 2 * pad), jnp.float32),
            ],
        ),
        compiler_params=pltpu.CompilerParams(
            dimension_semantics=("parallel",)),   # v7x: 2 batch elems -> 2 TCs
    )(w_flat, b_flat, y.astype(jnp.float32))

    return out_flat.reshape(n, c, h, w)


def _reference(y, weight, bias):
    conv = jax.lax.conv_general_dilated(
        y, weight, window_strides=(1, 1), padding="SAME",
        dimension_numbers=("NCHW", "OIHW", "NCHW"),
        precision=jax.lax.Precision.HIGHEST)
    conv = conv + bias[None, :, None, None]
    return -L_CONST / conv


if __name__ == "__main__":
    key = jax.random.PRNGKey(0)
    k_y, k_w = jax.random.split(key, 2)

    # Deterministic synthetic inputs / parameters. Positive inputs, positive
    # conv weights and positive bias keep the denominator of -l/model(y)
    # bounded in ~[1.0, 5.5], so the comparison is numerically well posed.
    y = jax.random.uniform(k_y, (N, C, H, W), jnp.float32, minval=0.5, maxval=1.5)
    weight = 0.03 + 0.05 * jax.random.uniform(k_w, (C, C, K, K), jnp.float32)
    bias = jnp.linspace(0.5, 1.0, C, dtype=jnp.float32)

    out = jax.block_until_ready(sure_gamma_forward(y, weight, bias))
    ref = _reference(y, weight, bias)

    assert out.shape == (N, C, H, W)
    assert bool(jnp.all(jnp.isfinite(out)))
    assert jnp.allclose(out, ref, rtol=1e-4, atol=1e-6), "mismatch vs reference"

    print("KERNEL_OK")
</pallas_src>

<mosaic_0001>
module attributes {stable_mosaic.version = 11 : i64} {
  func.func @_sure_gamma_kernel(%arg0: i32, %arg1: memref<144xf32, #tpu.memory_space<smem>>, %arg2: memref<4xf32, #tpu.memory_space<smem>>, %arg3: memref<1x4x16x16xf32, #tpu.memory_space<vmem>>, %arg4: memref<1x4x256xf32, #tpu.memory_space<vmem>>, %arg5: memref<4x18x18xf32, #tpu.memory_space<vmem>>) attributes {dimension_semantics = [#tpu.dimension_semantics<parallel>], iteration_bounds = array<i64: 2>, scalar_prefetch = 0 : i64, scratch_operands = 1 : i64, tpu.core_type = #tpu.core_type<tc>, window_params = [{transform_indices = @transform_0, window_bounds = array<i64: 144>}, {transform_indices = @transform_1, window_bounds = array<i64: 4>}, {transform_indices = @transform_2, window_bounds = array<i64: 1, 4, 16, 16>}, {transform_indices = @transform_3, window_bounds = array<i64: 1, 4, 256>}]} {
    %cst = arith.constant 0.000000e+00 : f32
    %0 = vector.broadcast %cst : f32 to vector<4x18x18xf32>
    %c0 = arith.constant 0 : index
    %c0_0 = arith.constant 0 : index
    %c0_1 = arith.constant 0 : index
    %1 = vector.load %arg5[%c0, %c0_0, %c0_1] : memref<4x18x18xf32, #tpu.memory_space<vmem>>, vector<4x18x18xf32>
    tpu.vector_store %arg5[%c0, %c0_0, %c0_1], %0 {strides = array<i32>} : memref<4x18x18xf32, #tpu.memory_space<vmem>>, vector<4x18x18xf32>,
    %c0_2 = arith.constant 0 : index
    %c0_3 = arith.constant 0 : index
    %c0_4 = arith.constant 0 : index
    %c0_5 = arith.constant 0 : index
    %2 = vector.load %arg3[%c0_2, %c0_3, %c0_4, %c0_5] : memref<1x4x16x16xf32, #tpu.memory_space<vmem>>, vector<1x4x16x16xf32>
    %3 = vector.shape_cast %2 : vector<1x4x16x16xf32> to vector<4x16x16xf32>
    %c0_6 = arith.constant 0 : index
    %c1 = arith.constant 1 : index
    %c1_7 = arith.constant 1 : index
    %4 = vector.load %arg5[%c0_6, %c1, %c1_7] : memref<4x18x18xf32, #tpu.memory_space<vmem>>, vector<4x16x16xf32>
    tpu.vector_store %arg5[%c0_6, %c1, %c1_7], %3 {strides = array<i32>} : memref<4x18x18xf32, #tpu.memory_space<vmem>>, vector<4x16x16xf32>,
    %c0_8 = arith.constant 0 : index
    %5 = memref.load %arg2[%c0_8] : memref<4xf32, #tpu.memory_space<smem>>
    %6 = vector.broadcast %5 : f32 to vector<16x16xf32>
    %c1_9 = arith.constant 1 : index
    %7 = memref.load %arg2[%c1_9] : memref<4xf32, #tpu.memory_space<smem>>
    %8 = vector.broadcast %7 : f32 to vector<16x16xf32>
    %c2 = arith.constant 2 : index
    %9 = memref.load %arg2[%c2] : memref<4xf32, #tpu.memory_space<smem>>
    %10 = vector.broadcast %9 : f32 to vector<16x16xf32>
    %c3 = arith.constant 3 : index
    %11 = memref.load %arg2[%c3] : memref<4xf32, #tpu.memory_space<smem>>
    %12 = vector.broadcast %11 : f32 to vector<16x16xf32>
    %c0_10 = arith.constant 0 : index
    %c0_11 = arith.constant 0 : index
    %c0_12 = arith.constant 0 : index
    %13 = vector.load %arg5[%c0_10, %c0_11, %c0_12] : memref<4x18x18xf32, #tpu.memory_space<vmem>>, vector<1x18x16xf32>
    %14 = vector.shape_cast %13 : vector<1x18x16xf32> to vector<18x16xf32>
    %15 = vector.extract_strided_slice %14 {offsets = [0, 0], sizes = [16, 16], strides = [1, 1]} : vector<18x16xf32> to vector<16x16xf32>
    %c0_13 = arith.constant 0 : index
    %16 = memref.load %arg1[%c0_13] : memref<144xf32, #tpu.memory_space<smem>>
    %17 = vector.broadcast %16 : f32 to vector<16x16xf32>
    %18 = arith.mulf %17, %15 : vector<16x16xf32>
    %19 = arith.addf %6, %18 : vector<16x16xf32>
    %c36 = arith.constant 36 : index
    %20 = memref.load %arg1[%c36] : memref<144xf32, #tpu.memory_space<smem>>
    %21 = vector.broadcast %20 : f32 to vector<16x16xf32>
    %22 = arith.mulf %21, %15 : vector<16x16xf32>
    %23 = arith.addf %8, %22 : vector<16x16xf32>
    %c72 = arith.constant 72 : index
    %24 = memref.load %arg1[%c72] : memref<144xf32, #tpu.memory_space<smem>>
    %25 = vector.broadcast %24 : f32 to vector<16x16xf32>
    %26 = arith.mulf %25, %15 : vector<16x16xf32>
    %27 = arith.addf %10, %26 : vector<16x16xf32>
    %c108 = arith.constant 108 : index
    %28 = memref.load %arg1[%c108] : memref<144xf32, #tpu.memory_space<smem>>
    %29 = vector.broadcast %28 : f32 to vector<16x16xf32>
    %30 = arith.mulf %29, %15 : vector<16x16xf32>
    %31 = arith.addf %12, %30 : vector<16x16xf32>
    %32 = vector.extract_strided_slice %14 {offsets = [1, 0], sizes = [16, 16], strides = [1, 1]} : vector<18x16xf32> to vector<16x16xf32>
    %c3_14 = arith.constant 3 : index
    %33 = memref.load %arg1[%c3_14] : memref<144xf32, #tpu.memory_space<smem>>
    %34 = vector.broadcast %33 : f32 to vector<16x16xf32>
    %35 = arith.mulf %34, %32 : vector<16x16xf32>
    %36 = arith.addf %19, %35 : vector<16x16xf32>
    %c39 = arith.constant 39 : index
    %37 = memref.load %arg1[%c39] : memref<144xf32, #tpu.memory_space<smem>>
    %38 = vector.broadcast %37 : f32 to vector<16x16xf32>
    %39 = arith.mulf %38, %32 : vector<16x16xf32>
    %40 = arith.addf %23, %39 : vector<16x16xf32>
    %c75 = arith.constant 75 : index
    %41 = memref.load %arg1[%c75] : memref<144xf32, #tpu.memory_space<smem>>
    %42 = vector.broadcast %41 : f32 to vector<16x16xf32>
    %43 = arith.mulf %42, %32 : vector<16x16xf32>
    %44 = arith.addf %27, %43 : vector<16x16xf32>
    %c111 = arith.constant 111 : index
    %45 = memref.load %arg1[%c111] : memref<144xf32, #tpu.memory_space<smem>>
    %46 = vector.broadcast %45 : f32 to vector<16x16xf32>
    %47 = arith.mulf %46, %32 : vector<16x16xf32>
    %48 = arith.addf %31, %47 : vector<16x16xf32>
    %49 = vector.extract_strided_slice %14 {offsets = [2, 0], sizes = [16, 16], strides = [1, 1]} : vector<18x16xf32> to vector<16x16xf32>
    %c6 = arith.constant 6 : index
    %50 = memref.load %arg1[%c6] : memref<144xf32, #tpu.memory_space<smem>>
    %51 = vector.broadcast %50 : f32 to vector<16x16xf32>
    %52 = arith.mulf %51, %49 : vector<16x16xf32>
    %53 = arith.addf %36, %52 : vector<16x16xf32>
    %c42 = arith.constant 42 : index
    %54 = memref.load %arg1[%c42] : memref<144xf32, #tpu.memory_space<smem>>
    %55 = vector.broadcast %54 : f32 to vector<16x16xf32>
    %56 = arith.mulf %55, %49 : vector<16x16xf32>
    %57 = arith.addf %40, %56 : vector<16x16xf32>
    %c78 = arith.constant 78 : index
    %58 = memref.load %arg1[%c78] : memref<144xf32, #tpu.memory_space<smem>>
    %59 = vector.broadcast %58 : f32 to vector<16x16xf32>
    %60 = arith.mulf %59, %49 : vector<16x16xf32>
    %61 = arith.addf %44, %60 : vector<16x16xf32>
    %c114 = arith.constant 114 : index
    %62 = memref.load %arg1[%c114] : memref<144xf32, #tpu.memory_space<smem>>
    %63 = vector.broadcast %62 : f32 to vector<16x16xf32>
    %64 = arith.mulf %63, %49 : vector<16x16xf32>
    %65 = arith.addf %48, %64 : vector<16x16xf32>
    %c0_15 = arith.constant 0 : index
    %c0_16 = arith.constant 0 : index
    %c1_17 = arith.constant 1 : index
    %66 = vector.load %arg5[%c0_15, %c0_16, %c1_17] : memref<4x18x18xf32, #tpu.memory_space<vmem>>, vector<1x18x16xf32>
    %67 = vector.shape_cast %66 : vector<1x18x16xf32> to vector<18x16xf32>
    %68 = vector.extract_strided_slice %67 {offsets = [0, 0], sizes = [16, 16], strides = [1, 1]} : vector<18x16xf32> to vector<16x16xf32>
    %c1_18 = arith.constant 1 : index
    %69 = memref.load %arg1[%c1_18] : memref<144xf32, #tpu.memory_space<smem>>
    %70 = vector.broadcast %69 : f32 to vector<16x16xf32>
    %71 = arith.mulf %70, %68 : vector<16x16xf32>
    %72 = arith.addf %53, %71 : vector<16x16xf32>
    %c37 = arith.constant 37 : index
    %73 = memref.load %arg1[%c37] : memref<144xf32, #tpu.memory_space<smem>>
    %74 = vector.broadcast %73 : f32 to vector<16x16xf32>
    %75 = arith.mulf %74, %68 : vector<16x16xf32>
    %76 = arith.addf %57, %75 : vector<16x16xf32>
    %c73 = arith.constant 73 : index
    %77 = memref.load %arg1[%c73] : memref<144xf32, #tpu.memory_space<smem>>
    %78 = vector.broadcast %77 : f32 to vector<16x16xf32>
    %79 = arith.mulf %78, %68 : vector<16x16xf32>
    %80 = arith.addf %61, %79 : vector<16x16xf32>
    %c109 = arith.constant 109 : index
    %81 = memref.load %arg1[%c109] : memref<144xf32, #tpu.memory_space<smem>>
    %82 = vector.broadcast %81 : f32 to vector<16x16xf32>
    %83 = arith.mulf %82, %68 : vector<16x16xf32>
    %84 = arith.addf %65, %83 : vector<16x16xf32>
    %85 = vector.extract_strided_slice %67 {offsets = [1, 0], sizes = [16, 16], strides = [1, 1]} : vector<18x16xf32> to vector<16x16xf32>
    %c4 = arith.constant 4 : index
    %86 = memref.load %arg1[%c4] : memref<144xf32, #tpu.memory_space<smem>>
    %87 = vector.broadcast %86 : f32 to vector<16x16xf32>
    %88 = arith.mulf %87, %85 : vector<16x16xf32>
    %89 = arith.addf %72, %88 : vector<16x16xf32>
    %c40 = arith.constant 40 : index
    %90 = memref.load %arg1[%c40] : memref<144xf32, #tpu.memory_space<smem>>
    %91 = vector.broadcast %90 : f32 to vector<16x16xf32>
    %92 = arith.mulf %91, %85 : vector<16x16xf32>
    %93 = arith.addf %76, %92 : vector<16x16xf32>
    %c76 = arith.constant 76 : index
    %94 = memref.load %arg1[%c76] : memref<144xf32, #tpu.memory_space<smem>>
    %95 = vector.broadcast %94 : f32 to vector<16x16xf32>
    %96 = arith.mulf %95, %85 : vector<16x16xf32>
    %97 = arith.addf %80, %96 : vector<16x16xf32>
    %c112 = arith.constant 112 : index
    %98 = memref.load %arg1[%c112] : memref<144xf32, #tpu.memory_space<smem>>
    %99 = vector.broadcast %98 : f32 to vector<16x16xf32>
    %100 = arith.mulf %99, %85 : vector<16x16xf32>
    %101 = arith.addf %84, %100 : vector<16x16xf32>
    %102 = vector.extract_strided_slice %67 {offsets = [2, 0], sizes = [16, 16], strides = [1, 1]} : vector<18x16xf32> to vector<16x16xf32>
    %c7 = arith.constant 7 : index
    %103 = memref.load %arg1[%c7] : memref<144xf32, #tpu.memory_space<smem>>
    %104 = vector.broadcast %103 : f32 to vector<16x16xf32>
    %105 = arith.mulf %104, %102 : vector<16x16xf32>
    %106 = arith.addf %89, %105 : vector<16x16xf32>
    %c43 = arith.constant 43 : index
    %107 = memref.load %arg1[%c43] : memref<144xf32, #tpu.memory_space<smem>>
    %108 = vector.broadcast %107 : f32 to vector<16x16xf32>
    %109 = arith.mulf %108, %102 : vector<16x16xf32>
    %110 = arith.addf %93, %109 : vector<16x16xf32>
    %c79 = arith.constant 79 : index
    %111 = memref.load %arg1[%c79] : memref<144xf32, #tpu.memory_space<smem>>
    %112 = vector.broadcast %111 : f32 to vector<16x16xf32>
    %113 = arith.mulf %112, %102 : vector<16x16xf32>
    %114 = arith.addf %97, %113 : vector<16x16xf32>
    %c115 = arith.constant 115 : index
    %115 = memref.load %arg1[%c115] : memref<144xf32, #tpu.memory_space<smem>>
    %116 = vector.broadcast %115 : f32 to vector<16x16xf32>
    %117 = arith.mulf %116, %102 : vector<16x16xf32>
    %118 = arith.addf %101, %117 : vector<16x16xf32>
    %c0_19 = arith.constant 0 : index
    %c0_20 = arith.constant 0 : index
    %c2_21 = arith.constant 2 : index
    %119 = vector.load %arg5[%c0_19, %c0_20, %c2_21] : memref<4x18x18xf32, #tpu.memory_space<vmem>>, vector<1x18x16xf32>
    %120 = vector.shape_cast %119 : vector<1x18x16xf32> to vector<18x16xf32>
    %121 = vector.extract_strided_slice %120 {offsets = [0, 0], sizes = [16, 16], strides = [1, 1]} : vector<18x16xf32> to vector<16x16xf32>
    %c2_22 = arith.constant 2 : index
    %122 = memref.load %arg1[%c2_22] : memref<144xf32, #tpu.memory_space<smem>>
    %123 = vector.broadcast %122 : f32 to vector<16x16xf32>
    %124 = arith.mulf %123, %121 : vector<16x16xf32>
    %125 = arith.addf %106, %124 : vector<16x16xf32>
    %c38 = arith.constant 38 : index
    %126 = memref.load %arg1[%c38] : memref<144xf32, #tpu.memory_space<smem>>
    %127 = vector.broadcast %126 : f32 to vector<16x16xf32>
    %128 = arith.mulf %127, %121 : vector<16x16xf32>
    %129 = arith.addf %110, %128 : vector<16x16xf32>
    %c74 = arith.constant 74 : index
    %130 = memref.load %arg1[%c74] : memref<144xf32, #tpu.memory_space<smem>>
    %131 = vector.broadcast %130 : f32 to vector<16x16xf32>
    %132 = arith.mulf %131, %121 : vector<16x16xf32>
    %133 = arith.addf %114, %132 : vector<16x16xf32>
    %c110 = arith.constant 110 : index
    %134 = memref.load %arg1[%c110] : memref<144xf32, #tpu.memory_space<smem>>
    %135 = vector.broadcast %134 : f32 to vector<16x16xf32>
    %136 = arith.mulf %135, %121 : vector<16x16xf32>
    %137 = arith.addf %118, %136 : vector<16x16xf32>
    %138 = vector.extract_strided_slice %120 {offsets = [1, 0], sizes = [16, 16], strides = [1, 1]} : vector<18x16xf32> to vector<16x16xf32>
    %c5 = arith.constant 5 : index
    %139 = memref.load %arg1[%c5] : memref<144xf32, #tpu.memory_space<smem>>
    %140 = vector.broadcast %139 : f32 to vector<16x16xf32>
    %141 = arith.mulf %140, %138 : vector<16x16xf32>
    %142 = arith.addf %125, %141 : vector<16x16xf32>
    %c41 = arith.constant 41 : index
    %143 = memref.load %arg1[%c41] : memref<144xf32, #tpu.memory_space<smem>>
    %144 = vector.broadcast %143 : f32 to vector<16x16xf32>
    %145 = arith.mulf %144, %138 : vector<16x16xf32>
    %146 = arith.addf %129, %145 : vector<16x16xf32>
    %c77 = arith.constant 77 : index
    %147 = memref.load %arg1[%c77] : memref<144xf32, #tpu.memory_space<smem>>
    %148 = vector.broadcast %147 : f32 to vector<16x16xf32>
    %149 = arith.mulf %148, %138 : vector<16x16xf32>
    %150 = arith.addf %133, %149 : vector<16x16xf32>
    %c113 = arith.constant 113 : index
    %151 = memref.load %arg1[%c113] : memref<144xf32, #tpu.memory_space<smem>>
    %152 = vector.broadcast %151 : f32 to vector<16x16xf32>
    %153 = arith.mulf %152, %138 : vector<16x16xf32>
    %154 = arith.addf %137, %153 : vector<16x16xf32>
    %155 = vector.extract_strided_slice %120 {offsets = [2, 0], sizes = [16, 16], strides = [1, 1]} : vector<18x16xf32> to vector<16x16xf32>
    %c8 = arith.constant 8 : index
    %156 = memref.load %arg1[%c8] : memref<144xf32, #tpu.memory_space<smem>>
    %157 = vector.broadcast %156 : f32 to vector<16x16xf32>
    %158 = arith.mulf %157, %155 : vector<16x16xf32>
    %159 = arith.addf %142, %158 : vector<16x16xf32>
    %c44 = arith.constant 44 : index
    %160 = memref.load %arg1[%c44] : memref<144xf32, #tpu.memory_space<smem>>
    %161 = vector.broadcast %160 : f32 to vector<16x16xf32>
    %162 = arith.mulf %161, %155 : vector<16x16xf32>
    %163 = arith.addf %146, %162 : vector<16x16xf32>
    %c80 = arith.constant 80 : index
    %164 = memref.load %arg1[%c80] : memref<144xf32, #tpu.memory_space<smem>>
    %165 = vector.broadcast %164 : f32 to vector<16x16xf32>
    %166 = arith.mulf %165, %155 : vector<16x16xf32>
    %167 = arith.addf %150, %166 : vector<16x16xf32>
    %c116 = arith.constant 116 : index
    %168 = memref.load %arg1[%c116] : memref<144xf32, #tpu.memory_space<smem>>
    %169 = vector.broadcast %168 : f32 to vector<16x16xf32>
    %170 = arith.mulf %169, %155 : vector<16x16xf32>
    %171 = arith.addf %154, %170 : vector<16x16xf32>
    %c1_23 = arith.constant 1 : index
    %c0_24 = arith.constant 0 : index
    %c0_25 = arith.constant 0 : index
    %172 = vector.load %arg5[%c1_23, %c0_24, %c0_25] : memref<4x18x18xf32, #tpu.memory_space<vmem>>, vector<1x18x16xf32>
    %173 = vector.shape_cast %172 : vector<1x18x16xf32> to vector<18x16xf32>
    %174 = vector.extract_strided_slice %173 {offsets = [0, 0], sizes = [16, 16], strides = [1, 1]} : vector<18x16xf32> to vector<16x16xf32>
    %c9 = arith.constant 9 : index
    %175 = memref.load %arg1[%c9] : memref<144xf32, #tpu.memory_space<smem>>
    %176 = vector.broadcast %175 : f32 to vector<16x16xf32>
    %177 = arith.mulf %176, %174 : vector<16x16xf32>
    %178 = arith.addf %159, %177 : vector<16x16xf32>
    %c45 = arith.constant 45 : index
    %179 = memref.load %arg1[%c45] : memref<144xf32, #tpu.memory_space<smem>>
    %180 = vector.broadcast %179 : f32 to vector<16x16xf32>
    %181 = arith.mulf %180, %174 : vector<16x16xf32>
    %182 = arith.addf %163, %181 : vector<16x16xf32>
    %c81 = arith.constant 81 : index
    %183 = memref.load %arg1[%c81] : memref<144xf32, #tpu.memory_space<smem>>
    %184 = vector.broadcast %183 : f32 to vector<16x16xf32>
    %185 = arith.mulf %184, %174 : vector<16x16xf32>
    %186 = arith.addf %167, %185 : vector<16x16xf32>
    %c117 = arith.constant 117 : index
    %187 = memref.load %arg1[%c117] : memref<144xf32, #tpu.memory_space<smem>>
    %188 = vector.broadcast %187 : f32 to vector<16x16xf32>
    %189 = arith.mulf %188, %174 : vector<16x16xf32>
    %190 = arith.addf %171, %189 : vector<16x16xf32>
    %191 = vector.extract_strided_slice %173 {offsets = [1, 0], sizes = [16, 16], strides = [1, 1]} : vector<18x16xf32> to vector<16x16xf32>
    %c12 = arith.constant 12 : index
    %192 = memref.load %arg1[%c12] : memref<144xf32, #tpu.memory_space<smem>>
    %193 = vector.broadcast %192 : f32 to vector<16x16xf32>
    %194 = arith.mulf %193, %191 : vector<16x16xf32>
    %195 = arith.addf %178, %194 : vector<16x16xf32>
    %c48 = arith.constant 48 : index
    %196 = memref.load %arg1[%c48] : memref<144xf32, #tpu.memory_space<smem>>
    %197 = vector.broadcast %196 : f32 to vector<16x16xf32>
    %198 = arith.mulf %197, %191 : vector<16x16xf32>
    %199 = arith.addf %182, %198 : vector<16x16xf32>
    %c84 = arith.constant 84 : index
    %200 = memref.load %arg1[%c84] : memref<144xf32, #tpu.memory_space<smem>>
    %201 = vector.broadcast %200 : f32 to vector<16x16xf32>
    %202 = arith.mulf %201, %191 : vector<16x16xf32>
    %203 = arith.addf %186, %202 : vector<16x16xf32>
    %c120 = arith.constant 120 : index
    %204 = memref.load %arg1[%c120] : memref<144xf32, #tpu.memory_space<smem>>
    %205 = vector.broadcast %204 : f32 to vector<16x16xf32>
    %206 = arith.mulf %205, %191 : vector<16x16xf32>
    %207 = arith.addf %190, %206 : vector<16x16xf32>
    %208 = vector.extract_strided_slice %173 {offsets = [2, 0], sizes = [16, 16], strides = [1, 1]} : vector<18x16xf32> to vector<16x16xf32>
    %c15 = arith.constant 15 : index
    %209 = memref.load %arg1[%c15] : memref<144xf32, #tpu.memory_space<smem>>
    %210 = vector.broadcast %209 : f32 to vector<16x16xf32>
    %211 = arith.mulf %210, %208 : vector<16x16xf32>
    %212 = arith.addf %195, %211 : vector<16x16xf32>
    %c51 = arith.constant 51 : index
    %213 = memref.load %arg1[%c51] : memref<144xf32, #tpu.memory_space<smem>>
    %214 = vector.broadcast %213 : f32 to vector<16x16xf32>
    %215 = arith.mulf %214, %208 : vector<16x16xf32>
    %216 = arith.addf %199, %215 : vector<16x16xf32>
    %c87 = arith.constant 87 : index
    %217 = memref.load %arg1[%c87] : memref<144xf32, #tpu.memory_space<smem>>
    %218 = vector.broadcast %217 : f32 to vector<16x16xf32>
    %219 = arith.mulf %218, %208 : vector<16x16xf32>
    %220 = arith.addf %203, %219 : vector<16x16xf32>
    %c123 = arith.constant 123 : index
    %221 = memref.load %arg1[%c123] : memref<144xf32, #tpu.memory_space<smem>>
    %222 = vector.broadcast %221 : f32 to vector<16x16xf32>
    %223 = arith.mulf %222, %208 : vector<16x16xf32>
    %224 = arith.addf %207, %223 : vector<16x16xf32>
    %c1_26 = arith.constant 1 : index
    %c0_27 = arith.constant 0 : index
    %c1_28 = arith.constant 1 : index
    %225 = vector.load %arg5[%c1_26, %c0_27, %c1_28] : memref<4x18x18xf32, #tpu.memory_space<vmem>>, vector<1x18x16xf32>
    %226 = vector.shape_cast %225 : vector<1x18x16xf32> to vector<18x16xf32>
    %227 = vector.extract_strided_slice %226 {offsets = [0, 0], sizes = [16, 16], strides = [1, 1]} : vector<18x16xf32> to vector<16x16xf32>
    %c10 = arith.constant 10 : index
    %228 = memref.load %arg1[%c10] : memref<144xf32, #tpu.memory_space<smem>>
    %229 = vector.broadcast %228 : f32 to vector<16x16xf32>
    %230 = arith.mulf %229, %227 : vector<16x16xf32>
    %231 = arith.addf %212, %230 : vector<16x16xf32>
    %c46 = arith.constant 46 : index
    %232 = memref.load %arg1[%c46] : memref<144xf32, #tpu.memory_space<smem>>
    %233 = vector.broadcast %232 : f32 to vector<16x16xf32>
    %234 = arith.mulf %233, %227 : vector<16x16xf32>
    %235 = arith.addf %216, %234 : vector<16x16xf32>
    %c82 = arith.constant 82 : index
    %236 = memref.load %arg1[%c82] : memref<144xf32, #tpu.memory_space<smem>>
    %237 = vector.broadcast %236 : f32 to vector<16x16xf32>
    %238 = arith.mulf %237, %227 : vector<16x16xf32>
    %239 = arith.addf %220, %238 : vector<16x16xf32>
    %c118 = arith.constant 118 : index
    %240 = memref.load %arg1[%c118] : memref<144xf32, #tpu.memory_space<smem>>
    %241 = vector.broadcast %240 : f32 to vector<16x16xf32>
    %242 = arith.mulf %241, %227 : vector<16x16xf32>
    %243 = arith.addf %224, %242 : vector<16x16xf32>
    %244 = vector.extract_strided_slice %226 {offsets = [1, 0], sizes = [16, 16], strides = [1, 1]} : vector<18x16xf32> to vector<16x16xf32>
    %c13 = arith.constant 13 : index
    %245 = memref.load %arg1[%c13] : memref<144xf32, #tpu.memory_space<smem>>
    %246 = vector.broadcast %245 : f32 to vector<16x16xf32>
    %247 = arith.mulf %246, %244 : vector<16x16xf32>
    %248 = arith.addf %231, %247 : vector<16x16xf32>
    %c49 = arith.constant 49 : index
    %249 = memref.load %arg1[%c49] : memref<144xf32, #tpu.memory_space<smem>>
    %250 = vector.broadcast %249 : f32 to vector<16x16xf32>
    %251 = arith.mulf %250, %244 : vector<16x16xf32>
    %252 = arith.addf %235, %251 : vector<16x16xf32>
    %c85 = arith.constant 85 : index
    %253 = memref.load %arg1[%c85] : memref<144xf32, #tpu.memory_space<smem>>
    %254 = vector.broadcast %253 : f32 to vector<16x16xf32>
    %255 = arith.mulf %254, %244 : vector<16x16xf32>
    %256 = arith.addf %239, %255 : vector<16x16xf32>
    %c121 = arith.constant 121 : index
    %257 = memref.load %arg1[%c121] : memref<144xf32, #tpu.memory_space<smem>>
    %258 = vector.broadcast %257 : f32 to vector<16x16xf32>
    %259 = arith.mulf %258, %244 : vector<16x16xf32>
    %260 = arith.addf %243, %259 : vector<16x16xf32>
    %261 = vector.extract_strided_slice %226 {offsets = [2, 0], sizes = [16, 16], strides = [1, 1]} : vector<18x16xf32> to vector<16x16xf32>
    %c16 = arith.constant 16 : index
    %262 = memref.load %arg1[%c16] : memref<144xf32, #tpu.memory_space<smem>>
    %263 = vector.broadcast %262 : f32 to vector<16x16xf32>
    %264 = arith.mulf %263, %261 : vector<16x16xf32>
    %265 = arith.addf %248, %264 : vector<16x16xf32>
    %c52 = arith.constant 52 : index
    %266 = memref.load %arg1[%c52] : memref<144xf32, #tpu.memory_space<smem>>
    %267 = vector.broadcast %266 : f32 to vector<16x16xf32>
    %268 = arith.mulf %267, %261 : vector<16x16xf32>
    %269 = arith.addf %252, %268 : vector<16x16xf32>
    %c88 = arith.constant 88 : index
    %270 = memref.load %arg1[%c88] : memref<144xf32, #tpu.memory_space<smem>>
    %271 = vector.broadcast %270 : f32 to vector<16x16xf32>
    %272 = arith.mulf %271, %261 : vector<16x16xf32>
    %273 = arith.addf %256, %272 : vector<16x16xf32>
    %c124 = arith.constant 124 : index
    %274 = memref.load %arg1[%c124] : memref<144xf32, #tpu.memory_space<smem>>
    %275 = vector.broadcast %274 : f32 to vector<16x16xf32>
    %276 = arith.mulf %275, %261 : vector<16x16xf32>
    %277 = arith.addf %260, %276 : vector<16x16xf32>
    %c1_29 = arith.constant 1 : index
    %c0_30 = arith.constant 0 : index
    %c2_31 = arith.constant 2 : index
    %278 = vector.load %arg5[%c1_29, %c0_30, %c2_31] : memref<4x18x18xf32, #tpu.memory_space<vmem>>, vector<1x18x16xf32>
    %279 = vector.shape_cast %278 : vector<1x18x16xf32> to vector<18x16xf32>
    %280 = vector.extract_strided_slice %279 {offsets = [0, 0], sizes = [16, 16], strides = [1, 1]} : vector<18x16xf32> to vector<16x16xf32>
    %c11 = arith.constant 11 : index
    %281 = memref.load %arg1[%c11] : memref<144xf32, #tpu.memory_space<smem>>
    %282 = vector.broadcast %281 : f32 to vector<16x16xf32>
    %283 = arith.mulf %282, %280 : vector<16x16xf32>
    %284 = arith.addf %265, %283 : vector<16x16xf32>
    %c47 = arith.constant 47 : index
    %285 = memref.load %arg1[%c47] : memref<144xf32, #tpu.memory_space<smem>>
    %286 = vector.broadcast %285 : f32 to vector<16x16xf32>
    %287 = arith.mulf %286, %280 : vector<16x16xf32>
    %288 = arith.addf %269, %287 : vector<16x16xf32>
    %c83 = arith.constant 83 : index
    %289 = memref.load %arg1[%c83] : memref<144xf32, #tpu.memory_space<smem>>
    %290 = vector.broadcast %289 : f32 to vector<16x16xf32>
    %291 = arith.mulf %290, %280 : vector<16x16xf32>
    %292 = arith.addf %273, %291 : vector<16x16xf32>
    %c119 = arith.constant 119 : index
    %293 = memref.load %arg1[%c119] : memref<144xf32, #tpu.memory_space<smem>>
    %294 = vector.broadcast %293 : f32 to vector<16x16xf32>
    %295 = arith.mulf %294, %280 : vector<16x16xf32>
    %296 = arith.addf %277, %295 : vector<16x16xf32>
    %297 = vector.extract_strided_slice %279 {offsets = [1, 0], sizes = [16, 16], strides = [1, 1]} : vector<18x16xf32> to vector<16x16xf32>
    %c14 = arith.constant 14 : index
    %298 = memref.load %arg1[%c14] : memref<144xf32, #tpu.memory_space<smem>>
    %299 = vector.broadcast %298 : f32 to vector<16x16xf32>
    %300 = arith.mulf %299, %297 : vector<16x16xf32>
    %301 = arith.addf %284, %300 : vector<16x16xf32>
    %c50 = arith.constant 50 : index
    %302 = memref.load %arg1[%c50] : memref<144xf32, #tpu.memory_space<smem>>
    %303 = vector.broadcast %302 : f32 to vector<16x16xf32>
    %304 = arith.mulf %303, %297 : vector<16x16xf32>
    %305 = arith.addf %288, %304 : vector<16x16xf32>
    %c86 = arith.constant 86 : index
    %306 = memref.load %arg1[%c86] : memref<144xf32, #tpu.memory_space<smem>>
    %307 = vector.broadcast %306 : f32 to vector<16x16xf32>
    %308 = arith.mulf %307, %297 : vector<16x16xf32>
    %309 = arith.addf %292, %308 : vector<16x16xf32>
    %c122 = arith.constant 122 : index
    %310 = memref.load %arg1[%c122] : memref<144xf32, #tpu.memory_space<smem>>
    %311 = vector.broadcast %310 : f32 to vector<16x16xf32>
    %312 = arith.mulf %311, %297 : vector<16x16xf32>
    %313 = arith.addf %296, %312 : vector<16x16xf32>
    %314 = vector.extract_strided_slice %279 {offsets = [2, 0], sizes = [16, 16], strides = [1, 1]} : vector<18x16xf32> to vector<16x16xf32>
    %c17 = arith.constant 17 : index
    %315 = memref.load %arg1[%c17] : memref<144xf32, #tpu.memory_space<smem>>
    %316 = vector.broadcast %315 : f32 to vector<16x16xf32>
    %317 = arith.mulf %316, %314 : vector<16x16xf32>
    %318 = arith.addf %301, %317 : vector<16x16xf32>
    %c53 = arith.constant 53 : index
    %319 = memref.load %arg1[%c53] : memref<144xf32, #tpu.memory_space<smem>>
    %320 = vector.broadcast %319 : f32 to vector<16x16xf32>
    %321 = arith.mulf %320, %314 : vector<16x16xf32>
    %322 = arith.addf %305, %321 : vector<16x16xf32>
    %c89 = arith.constant 89 : index
    %323 = memref.load %arg1[%c89] : memref<144xf32, #tpu.memory_space<smem>>
    %324 = vector.broadcast %323 : f32 to vector<16x16xf32>
    %325 = arith.mulf %324, %314 : vector<16x16xf32>
    %326 = arith.addf %309, %325 : vector<16x16xf32>
    %c125 = arith.constant 125 : index
    %327 = memref.load %arg1[%c125] : memref<144xf32, #tpu.memory_space<smem>>
    %328 = vector.broadcast %327 : f32 to vector<16x16xf32>
    %329 = arith.mulf %328, %314 : vector<16x16xf32>
    %330 = arith.addf %313, %329 : vector<16x16xf32>
    %c2_32 = arith.constant 2 : index
    %c0_33 = arith.constant 0 : index
    %c0_34 = arith.constant 0 : index
    %331 = vector.load %arg5[%c2_32, %c0_33, %c0_34] : memref<4x18x18xf32, #tpu.memory_space<vmem>>, vector<1x18x16xf32>
    %332 = vector.shape_cast %331 : vector<1x18x16xf32> to vector<18x16xf32>
    %333 = vector.extract_strided_slice %332 {offsets = [0, 0], sizes = [16, 16], strides = [1, 1]} : vector<18x16xf32> to vector<16x16xf32>
    %c18 = arith.constant 18 : index
    %334 = memref.load %arg1[%c18] : memref<144xf32, #tpu.memory_space<smem>>
    %335 = vector.broadcast %334 : f32 to vector<16x16xf32>
    %336 = arith.mulf %335, %333 : vector<16x16xf32>
    %337 = arith.addf %318, %336 : vector<16x16xf32>
    %c54 = arith.constant 54 : index
    %338 = memref.load %arg1[%c54] : memref<144xf32, #tpu.memory_space<smem>>
    %339 = vector.broadcast %338 : f32 to vector<16x16xf32>
    %340 = arith.mulf %339, %333 : vector<16x16xf32>
    %341 = arith.addf %322, %340 : vector<16x16xf32>
    %c90 = arith.constant 90 : index
    %342 = memref.load %arg1[%c90] : memref<144xf32, #tpu.memory_space<smem>>
    %343 = vector.broadcast %342 : f32 to vector<16x16xf32>
    %344 = arith.mulf %343, %333 : vector<16x16xf32>
    %345 = arith.addf %326, %344 : vector<16x16xf32>
    %c126 = arith.constant 126 : index
    %346 = memref.load %arg1[%c126] : memref<144xf32, #tpu.memory_space<smem>>
    %347 = vector.broadcast %346 : f32 to vector<16x16xf32>
    %348 = arith.mulf %347, %333 : vector<16x16xf32>
    %349 = arith.addf %330, %348 : vector<16x16xf32>
    %350 = vector.extract_strided_slice %332 {offsets = [1, 0], sizes = [16, 16], strides = [1, 1]} : vector<18x16xf32> to vector<16x16xf32>
    %c21 = arith.constant 21 : index
    %351 = memref.load %arg1[%c21] : memref<144xf32, #tpu.memory_space<smem>>
    %352 = vector.broadcast %351 : f32 to vector<16x16xf32>
    %353 = arith.mulf %352, %350 : vector<16x16xf32>
    %354 = arith.addf %337, %353 : vector<16x16xf32>
    %c57 = arith.constant 57 : index
    %355 = memref.load %arg1[%c57] : memref<144xf32, #tpu.memory_space<smem>>
    %356 = vector.broadcast %355 : f32 to vector<16x16xf32>
    %357 = arith.mulf %356, %350 : vector<16x16xf32>
    %358 = arith.addf %341, %357 : vector<16x16xf32>
    %c93 = arith.constant 93 : index
    %359 = memref.load %arg1[%c93] : memref<144xf32, #tpu.memory_space<smem>>
    %360 = vector.broadcast %359 : f32 to vector<16x16xf32>
    %361 = arith.mulf %360, %350 : vector<16x16xf32>
    %362 = arith.addf %345, %361 : vector<16x16xf32>
    %c129 = arith.constant 129 : index
    %363 = memref.load %arg1[%c129] : memref<144xf32, #tpu.memory_space<smem>>
    %364 = vector.broadcast %363 : f32 to vector<16x16xf32>
    %365 = arith.mulf %364, %350 : vector<16x16xf32>
    %366 = arith.addf %349, %365 : vector<16x16xf32>
    %367 = vector.extract_strided_slice %332 {offsets = [2, 0], sizes = [16, 16], strides = [1, 1]} : vector<18x16xf32> to vector<16x16xf32>
    %c24 = arith.constant 24 : index
    %368 = memref.load %arg1[%c24] : memref<144xf32, #tpu.memory_space<smem>>
    %369 = vector.broadcast %368 : f32 to vector<16x16xf32>
    %370 = arith.mulf %369, %367 : vector<16x16xf32>
    %371 = arith.addf %354, %370 : vector<16x16xf32>
    %c60 = arith.constant 60 : index
    %372 = memref.load %arg1[%c60] : memref<144xf32, #tpu.memory_space<smem>>
    %373 = vector.broadcast %372 : f32 to vector<16x16xf32>
    %374 = arith.mulf %373, %367 : vector<16x16xf32>
    %375 = arith.addf %358, %374 : vector<16x16xf32>
    %c96 = arith.constant 96 : index
    %376 = memref.load %arg1[%c96] : memref<144xf32, #tpu.memory_space<smem>>
    %377 = vector.broadcast %376 : f32 to vector<16x16xf32>
    %378 = arith.mulf %377, %367 : vector<16x16xf32>
    %379 = arith.addf %362, %378 : vector<16x16xf32>
    %c132 = arith.constant 132 : index
    %380 = memref.load %arg1[%c132] : memref<144xf32, #tpu.memory_space<smem>>
    %381 = vector.broadcast %380 : f32 to vector<16x16xf32>
    %382 = arith.mulf %381, %367 : vector<16x16xf32>
    %383 = arith.addf %366, %382 : vector<16x16xf32>
    %c2_35 = arith.constant 2 : index
    %c0_36 = arith.constant 0 : index
    %c1_37 = arith.constant 1 : index
    %384 = vector.load %arg5[%c2_35, %c0_36, %c1_37] : memref<4x18x18xf32, #tpu.memory_space<vmem>>, vector<1x18x16xf32>
    %385 = vector.shape_cast %384 : vector<1x18x16xf32> to vector<18x16xf32>
    %386 = vector.extract_strided_slice %385 {offsets = [0, 0], sizes = [16, 16], strides = [1, 1]} : vector<18x16xf32> to vector<16x16xf32>
    %c19 = arith.constant 19 : index
    %387 = memref.load %arg1[%c19] : memref<144xf32, #tpu.memory_space<smem>>
    %388 = vector.broadcast %387 : f32 to vector<16x16xf32>
    %389 = arith.mulf %388, %386 : vector<16x16xf32>
    %390 = arith.addf %371, %389 : vector<16x16xf32>
    %c55 = arith.constant 55 : index
    %391 = memref.load %arg1[%c55] : memref<144xf32, #tpu.memory_space<smem>>
    %392 = vector.broadcast %391 : f32 to vector<16x16xf32>
    %393 = arith.mulf %392, %386 : vector<16x16xf32>
    %394 = arith.addf %375, %393 : vector<16x16xf32>
    %c91 = arith.constant 91 : index
    %395 = memref.load %arg1[%c91] : memref<144xf32, #tpu.memory_space<smem>>
    %396 = vector.broadcast %395 : f32 to vector<16x16xf32>
    %397 = arith.mulf %396, %386 : vector<16x16xf32>
    %398 = arith.addf %379, %397 : vector<16x16xf32>
    %c127 = arith.constant 127 : index
    %399 = memref.load %arg1[%c127] : memref<144xf32, #tpu.memory_space<smem>>
    %400 = vector.broadcast %399 : f32 to vector<16x16xf32>
    %401 = arith.mulf %400, %386 : vector<16x16xf32>
    %402 = arith.addf %383, %401 : vector<16x16xf32>
    %403 = vector.extract_strided_slice %385 {offsets = [1, 0], sizes = [16, 16], strides = [1, 1]} : vector<18x16xf32> to vector<16x16xf32>
    %c22 = arith.constant 22 : index
    %404 = memref.load %arg1[%c22] : memref<144xf32, #tpu.memory_space<smem>>
    %405 = vector.broadcast %404 : f32 to vector<16x16xf32>
    %406 = arith.mulf %405, %403 : vector<16x16xf32>
    %407 = arith.addf %390, %406 : vector<16x16xf32>
    %c58 = arith.constant 58 : index
    %408 = memref.load %arg1[%c58] : memref<144xf32, #tpu.memory_space<smem>>
    %409 = vector.broadcast %408 : f32 to vector<16x16xf32>
    %410 = arith.mulf %409, %403 : vector<16x16xf32>
    %411 = arith.addf %394, %410 : vector<16x16xf32>
    %c94 = arith.constant 94 : index
    %412 = memref.load %arg1[%c94] : memref<144xf32, #tpu.memory_space<smem>>
    %413 = vector.broadcast %412 : f32 to vector<16x16xf32>
    %414 = arith.mulf %413, %403 : vector<16x16xf32>
    %415 = arith.addf %398, %414 : vector<16x16xf32>
    %c130 = arith.constant 130 : index
    %416 = memref.load %arg1[%c130] : memref<144xf32, #tpu.memory_space<smem>>
    %417 = vector.broadcast %416 : f32 to vector<16x16xf32>
    %418 = arith.mulf %417, %403 : vector<16x16xf32>
    %419 = arith.addf %402, %418 : vector<16x16xf32>
    %420 = vector.extract_strided_slice %385 {offsets = [2, 0], sizes = [16, 16], strides = [1, 1]} : vector<18x16xf32> to vector<16x16xf32>
    %c25 = arith.constant 25 : index
    %421 = memref.load %arg1[%c25] : memref<144xf32, #tpu.memory_space<smem>>
    %422 = vector.broadcast %421 : f32 to vector<16x16xf32>
    %423 = arith.mulf %422, %420 : vector<16x16xf32>
    %424 = arith.addf %407, %423 : vector<16x16xf32>
    %c61 = arith.constant 61 : index
    %425 = memref.load %arg1[%c61] : memref<144xf32, #tpu.memory_space<smem>>
    %426 = vector.broadcast %425 : f32 to vector<16x16xf32>
    %427 = arith.mulf %426, %420 : vector<16x16xf32>
    %428 = arith.addf %411, %427 : vector<16x16xf32>
    %c97 = arith.constant 97 : index
    %429 = memref.load %arg1[%c97] : memref<144xf32, #tpu.memory_space<smem>>
    %430 = vector.broadcast %429 : f32 to vector<16x16xf32>
    %431 = arith.mulf %430, %420 : vector<16x16xf32>
    %432 = arith.addf %415, %431 : vector<16x16xf32>
    %c133 = arith.constant 133 : index
    %433 = memref.load %arg1[%c133] : memref<144xf32, #tpu.memory_space<smem>>
    %434 = vector.broadcast %433 : f32 to vector<16x16xf32>
    %435 = arith.mulf %434, %420 : vector<16x16xf32>
    %436 = arith.addf %419, %435 : vector<16x16xf32>
    %c2_38 = arith.constant 2 : index
    %c0_39 = arith.constant 0 : index
    %c2_40 = arith.constant 2 : index
    %437 = vector.load %arg5[%c2_38, %c0_39, %c2_40] : memref<4x18x18xf32, #tpu.memory_space<vmem>>, vector<1x18x16xf32>
    %438 = vector.shape_cast %437 : vector<1x18x16xf32> to vector<18x16xf32>
    %439 = vector.extract_strided_slice %438 {offsets = [0, 0], sizes = [16, 16], strides = [1, 1]} : vector<18x16xf32> to vector<16x16xf32>
    %c20 = arith.constant 20 : index
    %440 = memref.load %arg1[%c20] : memref<144xf32, #tpu.memory_space<smem>>
    %441 = vector.broadcast %440 : f32 to vector<16x16xf32>
    %442 = arith.mulf %441, %439 : vector<16x16xf32>
    %443 = arith.addf %424, %442 : vector<16x16xf32>
    %c56 = arith.constant 56 : index
    %444 = memref.load %arg1[%c56] : memref<144xf32, #tpu.memory_space<smem>>
    %445 = vector.broadcast %444 : f32 to vector<16x16xf32>
    %446 = arith.mulf %445, %439 : vector<16x16xf32>
    %447 = arith.addf %428, %446 : vector<16x16xf32>
    %c92 = arith.constant 92 : index
    %448 = memref.load %arg1[%c92] : memref<144xf32, #tpu.memory_space<smem>>
    %449 = vector.broadcast %448 : f32 to vector<16x16xf32>
    %450 = arith.mulf %449, %439 : vector<16x16xf32>
    %451 = arith.addf %432, %450 : vector<16x16xf32>
    %c128 = arith.constant 128 : index
    %452 = memref.load %arg1[%c128] : memref<144xf32, #tpu.memory_space<smem>>
    %453 = vector.broadcast %452 : f32 to vector<16x16xf32>
    %454 = arith.mulf %453, %439 : vector<16x16xf32>
    %455 = arith.addf %436, %454 : vector<16x16xf32>
    %456 = vector.extract_strided_slice %438 {offsets = [1, 0], sizes = [16, 16], strides = [1, 1]} : vector<18x16xf32> to vector<16x16xf32>
    %c23 = arith.constant 23 : index
    %457 = memref.load %arg1[%c23] : memref<144xf32, #tpu.memory_space<smem>>
    %458 = vector.broadcast %457 : f32 to vector<16x16xf32>
    %459 = arith.mulf %458, %456 : vector<16x16xf32>
    %460 = arith.addf %443, %459 : vector<16x16xf32>
    %c59 = arith.constant 59 : index
    %461 = memref.load %arg1[%c59] : memref<144xf32, #tpu.memory_space<smem>>
    %462 = vector.broadcast %461 : f32 to vector<16x16xf32>
    %463 = arith.mulf %462, %456 : vector<16x16xf32>
    %464 = arith.addf %447, %463 : vector<16x16xf32>
    %c95 = arith.constant 95 : index
    %465 = memref.load %arg1[%c95] : memref<144xf32, #tpu.memory_space<smem>>
    %466 = vector.broadcast %465 : f32 to vector<16x16xf32>
    %467 = arith.mulf %466, %456 : vector<16x16xf32>
    %468 = arith.addf %451, %467 : vector<16x16xf32>
    %c131 = arith.constant 131 : index
    %469 = memref.load %arg1[%c131] : memref<144xf32, #tpu.memory_space<smem>>
    %470 = vector.broadcast %469 : f32 to vector<16x16xf32>
    %471 = arith.mulf %470, %456 : vector<16x16xf32>
    %472 = arith.addf %455, %471 : vector<16x16xf32>
    %473 = vector.extract_strided_slice %438 {offsets = [2, 0], sizes = [16, 16], strides = [1, 1]} : vector<18x16xf32> to vector<16x16xf32>
    %c26 = arith.constant 26 : index
    %474 = memref.load %arg1[%c26] : memref<144xf32, #tpu.memory_space<smem>>
    %475 = vector.broadcast %474 : f32 to vector<16x16xf32>
    %476 = arith.mulf %475, %473 : vector<16x16xf32>
    %477 = arith.addf %460, %476 : vector<16x16xf32>
    %c62 = arith.constant 62 : index
    %478 = memref.load %arg1[%c62] : memref<144xf32, #tpu.memory_space<smem>>
    %479 = vector.broadcast %478 : f32 to vector<16x16xf32>
    %480 = arith.mulf %479, %473 : vector<16x16xf32>
    %481 = arith.addf %464, %480 : vector<16x16xf32>
    %c98 = arith.constant 98 : index
    %482 = memref.load %arg1[%c98] : memref<144xf32, #tpu.memory_space<smem>>
    %483 = vector.broadcast %482 : f32 to vector<16x16xf32>
    %484 = arith.mulf %483, %473 : vector<16x16xf32>
    %485 = arith.addf %468, %484 : vector<16x16xf32>
    %c134 = arith.constant 134 : index
    %486 = memref.load %arg1[%c134] : memref<144xf32, #tpu.memory_space<smem>>
    %487 = vector.broadcast %486 : f32 to vector<16x16xf32>
    %488 = arith.mulf %487, %473 : vector<16x16xf32>
    %489 = arith.addf %472, %488 : vector<16x16xf32>
    %c3_41 = arith.constant 3 : index
    %c0_42 = arith.constant 0 : index
    %c0_43 = arith.constant 0 : index
    %490 = vector.load %arg5[%c3_41, %c0_42, %c0_43] : memref<4x18x18xf32, #tpu.memory_space<vmem>>, vector<1x18x16xf32>
    %491 = vector.shape_cast %490 : vector<1x18x16xf32> to vector<18x16xf32>
    %492 = vector.extract_strided_slice %491 {offsets = [0, 0], sizes = [16, 16], strides = [1, 1]} : vector<18x16xf32> to vector<16x16xf32>
    %c27 = arith.constant 27 : index
    %493 = memref.load %arg1[%c27] : memref<144xf32, #tpu.memory_space<smem>>
    %494 = vector.broadcast %493 : f32 to vector<16x16xf32>
    %495 = arith.mulf %494, %492 : vector<16x16xf32>
    %496 = arith.addf %477, %495 : vector<16x16xf32>
    %c63 = arith.constant 63 : index
    %497 = memref.load %arg1[%c63] : memref<144xf32, #tpu.memory_space<smem>>
    %498 = vector.broadcast %497 : f32 to vector<16x16xf32>
    %499 = arith.mulf %498, %492 : vector<16x16xf32>
    %500 = arith.addf %481, %499 : vector<16x16xf32>
    %c99 = arith.constant 99 : index
    %501 = memref.load %arg1[%c99] : memref<144xf32, #tpu.memory_space<smem>>
    %502 = vector.broadcast %501 : f32 to vector<16x16xf32>
    %503 = arith.mulf %502, %492 : vector<16x16xf32>
    %504 = arith.addf %485, %503 : vector<16x16xf32>
    %c135 = arith.constant 135 : index
    %505 = memref.load %arg1[%c135] : memref<144xf32, #tpu.memory_space<smem>>
    %506 = vector.broadcast %505 : f32 to vector<16x16xf32>
    %507 = arith.mulf %506, %492 : vector<16x16xf32>
    %508 = arith.addf %489, %507 : vector<16x16xf32>
    %509 = vector.extract_strided_slice %491 {offsets = [1, 0], sizes = [16, 16], strides = [1, 1]} : vector<18x16xf32> to vector<16x16xf32>
    %c30 = arith.constant 30 : index
    %510 = memref.load %arg1[%c30] : memref<144xf32, #tpu.memory_space<smem>>
    %511 = vector.broadcast %510 : f32 to vector<16x16xf32>
    %512 = arith.mulf %511, %509 : vector<16x16xf32>
    %513 = arith.addf %496, %512 : vector<16x16xf32>
    %c66 = arith.constant 66 : index
    %514 = memref.load %arg1[%c66] : memref<144xf32, #tpu.memory_space<smem>>
    %515 = vector.broadcast %514 : f32 to vector<16x16xf32>
    %516 = arith.mulf %515, %509 : vector<16x16xf32>
    %517 = arith.addf %500, %516 : vector<16x16xf32>
    %c102 = arith.constant 102 : index
    %518 = memref.load %arg1[%c102] : memref<144xf32, #tpu.memory_space<smem>>
    %519 = vector.broadcast %518 : f32 to vector<16x16xf32>
    %520 = arith.mulf %519, %509 : vector<16x16xf32>
    %521 = arith.addf %504, %520 : vector<16x16xf32>
    %c138 = arith.constant 138 : index
    %522 = memref.load %arg1[%c138] : memref<144xf32, #tpu.memory_space<smem>>
    %523 = vector.broadcast %522 : f32 to vector<16x16xf32>
    %524 = arith.mulf %523, %509 : vector<16x16xf32>
    %525 = arith.addf %508, %524 : vector<16x16xf32>
    %526 = vector.extract_strided_slice %491 {offsets = [2, 0], sizes = [16, 16], strides = [1, 1]} : vector<18x16xf32> to vector<16x16xf32>
    %c33 = arith.constant 33 : index
    %527 = memref.load %arg1[%c33] : memref<144xf32, #tpu.memory_space<smem>>
    %528 = vector.broadcast %527 : f32 to vector<16x16xf32>
    %529 = arith.mulf %528, %526 : vector<16x16xf32>
    %530 = arith.addf %513, %529 : vector<16x16xf32>
    %c69 = arith.constant 69 : index
    %531 = memref.load %arg1[%c69] : memref<144xf32, #tpu.memory_space<smem>>
    %532 = vector.broadcast %531 : f32 to vector<16x16xf32>
    %533 = arith.mulf %532, %526 : vector<16x16xf32>
    %534 = arith.addf %517, %533 : vector<16x16xf32>
    %c105 = arith.constant 105 : index
    %535 = memref.load %arg1[%c105] : memref<144xf32, #tpu.memory_space<smem>>
    %536 = vector.broadcast %535 : f32 to vector<16x16xf32>
    %537 = arith.mulf %536, %526 : vector<16x16xf32>
    %538 = arith.addf %521, %537 : vector<16x16xf32>
    %c141 = arith.constant 141 : index
    %539 = memref.load %arg1[%c141] : memref<144xf32, #tpu.memory_space<smem>>
    %540 = vector.broadcast %539 : f32 to vector<16x16xf32>
    %541 = arith.mulf %540, %526 : vector<16x16xf32>
    %542 = arith.addf %525, %541 : vector<16x16xf32>
    %c3_44 = arith.constant 3 : index
    %c0_45 = arith.constant 0 : index
    %c1_46 = arith.constant 1 : index
    %543 = vector.load %arg5[%c3_44, %c0_45, %c1_46] : memref<4x18x18xf32, #tpu.memory_space<vmem>>, vector<1x18x16xf32>
    %544 = vector.shape_cast %543 : vector<1x18x16xf32> to vector<18x16xf32>
    %545 = vector.extract_strided_slice %544 {offsets = [0, 0], sizes = [16, 16], strides = [1, 1]} : vector<18x16xf32> to vector<16x16xf32>
    %c28 = arith.constant 28 : index
    %546 = memref.load %arg1[%c28] : memref<144xf32, #tpu.memory_space<smem>>
    %547 = vector.broadcast %546 : f32 to vector<16x16xf32>
    %548 = arith.mulf %547, %545 : vector<16x16xf32>
    %549 = arith.addf %530, %548 : vector<16x16xf32>
    %c64 = arith.constant 64 : index
    %550 = memref.load %arg1[%c64] : memref<144xf32, #tpu.memory_space<smem>>
    %551 = vector.broadcast %550 : f32 to vector<16x16xf32>
    %552 = arith.mulf %551, %545 : vector<16x16xf32>
    %553 = arith.addf %534, %552 : vector<16x16xf32>
    %c100 = arith.constant 100 : index
    %554 = memref.load %arg1[%c100] : memref<144xf32, #tpu.memory_space<smem>>
    %555 = vector.broadcast %554 : f32 to vector<16x16xf32>
    %556 = arith.mulf %555, %545 : vector<16x16xf32>
    %557 = arith.addf %538, %556 : vector<16x16xf32>
    %c136 = arith.constant 136 : index
    %558 = memref.load %arg1[%c136] : memref<144xf32, #tpu.memory_space<smem>>
    %559 = vector.broadcast %558 : f32 to vector<16x16xf32>
    %560 = arith.mulf %559, %545 : vector<16x16xf32>
    %561 = arith.addf %542, %560 : vector<16x16xf32>
    %562 = vector.extract_strided_slice %544 {offsets = [1, 0], sizes = [16, 16], strides = [1, 1]} : vector<18x16xf32> to vector<16x16xf32>
    %c31 = arith.constant 31 : index
    %563 = memref.load %arg1[%c31] : memref<144xf32, #tpu.memory_space<smem>>
    %564 = vector.broadcast %563 : f32 to vector<16x16xf32>
    %565 = arith.mulf %564, %562 : vector<16x16xf32>
    %566 = arith.addf %549, %565 : vector<16x16xf32>
    %c67 = arith.constant 67 : index
    %567 = memref.load %arg1[%c67] : memref<144xf32, #tpu.memory_space<smem>>
    %568 = vector.broadcast %567 : f32 to vector<16x16xf32>
    %569 = arith.mulf %568, %562 : vector<16x16xf32>
    %570 = arith.addf %553, %569 : vector<16x16xf32>
    %c103 = arith.constant 103 : index
    %571 = memref.load %arg1[%c103] : memref<144xf32, #tpu.memory_space<smem>>
    %572 = vector.broadcast %571 : f32 to vector<16x16xf32>
    %573 = arith.mulf %572, %562 : vector<16x16xf32>
    %574 = arith.addf %557, %573 : vector<16x16xf32>
    %c139 = arith.constant 139 : index
    %575 = memref.load %arg1[%c139] : memref<144xf32, #tpu.memory_space<smem>>
    %576 = vector.broadcast %575 : f32 to vector<16x16xf32>
    %577 = arith.mulf %576, %562 : vector<16x16xf32>
    %578 = arith.addf %561, %577 : vector<16x16xf32>
    %579 = vector.extract_strided_slice %544 {offsets = [2, 0], sizes = [16, 16], strides = [1, 1]} : vector<18x16xf32> to vector<16x16xf32>
    %c34 = arith.constant 34 : index
    %580 = memref.load %arg1[%c34] : memref<144xf32, #tpu.memory_space<smem>>
    %581 = vector.broadcast %580 : f32 to vector<16x16xf32>
    %582 = arith.mulf %581, %579 : vector<16x16xf32>
    %583 = arith.addf %566, %582 : vector<16x16xf32>
    %c70 = arith.constant 70 : index
    %584 = memref.load %arg1[%c70] : memref<144xf32, #tpu.memory_space<smem>>
    %585 = vector.broadcast %584 : f32 to vector<16x16xf32>
    %586 = arith.mulf %585, %579 : vector<16x16xf32>
    %587 = arith.addf %570, %586 : vector<16x16xf32>
    %c106 = arith.constant 106 : index
    %588 = memref.load %arg1[%c106] : memref<144xf32, #tpu.memory_space<smem>>
    %589 = vector.broadcast %588 : f32 to vector<16x16xf32>
    %590 = arith.mulf %589, %579 : vector<16x16xf32>
    %591 = arith.addf %574, %590 : vector<16x16xf32>
    %c142 = arith.constant 142 : index
    %592 = memref.load %arg1[%c142] : memref<144xf32, #tpu.memory_space<smem>>
    %593 = vector.broadcast %592 : f32 to vector<16x16xf32>
    %594 = arith.mulf %593, %579 : vector<16x16xf32>
    %595 = arith.addf %578, %594 : vector<16x16xf32>
    %c3_47 = arith.constant 3 : index
    %c0_48 = arith.constant 0 : index
    %c2_49 = arith.constant 2 : index
    %596 = vector.load %arg5[%c3_47, %c0_48, %c2_49] : memref<4x18x18xf32, #tpu.memory_space<vmem>>, vector<1x18x16xf32>
    %597 = vector.shape_cast %596 : vector<1x18x16xf32> to vector<18x16xf32>
    %598 = vector.extract_strided_slice %597 {offsets = [0, 0], sizes = [16, 16], strides = [1, 1]} : vector<18x16xf32> to vector<16x16xf32>
    %c29 = arith.constant 29 : index
    %599 = memref.load %arg1[%c29] : memref<144xf32, #tpu.memory_space<smem>>
    %600 = vector.broadcast %599 : f32 to vector<16x16xf32>
    %601 = arith.mulf %600, %598 : vector<16x16xf32>
    %602 = arith.addf %583, %601 : vector<16x16xf32>
    %c65 = arith.constant 65 : index
    %603 = memref.load %arg1[%c65] : memref<144xf32, #tpu.memory_space<smem>>
    %604 = vector.broadcast %603 : f32 to vector<16x16xf32>
    %605 = arith.mulf %604, %598 : vector<16x16xf32>
    %606 = arith.addf %587, %605 : vector<16x16xf32>
    %c101 = arith.constant 101 : index
    %607 = memref.load %arg1[%c101] : memref<144xf32, #tpu.memory_space<smem>>
    %608 = vector.broadcast %607 : f32 to vector<16x16xf32>
    %609 = arith.mulf %608, %598 : vector<16x16xf32>
    %610 = arith.addf %591, %609 : vector<16x16xf32>
    %c137 = arith.constant 137 : index
    %611 = memref.load %arg1[%c137] : memref<144xf32, #tpu.memory_space<smem>>
    %612 = vector.broadcast %611 : f32 to vector<16x16xf32>
    %613 = arith.mulf %612, %598 : vector<16x16xf32>
    %614 = arith.addf %595, %613 : vector<16x16xf32>
    %615 = vector.extract_strided_slice %597 {offsets = [1, 0], sizes = [16, 16], strides = [1, 1]} : vector<18x16xf32> to vector<16x16xf32>
    %c32 = arith.constant 32 : index
    %616 = memref.load %arg1[%c32] : memref<144xf32, #tpu.memory_space<smem>>
    %617 = vector.broadcast %616 : f32 to vector<16x16xf32>
    %618 = arith.mulf %617, %615 : vector<16x16xf32>
    %619 = arith.addf %602, %618 : vector<16x16xf32>
    %c68 = arith.constant 68 : index
    %620 = memref.load %arg1[%c68] : memref<144xf32, #tpu.memory_space<smem>>
    %621 = vector.broadcast %620 : f32 to vector<16x16xf32>
    %622 = arith.mulf %621, %615 : vector<16x16xf32>
    %623 = arith.addf %606, %622 : vector<16x16xf32>
    %c104 = arith.constant 104 : index
    %624 = memref.load %arg1[%c104] : memref<144xf32, #tpu.memory_space<smem>>
    %625 = vector.broadcast %624 : f32 to vector<16x16xf32>
    %626 = arith.mulf %625, %615 : vector<16x16xf32>
    %627 = arith.addf %610, %626 : vector<16x16xf32>
    %c140 = arith.constant 140 : index
    %628 = memref.load %arg1[%c140] : memref<144xf32, #tpu.memory_space<smem>>
    %629 = vector.broadcast %628 : f32 to vector<16x16xf32>
    %630 = arith.mulf %629, %615 : vector<16x16xf32>
    %631 = arith.addf %614, %630 : vector<16x16xf32>
    %632 = vector.extract_strided_slice %597 {offsets = [2, 0], sizes = [16, 16], strides = [1, 1]} : vector<18x16xf32> to vector<16x16xf32>
    %c35 = arith.constant 35 : index
    %633 = memref.load %arg1[%c35] : memref<144xf32, #tpu.memory_space<smem>>
    %634 = vector.broadcast %633 : f32 to vector<16x16xf32>
    %635 = arith.mulf %634, %632 : vector<16x16xf32>
    %636 = arith.addf %619, %635 : vector<16x16xf32>
    %c71 = arith.constant 71 : index
    %637 = memref.load %arg1[%c71] : memref<144xf32, #tpu.memory_space<smem>>
    %638 = vector.broadcast %637 : f32 to vector<16x16xf32>
    %639 = arith.mulf %638, %632 : vector<16x16xf32>
    %640 = arith.addf %623, %639 : vector<16x16xf32>
    %c107 = arith.constant 107 : index
    %641 = memref.load %arg1[%c107] : memref<144xf32, #tpu.memory_space<smem>>
    %642 = vector.broadcast %641 : f32 to vector<16x16xf32>
    %643 = arith.mulf %642, %632 : vector<16x16xf32>
    %644 = arith.addf %627, %643 : vector<16x16xf32>
    %c143 = arith.constant 143 : index
    %645 = memref.load %arg1[%c143] : memref<144xf32, #tpu.memory_space<smem>>
    %646 = vector.broadcast %645 : f32 to vector<16x16xf32>
    %647 = arith.mulf %646, %632 : vector<16x16xf32>
    %648 = arith.addf %631, %647 : vector<16x16xf32>
    %649 = vector.shape_cast %636 : vector<16x16xf32> to vector<1x16x16xf32>
    %650 = vector.shape_cast %640 : vector<16x16xf32> to vector<1x16x16xf32>
    %651 = vector.shape_cast %644 : vector<16x16xf32> to vector<1x16x16xf32>
    %652 = vector.shape_cast %648 : vector<16x16xf32> to vector<1x16x16xf32>
    %653 = tpu.concatenate %649, %650, %651, %652 in 0 : vector<1x16x16xf32>, vector<1x16x16xf32>, vector<1x16x16xf32>, vector<1x16x16xf32> -> vector<4x16x16xf32>
    %cst_50 = arith.constant -1.500000e+00 : f32
    %654 = vector.broadcast %cst_50 : f32 to vector<4x16x16xf32>
    %655 = arith.divf %654, %653 : vector<4x16x16xf32>
    %656 = vector.shape_cast %655 : vector<4x16x16xf32> to vector<4x256xf32>
    %c0_51 = arith.constant 0 : index
    %c0_52 = arith.constant 0 : index
    %c0_53 = arith.constant 0 : index
    %657 = vector.load %arg4[%c0_51, %c0_52, %c0_53] : memref<1x4x256xf32, #tpu.memory_space<vmem>>, vector<1x4x256xf32>
    %658 = vector.shape_cast %657 : vector<1x4x256xf32> to vector<4x256xf32>
    %659 = vector.shape_cast %656 : vector<4x256xf32> to vector<1x4x256xf32>
    tpu.vector_store %arg4[%c0_51, %c0_52, %c0_53], %659 {strides = array<i32>} : memref<1x4x256xf32, #tpu.memory_space<vmem>>, vector<1x4x256xf32>,
    return
  }
  func.func @transform_0(%arg0: i32) -> i32 {
    %c0_i32 = arith.constant 0 : i32
    %c0_i32_0 = arith.constant 0 : i32
    return %c0_i32 : i32
  }
  func.func @transform_1(%arg0: i32) -> i32 {
    %c0_i32 = arith.constant 0 : i32
    %c0_i32_0 = arith.constant 0 : i32
    return %c0_i32 : i32
  }
  func.func @transform_2(%arg0: i32) -> (i32, i32, i32, i32) {
    %c0_i32 = arith.constant 0 : i32
    %c0_i32_0 = arith.constant 0 : i32
    %c0_i32_1 = arith.constant 0 : i32
    %c0_i32_2 = arith.constant 0 : i32
    return %arg0, %c0_i32, %c0_i32_0, %c0_i32_1 : i32, i32, i32, i32
  }
  func.func @transform_3(%arg0: i32) -> (i32, i32, i32) {
    %c0_i32 = arith.constant 0 : i32
    %c0_i32_0 = arith.constant 0 : i32
    %c0_i32_1 = arith.constant 0 : i32
    return %arg0, %c0_i32, %c0_i32_0 : i32, i32, i32
  }
}

</mosaic_0001>

<llo_original>
// kernel: tpu_custom_call.1
$region0: #{tpu_custom_call.1}
  #allocation0 [shape = 'u32[]', space=smem, size = 0x4, offset = 0x4, fixed_abs, tag = 'smem constant byte address 0x4 - core index']
  #allocation1 [shape = 'u32[144,128]{1,0:T(1,128)}', space=vmem, size = 0x12000, scoped, tag = 'internal scratch']
  #allocation2 [shape = 'f32[4,18,18]{2,1,0:T(8,128)}', space=vmem, size = 0xc000, scoped, tag = 'scratch operand']
  %s0 = inlined_call_operand.hbm [shape: f32[144], index: 0, kind: input, shape index: {}]
  %s1 = inlined_call_operand.vmem [shape: f32[4], index: 1, kind: input, shape index: {}]
  %s2 = inlined_call_operand.hbm [shape: f32[2,4,16,16], index: 2, kind: input, shape index: {}]
  %s3 = inlined_call_operand.hbm [shape: f32[2,4,256], index: 3, kind: output, shape index: {}]
  %s4 = sld [smem:[#allocation0]]
  $region57: #{tpu_custom_call.1} parent=0
    _
  %s6 = ssub.s32 1, %s4
  %s7 = scalar_select 0, %s6, %s4
  $region1: #{tpu_custom_call.1} parent=0
    #allocation3 [shape = 'u8[1024]{0}', space=smem, size = 0x400, scoped, tag = 'input window, operand 0, single buffered']
    #allocation4 [shape = 's32[2]{0}', space=sflag, size = 0x8, scoped, tag = 'scoped memory for tpu_custom_call.1']
    #allocation5 [shape = 's32[2]{0}', space=sflag, size = 0x8, scoped, tag = 'scoped memory for tpu_custom_call.1']
    #allocation6 [shape = 's32[2]{0}', space=sflag, size = 0x8, scoped, tag = 'scoped memory for tpu_custom_call.1']
    #allocation7 [shape = 's32[2]{0}', space=sflag, size = 0x8, scoped, tag = 'scoped memory for tpu_custom_call.1']
    #allocation8 [shape = 'u8[512]{0}', space=smem, size = 0x200, scoped, tag = 'input window, operand 1, single buffered']
    #allocation9 [shape = 'u8[65536]{0}', space=vmem, size = 0x10000, scoped, tag = 'input window, operand 2']
    #allocation10 [shape = 'u8[8192]{0}', space=vmem, size = 0x2000, scoped, tag = 'output window, operand 0']
    %8 = vsyncpa [#allocation6], 0
    %9 = vsyncpa [#allocation7], 0
    %10 = vsyncpa [#allocation4], 0
    %s11 = scalar_lea.sflag [#allocation4], 1
    %12 = vsyncpa %s11, 0
    %13 = vsyncpa [#allocation5], 0
    %s14 = scalar_lea.sflag [#allocation5], 1
    %15 = vsyncpa %s14, 0
    loop: start=0, step=1, limit=4
    $region2: #{tpu_custom_call.1} parent=1 // loop_pre_header
      _
    $region3: #{tpu_custom_call.1} parent=1 // loop_header
      %s17 = sphi 0, %s21
      %p18 = scmp.ge.s32.totalorder %s17, 4
      %s25 = sphi 0, %s25
      %s27 = sphi 0, %s25
      %s28 = sphi 0, %s27
      %s42 = sphi 0, %s28
      %s46 = sphi 0, %s46
      %s48 = sphi 0, %s46
      %s49 = sphi 0, %s48
      %s63 = sphi 0, %s49
      %s69 = sphi 0, %s71
      %s72 = sphi 0, %s69
      %s73 = sphi 0, %s72
      %s89 = sphi 0, %s73
      %s95 = sphi 0, %s97
      %s98 = sphi 0, %s95
      %s99 = sphi 0, %s98
      %s115 = sphi 0, %s99
    $region4: #{tpu_custom_call.1} parent=1 // loop_header_branch
      %20 = sbr.rel (%p18) target = $region8
    $region5: #{tpu_custom_call.1} parent=1 // loop_body
      %s22 = ssub.s32 %s17, 1
      %s23 = ssub.s32 %s17, 2
      %s24 = sadd.s32 %s17, 1
      %s26 = sadd.s32 %s25, 1
      %p29 = scmp.eq.s32.totalorder %s17, 1
      %p30 = scmp.ne.s32.totalorder %s25, %s27
      %p31 = scmp.eq.s32.totalorder %s17, 0
      %p32 = por %p30, %p31
      %p33 = scmp.ne.s32.totalorder %s25, %s27
      %p34 = scmp.eq.s32.totalorder %s22, 1
      %p35 = por %p33, %p34
      %p36 = scmp.ne.s32.totalorder %s27, %s28
      %p37 = scmp.eq.s32.totalorder %s22, 0
      %p38 = por %p36, %p37
      %p39 = scmp.ne.s32.totalorder %s27, %s28
      %p40 = scmp.eq.s32.totalorder %s23, 1
      %p41 = por %p39, %p40
      %p43 = scmp.ne.s32.totalorder %s28, %s42
      %p44 = scmp.eq.s32.totalorder %s23, 0
      %p45 = por %p43, %p44
      %s47 = sadd.s32 %s46, 1
      %p50 = scmp.eq.s32.totalorder %s17, 1
      %p51 = scmp.ne.s32.totalorder %s46, %s48
      %p52 = scmp.eq.s32.totalorder %s17, 0
      %p53 = por %p51, %p52
      %p54 = scmp.ne.s32.totalorder %s46, %s48
      %p55 = scmp.eq.s32.totalorder %s22, 1
      %p56 = por %p54, %p55
      %p57 = scmp.ne.s32.totalorder %s48, %s49
      %p58 = scmp.eq.s32.totalorder %s22, 0
      %p59 = por %p57, %p58
      %p60 = scmp.ne.s32.totalorder %s48, %s49
      %p61 = scmp.eq.s32.totalorder %s23, 1
      %p62 = por %p60, %p61
      %p64 = scmp.ne.s32.totalorder %s49, %s63
      %p65 = scmp.eq.s32.totalorder %s23, 0
      %p66 = por %p64, %p65
      %s67 = ssub.s32 %s17, %s24
      %p68 = scmp.eq.s32.totalorder %s67, 0
      %s70 = sadd.s32 %s69, 1
      %s71 = scalar_select %p68, %s69, %s70
      %p74 = pneg %p68
      %p75 = scmp.eq.s32.totalorder %s17, 1
      %p76 = por %p74, %p75
      %p77 = scmp.ne.s32.totalorder %s69, %s72
      %p78 = scmp.eq.s32.totalorder %s17, 0
      %p79 = por %p77, %p78
      %p80 = scmp.ne.s32.totalorder %s69, %s72
      %p81 = scmp.eq.s32.totalorder %s22, 1
      %p82 = por %p80, %p81
      %p83 = scmp.ne.s32.totalorder %s72, %s73
      %p84 = scmp.eq.s32.totalorder %s22, 0
      %p85 = por %p83, %p84
      %p86 = scmp.ne.s32.totalorder %s72, %s73
      %p87 = scmp.eq.s32.totalorder %s23, 1
      %p88 = por %p86, %p87
      %p90 = scmp.ne.s32.totalorder %s73, %s89
      %p91 = scmp.eq.s32.totalorder %s23, 0
      %p92 = por %p90, %p91
      %s93 = ssub.s32 %s17, %s24
      %p94 = scmp.eq.s32.totalorder %s93, 0
      %s96 = sadd.s32 %s95, 1
      %s97 = scalar_select %p94, %s95, %s96
      %p100 = pneg %p94
      %p101 = scmp.eq.s32.totalorder %s17, 1
      %p102 = por %p100, %p101
      %p103 = scmp.ne.s32.totalorder %s95, %s98
      %p104 = scmp.eq.s32.totalorder %s17, 0
      %p105 = por %p103, %p104
      %p106 = scmp.ne.s32.totalorder %s95, %s98
      %p107 = scmp.eq.s32.totalorder %s22, 1
      %p108 = por %p106, %p107
      %p109 = scmp.ne.s32.totalorder %s98, %s99
      %p110 = scmp.eq.s32.totalorder %s22, 0
      %p111 = por %p109, %p110
      %p112 = scmp.ne.s32.totalorder %s98, %s99
      %p113 = scmp.eq.s32.totalorder %s23, 1
      %p114 = por %p112, %p113
      %p116 = scmp.ne.s32.totalorder %s99, %s115
      %p117 = scmp.eq.s32.totalorder %s23, 0
      %p118 = por %p116, %p117
      %p119 = scmp.le.s32.totalorder 1, %s17
      %p120 = scmp.lt.s32.totalorder %s17, 3
      %p121 = pnand %p119, %p120
      %p122 = pneg %p121
      // Predicated region
      $region9: #{tpu_custom_call.1} parent=5 // pred_check
        _
      $region10: #{tpu_custom_call.1} parent=5 // pred_check_branch
        %124 = sbr.rel (%p121) target = $region12
      $region11: #{tpu_custom_call.1} parent=5 // pred_region
        %s125 = ssub.s32 %s17, 1
        // Predicated region
        $region13: #{tpu_custom_call.1} parent=11 // pred_check
          %p126 = pneg %p38
        $region14: #{tpu_custom_call.1} parent=11 // pred_check_branch
          %128 = sbr.rel (%p126) target = $region16
        $region15: #{tpu_custom_call.1} parent=11 // pred_region
          %s130 = ssub.s32 32, 32
          %131 = vsyncadd [#allocation6], %s130
          %134 = dma.hbm_to_smem %s0, 32, [#allocation3], [#allocation6]
        $region16: #{tpu_custom_call.1} parent=11 // pred_fallthru
          _
        // Predicated region
        $region17: #{tpu_custom_call.1} parent=11 // pred_check
          %p135 = pneg %p59
        $region18: #{tpu_custom_call.1} parent=11 // pred_check_branch
          %137 = sbr.rel (%p135) target = $region20
        $region19: #{tpu_custom_call.1} parent=11 // pred_region
          %s139 = ssub.s32 16, 16
          %140 = vsyncadd [#allocation7], %s139
          %s142 = sshll.u32 %s1, 4
          %s143 = int_to_ptr.vmem [resolvable:$true] %s142
          %145 = dma.vmem_to_smem %s143, 16, [#allocation8], [#allocation7]
        $region20: #{tpu_custom_call.1} parent=11 // pred_fallthru
          _
      $region12: #{tpu_custom_call.1} parent=5 // pred_fallthru
        _
      %p146 = scmp.lt.s32.totalorder %s17, 2
      // Predicated region
      $region21: #{tpu_custom_call.1} parent=5 // pred_check
        %p147 = pneg %p146
      $region22: #{tpu_custom_call.1} parent=5 // pred_check_branch
        %149 = sbr.rel (%p147) target = $region24
      $region23: #{tpu_custom_call.1} parent=5 // pred_region
        // Predicated region
        $region25: #{tpu_custom_call.1} parent=23 // pred_check
          %p150 = pneg %p79
        $region26: #{tpu_custom_call.1} parent=23 // pred_check_branch
          %152 = sbr.rel (%p150) target = $region28
        $region27: #{tpu_custom_call.1} parent=23 // pred_region
          %s153 = sand.u32 %s69, 1
          %s154 = scalar_lea.sflag [#allocation4], %s153
          %s155 = sand.u32 %s69, 1
          %s156 = smul.addr %s155, 64
          %s157 = scalar_lea.vmem [#allocation9], %s156
          %s159 = ssub.s32 1024, 1024
          %160 = vsyncadd %s154, %s159
          %s161 = smul.addr %s17, 8
          %s162 = smul.addr %s161, 128
          %s163 = scalar_lea.hbm %s2, %s162
          %s164 = sshll.u32 %s157, 4
          %s165 = int_to_ptr.vmem [resolvable:$true] %s164
          %170 = dma.hbm_to_vmem [thread:$0]  %s163, 1024, %s165, %s154, 128, 128, 8
        $region28: #{tpu_custom_call.1} parent=23 // pred_fallthru
          _
      $region24: #{tpu_custom_call.1} parent=5 // pred_fallthru
        _
      %p171 = scmp.le.s32.totalorder 1, %s17
      %p172 = scmp.lt.s32.totalorder %s17, 3
      %p173 = pnand %p171, %p172
      %p174 = pneg %p173
      // Predicated region
      $region29: #{tpu_custom_call.1} parent=5 // pred_check
        _
      $region30: #{tpu_custom_call.1} parent=5 // pred_check_branch
        %176 = sbr.rel (%p173) target = $region32
      $region31: #{tpu_custom_call.1} parent=5 // pred_region
        %s177 = ssub.s32 %s17, 1
        // Predicated region
        $region33: #{tpu_custom_call.1} parent=31 // pred_check
          %p178 = pneg %p38
        $region34: #{tpu_custom_call.1} parent=31 // pred_check_branch
          %180 = sbr.rel (%p178) target = $region36
        $region35: #{tpu_custom_call.1} parent=31 // pred_region
          %181 = dma.done [#allocation6], 32
        $region36: #{tpu_custom_call.1} parent=31 // pred_fallthru
          _
        // Predicated region
        $region37: #{tpu_custom_call.1} parent=31 // pred_check
          %p182 = pneg %p59
        $region38: #{tpu_custom_call.1} parent=31 // pred_check_branch
          %184 = sbr.rel (%p182) target = $region40
        $region39: #{tpu_custom_call.1} parent=31 // pred_region
          %185 = dma.done [#allocation7], 16
        $region40: #{tpu_custom_call.1} parent=31 // pred_fallthru
          _
        %s186 = sand.u32 %s72, 1
        %s187 = scalar_lea.sflag [#allocation4], %s186
        %s188 = sand.u32 %s72, 1
        %s189 = smul.addr %s188, 64
        %s190 = scalar_lea.vmem [#allocation9], %s189
        // Predicated region
        $region41: #{tpu_custom_call.1} parent=31 // pred_check
          %p191 = pneg %p85
        $region42: #{tpu_custom_call.1} parent=31 // pred_check_branch
          %193 = sbr.rel (%p191) target = $region44
        $region43: #{tpu_custom_call.1} parent=31 // pred_region
          %194 = dma.done %s187, 1024
        $region44: #{tpu_custom_call.1} parent=31 // pred_fallthru
          _
        %195 = sfence
        %p196 = pneg %p38
        %p197 = pneg %p35
        %p198 = pneg %p59
        %p199 = pneg %p56
        %s200 = sand.u32 %s72, 1
        %s201 = scalar_lea.sflag [#allocation4], %s200
        %s202 = sand.u32 %s72, 1
        %s203 = smul.addr %s202, 64
        %s204 = scalar_lea.vmem [#allocation9], %s203
        %p205 = pneg %p85
        %p206 = pneg %p82
        %p207 = pneg %p111
        %p208 = pneg %p108
        %s209 = sand.u32 %s98, 1
        %s210 = scalar_lea.sflag [#allocation5], %s209
        %s211 = sand.u32 %s98, 1
        %s212 = smul.addr %s211, 8
        %s213 = scalar_lea.vmem [#allocation10], %s212
        %vm214 = vcmask 146432
        %215 = vst.msk [vmem:[#allocation2] sm:$0xff] %vm214, 0.0
        %216 = vst.msk [vmem:[#allocation2 + $0x8] sm:$0xff] %vm214, 0.0
        %vm217 = vcmask 140288
        %218 = vst.msk [vmem:[#allocation2 + $0x10] sm:$0x3] %vm217, 0.0
        %219 = vst.msk [vmem:[#allocation2 + $0x18] sm:$0xff] %vm214, 0.0
        %220 = vst.msk [vmem:[#allocation2 + $0x20] sm:$0xff] %vm214, 0.0
        %221 = vst.msk [vmem:[#allocation2 + $0x28] sm:$0x3] %vm217, 0.0
        %222 = vst.msk [vmem:[#allocation2 + $0x30] sm:$0xff] %vm214, 0.0
        %223 = vst.msk [vmem:[#allocation2 + $0x38] sm:$0xff] %vm214, 0.0
        %224 = vst.msk [vmem:[#allocation2 + $0x40] sm:$0x3] %vm217, 0.0
        %225 = vst.msk [vmem:[#allocation2 + $0x48] sm:$0xff] %vm214, 0.0
        %226 = vst.msk [vmem:[#allocation2 + $0x50] sm:$0xff] %vm214, 0.0
        %227 = vst.msk [vmem:[#allocation2 + $0x58] sm:$0x3] %vm217, 0.0
        %v228 = vld [vmem:[%s190] sm:$0xff]
        %v229 = vld [vmem:[%s190 + $0x8] sm:$0xff]
        %v230 = vld [vmem:[%s190 + $0x10] sm:$0xff]
        %v231 = vld [vmem:[%s190 + $0x18] sm:$0xff]
        %v232 = vld [vmem:[%s190 + $0x20] sm:$0xff]
        %v233 = vld [vmem:[%s190 + $0x28] sm:$0xff]
        %v234 = vld [vmem:[%s190 + $0x30] sm:$0xff]
        %v235 = vld [vmem:[%s190 + $0x38] sm:$0xff]
        %244 = vrot.lane.b32.xlu0 %v228, 1
        %v245 = vpop.permute.xlu0 %244
        %246 = vrot.lane.b32.xlu0 %v229, 1
        %v247 = vpop.permute.xlu0 %246
        %248 = vrot.lane.b32.xlu0 %v230, 1
        %v249 = vpop.permute.xlu0 %248
        %250 = vrot.lane.b32.xlu0 %v231, 1
        %v251 = vpop.permute.xlu0 %250
        %252 = vrot.lane.b32.xlu0 %v232, 1
        %v253 = vpop.permute.xlu0 %252
        %254 = vrot.lane.b32.xlu0 %v233, 1
        %v255 = vpop.permute.xlu0 %254
        %256 = vrot.lane.b32.xlu0 %v234, 1
        %v257 = vpop.permute.xlu0 %256
        %258 = vrot.lane.b32.xlu0 %v235, 1
        %v259 = vpop.permute.xlu0 %258
        %vm268 = vcmask 138248
        %269 = vst.msk [vmem:[#allocation2 + $0x1] sm:$0xff] %vm268, %v245
        %270 = vst.msk [vmem:[#allocation2 + $0x9] sm:$0xff] %vm268, %v247
        %271 = vst.msk [vmem:[#allocation2 + $0x19] sm:$0xff] %vm268, %v249
        %272 = vst.msk [vmem:[#allocation2 + $0x21] sm:$0xff] %vm268, %v251
        %273 = vst.msk [vmem:[#allocation2 + $0x31] sm:$0xff] %vm268, %v253
        %274 = vst.msk [vmem:[#allocation2 + $0x39] sm:$0xff] %vm268, %v255
        %275 = vst.msk [vmem:[#allocation2 + $0x49] sm:$0xff] %vm268, %v257
        %276 = vst.msk [vmem:[#allocation2 + $0x51] sm:$0xff] %vm268, %v259
        %s277 = sld [smem:[#allocation8]]
        %v278 = vstv %s277
        %s279 = sld [smem:[#allocation8 + $0x1]]
        %v280 = vstv %s279
        %s281 = sld [smem:[#allocation8 + $0x2]]
        %v282 = vstv %s281
        %s283 = sld [smem:[#allocation8 + $0x3]]
        %v284 = vstv %s283
        %v285 = vld [vmem:[#allocation2] sm:$0xff]
        %v286 = vld [vmem:[#allocation2 + $0x8] sm:$0xff]
        %v287 = vld [vmem:[#allocation2 + $0x10] sm:$0x3]
        %s288 = sld [smem:[#allocation3]]
        %v289 = vstv %s288
        %v290 = vmul.f32 %v289, %v285
        %v291 = vmul.f32 %v289, %v286
        %v292 = vadd.f32 %v278, %v290
        %v293 = vadd.f32 %v278, %v291
        %s294 = sld [smem:[#allocation3 + $0x24]]
        %v295 = vstv %s294
        %v296 = vmul.f32 %v295, %v285
        %v297 = vmul.f32 %v295, %v286
        %v298 = vadd.f32 %v280, %v296
        %v299 = vadd.f32 %v280, %v297
        %s300 = sld [smem:[#allocation3 + $0x48]]
        %v301 = vstv %s300
        %v302 = vmul.f32 %v301, %v285
        %v303 = vmul.f32 %v301, %v286
        %v304 = vadd.f32 %v282, %v302
        %v305 = vadd.f32 %v282, %v303
        %s306 = sld [smem:[#allocation3 + $0x6c]]
        %v307 = vstv %s306
        %v308 = vmul.f32 %v307, %v285
        %v309 = vmul.f32 %v307, %v286
        %v310 = vadd.f32 %v284, %v308
        %v311 = vadd.f32 %v284, %v309
        %s312 = sld [smem:[#allocation3 + $0x3]]
        %v313 = vstv %s312
        %v314 = vmul.f32 %v313, %v285
        %v315 = vmul.f32 %v313, %v286
        %v316 = vmul.f32 %v313, %v287
        %vm320 = vcmask 1046528
        %v321 = vrot.slane %v314, 1
        %v322 = vrot.slane %v315, 1
        %v323 = vsel %vm320, %v321, %v322
        %v324 = vrot.slane %v316, 1
        %v325 = vsel %vm320, %v322, %v324
        %v328 = vadd.f32 %v292, %v323
        %v329 = vadd.f32 %v293, %v325
        %s330 = sld [smem:[#allocation3 + $0x27]]
        %v331 = vstv %s330
        %v332 = vmul.f32 %v331, %v285
        %v333 = vmul.f32 %v331, %v286
        %v334 = vmul.f32 %v331, %v287
        %v338 = vrot.slane %v332, 1
        %v339 = vrot.slane %v333, 1
        %v340 = vsel %vm320, %v338, %v339
        %v341 = vrot.slane %v334, 1
        %v342 = vsel %vm320, %v339, %v341
        %v345 = vadd.f32 %v298, %v340
        %v346 = vadd.f32 %v299, %v342
        %s347 = sld [smem:[#allocation3 + $0x4b]]
        %v348 = vstv %s347
        %v349 = vmul.f32 %v348, %v285
        %v350 = vmul.f32 %v348, %v286
        %v351 = vmul.f32 %v348, %v287
        %v355 = vrot.slane %v349, 1
        %v356 = vrot.slane %v350, 1
        %v357 = vsel %vm320, %v355, %v356
        %v358 = vrot.slane %v351, 1
        %v359 = vsel %vm320, %v356, %v358
        %v362 = vadd.f32 %v304, %v357
        %v363 = vadd.f32 %v305, %v359
        %s364 = sld [smem:[#allocation3 + $0x6f]]
        %v365 = vstv %s364
        %v366 = vmul.f32 %v365, %v285
        %v367 = vmul.f32 %v365, %v286
        %v368 = vmul.f32 %v365, %v287
        %v372 = vrot.slane %v366, 1
        %v373 = vrot.slane %v367, 1
        %v374 = vsel %vm320, %v372, %v373
        %v375 = vrot.slane %v368, 1
        %v376 = vsel %vm320, %v373, %v375
        %v379 = vadd.f32 %v310, %v374
        %v380 = vadd.f32 %v311, %v376
        %s381 = sld [smem:[#allocation3 + $0x6]]
        %v382 = vstv %s381
        %v383 = vmul.f32 %v382, %v285
        %v384 = vmul.f32 %v382, %v286
        %v385 = vmul.f32 %v382, %v287
        %vm389 = vcmask 1045504
        %v390 = vrot.slane %v383, 2
        %v391 = vrot.slane %v384, 2
        %v392 = vsel %vm389, %v390, %v391
        %v393 = vrot.slane %v385, 2
        %v394 = vsel %vm389, %v391, %v393
        %v397 = vadd.f32 %v328, %v392
        %v398 = vadd.f32 %v329, %v394
        %s399 = sld [smem:[#allocation3 + $0x2a]]
        %v400 = vstv %s399
        %v401 = vmul.f32 %v400, %v285
        %v402 = vmul.f32 %v400, %v286
        %v403 = vmul.f32 %v400, %v287
        %v407 = vrot.slane %v401, 2
        %v408 = vrot.slane %v402, 2
        %v409 = vsel %vm389, %v407, %v408
        %v410 = vrot.slane %v403, 2
        %v411 = vsel %vm389, %v408, %v410
        %v414 = vadd.f32 %v345, %v409
        %v415 = vadd.f32 %v346, %v411
        %s416 = sld [smem:[#allocation3 + $0x4e]]
        %v417 = vstv %s416
        %v418 = vmul.f32 %v417, %v285
        %v419 = vmul.f32 %v417, %v286
        %v420 = vmul.f32 %v417, %v287
        %v424 = vrot.slane %v418, 2
        %v425 = vrot.slane %v419, 2
        %v426 = vsel %vm389, %v424, %v425
        %v427 = vrot.slane %v420, 2
        %v428 = vsel %vm389, %v425, %v427
        %v431 = vadd.f32 %v362, %v426
        %v432 = vadd.f32 %v363, %v428
        %s433 = sld [smem:[#allocation3 + $0x72]]
        %v434 = vstv %s433
        %v435 = vmul.f32 %v434, %v285
        %v436 = vmul.f32 %v434, %v286
        %v437 = vmul.f32 %v434, %v287
        %v441 = vrot.slane %v435, 2
        %v442 = vrot.slane %v436, 2
        %v443 = vsel %vm389, %v441, %v442
        %v444 = vrot.slane %v437, 2
        %v445 = vsel %vm389, %v442, %v444
        %v448 = vadd.f32 %v379, %v443
        %v449 = vadd.f32 %v380, %v445
        %s450 = sld [smem:[#allocation3 + $0x1]]
        %v451 = vstv %s450
        %v452 = vmul.f32 %v451, %v285
        %v453 = vmul.f32 %v451, %v286
        %456 = vrot.lane.b32.xlu0 %v452, 127
        %v457 = vpop.permute.xlu0 %456
        %458 = vrot.lane.b32.xlu0 %v453, 127
        %v459 = vpop.permute.xlu0 %458
        %v462 = vadd.f32 %v397, %v457
        %v463 = vadd.f32 %v398, %v459
        %s464 = sld [smem:[#allocation3 + $0x25]]
        %v465 = vstv %s464
        %v466 = vmul.f32 %v465, %v285
        %v467 = vmul.f32 %v465, %v286
        %470 = vrot.lane.b32.xlu0 %v466, 127
        %v471 = vpop.permute.xlu0 %470
        %472 = vrot.lane.b32.xlu0 %v467, 127
        %v473 = vpop.permute.xlu0 %472
        %v476 = vadd.f32 %v414, %v471
        %v477 = vadd.f32 %v415, %v473
        %s478 = sld [smem:[#allocation3 + $0x49]]
        %v479 = vstv %s478
        %v480 = vmul.f32 %v479, %v285
        %v481 = vmul.f32 %v479, %v286
        %484 = vrot.lane.b32.xlu0 %v480, 127
        %v485 = vpop.permute.xlu0 %484
        %486 = vrot.lane.b32.xlu0 %v481, 127
        %v487 = vpop.permute.xlu0 %486
        %v490 = vadd.f32 %v431, %v485
        %v491 = vadd.f32 %v432, %v487
        %s492 = sld [smem:[#allocation3 + $0x6d]]
        %v493 = vstv %s492
        %v494 = vmul.f32 %v493, %v285
        %v495 = vmul.f32 %v493, %v286
        %498 = vrot.lane.b32.xlu0 %v494, 127
        %v499 = vpop.permute.xlu0 %498
        %500 = vrot.lane.b32.xlu0 %v495, 127
        %v501 = vpop.permute.xlu0 %500
        %v504 = vadd.f32 %v448, %v499
        %v505 = vadd.f32 %v449, %v501
        %s506 = sld [smem:[#allocation3 + $0x4]]
        %v507 = vstv %s506
        %v508 = vmul.f32 %v507, %v285
        %v509 = vmul.f32 %v507, %v286
        %v510 = vmul.f32 %v507, %v287
        %v514 = vrot.slane %v508, 1
        %v515 = vrot.slane %v509, 1
        %v516 = vsel %vm320, %v514, %v515
        %v517 = vrot.slane %v510, 1
        %v518 = vsel %vm320, %v515, %v517
        %519 = vrot.lane.b32.xlu0 %v516, 127
        %v520 = vpop.permute.xlu0 %519
        %521 = vrot.lane.b32.xlu0 %v518, 127
        %v522 = vpop.permute.xlu0 %521
        %v525 = vadd.f32 %v462, %v520
        %v526 = vadd.f32 %v463, %v522
        %s527 = sld [smem:[#allocation3 + $0x28]]
        %v528 = vstv %s527
        %v529 = vmul.f32 %v528, %v285
        %v530 = vmul.f32 %v528, %v286
        %v531 = vmul.f32 %v528, %v287
        %v535 = vrot.slane %v529, 1
        %v536 = vrot.slane %v530, 1
        %v537 = vsel %vm320, %v535, %v536
        %v538 = vrot.slane %v531, 1
        %v539 = vsel %vm320, %v536, %v538
        %540 = vrot.lane.b32.xlu0 %v537, 127
        %v541 = vpop.permute.xlu0 %540
        %542 = vrot.lane.b32.xlu0 %v539, 127
        %v543 = vpop.permute.xlu0 %542
        %v546 = vadd.f32 %v476, %v541
        %v547 = vadd.f32 %v477, %v543
        %s548 = sld [smem:[#allocation3 + $0x4c]]
        %v549 = vstv %s548
        %v550 = vmul.f32 %v549, %v285
        %v551 = vmul.f32 %v549, %v286
        %v552 = vmul.f32 %v549, %v287
        %v556 = vrot.slane %v550, 1
        %v557 = vrot.slane %v551, 1
        %v558 = vsel %vm320, %v556, %v557
        %v559 = vrot.slane %v552, 1
        %v560 = vsel %vm320, %v557, %v559
        %561 = vrot.lane.b32.xlu0 %v558, 127
        %v562 = vpop.permute.xlu0 %561
        %563 = vrot.lane.b32.xlu0 %v560, 127
        %v564 = vpop.permute.xlu0 %563
        %v567 = vadd.f32 %v490, %v562
        %v568 = vadd.f32 %v491, %v564
        %s569 = sld [smem:[#allocation3 + $0x70]]
        %v570 = vstv %s569
        %v571 = vmul.f32 %v570, %v285
        %v572 = vmul.f32 %v570, %v286
        %v573 = vmul.f32 %v570, %v287
        %v577 = vrot.slane %v571, 1
        %v578 = vrot.slane %v572, 1
        %v579 = vsel %vm320, %v577, %v578
        %v580 = vrot.slane %v573, 1
        %v581 = vsel %vm320, %v578, %v580
        %582 = vrot.lane.b32.xlu0 %v579, 127
        %v583 = vpop.permute.xlu0 %582
        %584 = vrot.lane.b32.xlu0 %v581, 127
        %v585 = vpop.permute.xlu0 %584
        %v588 = vadd.f32 %v504, %v583
        %v589 = vadd.f32 %v505, %v585
        %s590 = sld [smem:[#allocation3 + $0x7]]
        %v591 = vstv %s590
        %v592 = vmul.f32 %v591, %v285
        %v593 = vmul.f32 %v591, %v286
        %v594 = vmul.f32 %v591, %v287
        %v598 = vrot.slane %v592, 2
        %v599 = vrot.slane %v593, 2
        %v600 = vsel %vm389, %v598, %v599
        %v601 = vrot.slane %v594, 2
        %v602 = vsel %vm389, %v599, %v601
        %603 = vrot.lane.b32.xlu0 %v600, 127
        %v604 = vpop.permute.xlu0 %603
        %605 = vrot.lane.b32.xlu0 %v602, 127
        %v606 = vpop.permute.xlu0 %605
        %v609 = vadd.f32 %v525, %v604
        %v610 = vadd.f32 %v526, %v606
        %s611 = sld [smem:[#allocation3 + $0x2b]]
        %v612 = vstv %s611
        %v613 = vmul.f32 %v612, %v285
        %v614 = vmul.f32 %v612, %v286
        %v615 = vmul.f32 %v612, %v287
        %v619 = vrot.slane %v613, 2
        %v620 = vrot.slane %v614, 2
        %v621 = vsel %vm389, %v619, %v620
        %v622 = vrot.slane %v615, 2
        %v623 = vsel %vm389, %v620, %v622
        %624 = vrot.lane.b32.xlu0 %v621, 127
        %v625 = vpop.permute.xlu0 %624
        %626 = vrot.lane.b32.xlu0 %v623, 127
        %v627 = vpop.permute.xlu0 %626
        %v630 = vadd.f32 %v546, %v625
        %v631 = vadd.f32 %v547, %v627
        %s632 = sld [smem:[#allocation3 + $0x4f]]
        %v633 = vstv %s632
        %v634 = vmul.f32 %v633, %v285
        %v635 = vmul.f32 %v633, %v286
        %v636 = vmul.f32 %v633, %v287
        %v640 = vrot.slane %v634, 2
        %v641 = vrot.slane %v635, 2
        %v642 = vsel %vm389, %v640, %v641
        %v643 = vrot.slane %v636, 2
        %v644 = vsel %vm389, %v641, %v643
        %645 = vrot.lane.b32.xlu0 %v642, 127
        %v646 = vpop.permute.xlu0 %645
        %647 = vrot.lane.b32.xlu0 %v644, 127
        %v648 = vpop.permute.xlu0 %647
        %v651 = vadd.f32 %v567, %v646
        %v652 = vadd.f32 %v568, %v648
        %s653 = sld [smem:[#allocation3 + $0x73]]
        %v654 = vstv %s653
        %v655 = vmul.f32 %v654, %v285
        %v656 = vmul.f32 %v654, %v286
        %v657 = vmul.f32 %v654, %v287
        %v661 = vrot.slane %v655, 2
        %v662 = vrot.slane %v656, 2
        %v663 = vsel %vm389, %v661, %v662
        %v664 = vrot.slane %v657, 2
        %v665 = vsel %vm389, %v662, %v664
        %666 = vrot.lane.b32.xlu0 %v663, 127
        %v667 = vpop.permute.xlu0 %666
        %668 = vrot.lane.b32.xlu0 %v665, 127
        %v669 = vpop.permute.xlu0 %668
        %v672 = vadd.f32 %v588, %v667
        %v673 = vadd.f32 %v589, %v669
        %s674 = sld [smem:[#allocation3 + $0x2]]
        %v675 = vstv %s674
        %v676 = vmul.f32 %v675, %v285
        %v677 = vmul.f32 %v675, %v286
        %680 = vrot.lane.b32.xlu0 %v676, 126
        %v681 = vpop.permute.xlu0 %680
        %682 = vrot.lane.b32.xlu0 %v677, 126
        %v683 = vpop.permute.xlu0 %682
        %v686 = vadd.f32 %v609, %v681
        %v687 = vadd.f32 %v610, %v683
        %s688 = sld [smem:[#allocation3 + $0x26]]
        %v689 = vstv %s688
        %v690 = vmul.f32 %v689, %v285
        %v691 = vmul.f32 %v689, %v286
        %694 = vrot.lane.b32.xlu0 %v690, 126
        %v695 = vpop.permute.xlu0 %694
        %696 = vrot.lane.b32.xlu0 %v691, 126
        %v697 = vpop.permute.xlu0 %696
        %v700 = vadd.f32 %v630, %v695
        %v701 = vadd.f32 %v631, %v697
        %s702 = sld [smem:[#allocation3 + $0x4a]]
        %v703 = vstv %s702
        %v704 = vmul.f32 %v703, %v285
        %v705 = vmul.f32 %v703, %v286
        %708 = vrot.lane.b32.xlu0 %v704, 126
        %v709 = vpop.permute.xlu0 %708
        %710 = vrot.lane.b32.xlu0 %v705, 126
        %v711 = vpop.permute.xlu0 %710
        %v714 = vadd.f32 %v651, %v709
        %v715 = vadd.f32 %v652, %v711
        %s716 = sld [smem:[#allocation3 + $0x6e]]
        %v717 = vstv %s716
        %v718 = vmul.f32 %v717, %v285
        %v719 = vmul.f32 %v717, %v286
        %722 = vrot.lane.b32.xlu0 %v718, 126
        %v723 = vpop.permute.xlu0 %722
        %724 = vrot.lane.b32.xlu0 %v719, 126
        %v725 = vpop.permute.xlu0 %724
        %v728 = vadd.f32 %v672, %v723
        %v729 = vadd.f32 %v673, %v725
        %s730 = sld [smem:[#allocation3 + $0x5]]
        %v731 = vstv %s730
        %v732 = vmul.f32 %v731, %v285
        %v733 = vmul.f32 %v731, %v286
        %v734 = vmul.f32 %v731, %v287
        %v738 = vrot.slane %v732, 1
        %v739 = vrot.slane %v733, 1
        %v740 = vsel %vm320, %v738, %v739
        %v741 = vrot.slane %v734, 1
        %v742 = vsel %vm320, %v739, %v741
        %743 = vrot.lane.b32.xlu0 %v740, 126
        %v744 = vpop.permute.xlu0 %743
        %745 = vrot.lane.b32.xlu0 %v742, 126
        %v746 = vpop.permute.xlu0 %745
        %v749 = vadd.f32 %v686, %v744
        %v750 = vadd.f32 %v687, %v746
        %s751 = sld [smem:[#allocation3 + $0x29]]
        %v752 = vstv %s751
        %v753 = vmul.f32 %v752, %v285
        %v754 = vmul.f32 %v752, %v286
        %v755 = vmul.f32 %v752, %v287
        %v759 = vrot.slane %v753, 1
        %v760 = vrot.slane %v754, 1
        %v761 = vsel %vm320, %v759, %v760
        %v762 = vrot.slane %v755, 1
        %v763 = vsel %vm320, %v760, %v762
        %764 = vrot.lane.b32.xlu0 %v761, 126
        %v765 = vpop.permute.xlu0 %764
        %766 = vrot.lane.b32.xlu0 %v763, 126
        %v767 = vpop.permute.xlu0 %766
        %v770 = vadd.f32 %v700, %v765
        %v771 = vadd.f32 %v701, %v767
        %s772 = sld [smem:[#allocation3 + $0x4d]]
        %v773 = vstv %s772
        %v774 = vmul.f32 %v773, %v285
        %v775 = vmul.f32 %v773, %v286
        %v776 = vmul.f32 %v773, %v287
        %v780 = vrot.slane %v774, 1
        %v781 = vrot.slane %v775, 1
        %v782 = vsel %vm320, %v780, %v781
        %v783 = vrot.slane %v776, 1
        %v784 = vsel %vm320, %v781, %v783
        %785 = vrot.lane.b32.xlu0 %v782, 126
        %v786 = vpop.permute.xlu0 %785
        %787 = vrot.lane.b32.xlu0 %v784, 126
        %v788 = vpop.permute.xlu0 %787
        %v791 = vadd.f32 %v714, %v786
        %v792 = vadd.f32 %v715, %v788
        %s793 = sld [smem:[#allocation3 + $0x71]]
        %v794 = vstv %s793
        %v795 = vmul.f32 %v794, %v285
        %v796 = vmul.f32 %v794, %v286
        %v797 = vmul.f32 %v794, %v287
        %v801 = vrot.slane %v795, 1
        %v802 = vrot.slane %v796, 1
        %v803 = vsel %vm320, %v801, %v802
        %v804 = vrot.slane %v797, 1
        %v805 = vsel %vm320, %v802, %v804
        %806 = vrot.lane.b32.xlu0 %v803, 126
        %v807 = vpop.permute.xlu0 %806
        %808 = vrot.lane.b32.xlu0 %v805, 126
        %v809 = vpop.permute.xlu0 %808
        %v812 = vadd.f32 %v728, %v807
        %v813 = vadd.f32 %v729, %v809
        %s814 = sld [smem:[#allocation3 + $0x8]]
        %v815 = vstv %s814
        %v816 = vmul.f32 %v815, %v285
        %v817 = vmul.f32 %v815, %v286
        %v818 = vmul.f32 %v815, %v287
        %v822 = vrot.slane %v816, 2
        %v823 = vrot.slane %v817, 2
        %v824 = vsel %vm389, %v822, %v823
        %v825 = vrot.slane %v818, 2
        %v826 = vsel %vm389, %v823, %v825
        %827 = vrot.lane.b32.xlu0 %v824, 126
        %v828 = vpop.permute.xlu0 %827
        %829 = vrot.lane.b32.xlu0 %v826, 126
        %v830 = vpop.permute.xlu0 %829
        %v833 = vadd.f32 %v749, %v828
        %v834 = vadd.f32 %v750, %v830
        %s835 = sld [smem:[#allocation3 + $0x2c]]
        %v836 = vstv %s835
        %v837 = vmul.f32 %v836, %v285
        %v838 = vmul.f32 %v836, %v286
        %v839 = vmul.f32 %v836, %v287
        %v843 = vrot.slane %v837, 2
        %v844 = vrot.slane %v838, 2
        %v845 = vsel %vm389, %v843, %v844
        %v846 = vrot.slane %v839, 2
        %v847 = vsel %vm389, %v844, %v846
        %848 = vrot.lane.b32.xlu0 %v845, 126
        %v849 = vpop.permute.xlu0 %848
        %850 = vrot.lane.b32.xlu0 %v847, 126
        %v851 = vpop.permute.xlu0 %850
        %v854 = vadd.f32 %v770, %v849
        %v855 = vadd.f32 %v771, %v851
        %s856 = sld [smem:[#allocation3 + $0x50]]
        %v857 = vstv %s856
        %v858 = vmul.f32 %v857, %v285
        %v859 = vmul.f32 %v857, %v286
        %v860 = vmul.f32 %v857, %v287
        %v864 = vrot.slane %v858, 2
        %v865 = vrot.slane %v859, 2
        %v866 = vsel %vm389, %v864, %v865
        %v867 = vrot.slane %v860, 2
        %v868 = vsel %vm389, %v865, %v867
        %869 = vrot.lane.b32.xlu0 %v866, 126
        %v870 = vpop.permute.xlu0 %869
        %871 = vrot.lane.b32.xlu0 %v868, 126
        %v872 = vpop.permute.xlu0 %871
        %v875 = vadd.f32 %v791, %v870
        %v876 = vadd.f32 %v792, %v872
        %s877 = sld [smem:[#allocation3 + $0x74]]
        %v878 = vstv %s877
        %v879 = vmul.f32 %v878, %v285
        %v880 = vmul.f32 %v878, %v286
        %v881 = vmul.f32 %v878, %v287
        %v885 = vrot.slane %v879, 2
        %v886 = vrot.slane %v880, 2
        %v887 = vsel %vm389, %v885, %v886
        %v888 = vrot.slane %v881, 2
        %v889 = vsel %vm389, %v886, %v888
        %890 = vrot.lane.b32.xlu0 %v887, 126
        %v891 = vpop.permute.xlu0 %890
        %892 = vrot.lane.b32.xlu0 %v889, 126
        %v893 = vpop.permute.xlu0 %892
        %v896 = vadd.f32 %v812, %v891
        %v897 = vadd.f32 %v813, %v893
        %s898 = scalar_lea.vmem [#allocation2], 24
        %v899 = vld [vmem:[%s898] sm:$0xff]
        %v900 = vld [vmem:[%s898 + $0x8] sm:$0xff]
        %v901 = vld [vmem:[%s898 + $0x10] sm:$0x3]
        %s902 = sld [smem:[#allocation3 + $0x9]]
        %v903 = vstv %s902
        %v904 = vmul.f32 %v903, %v899
        %v905 = vmul.f32 %v903, %v900
        %v906 = vadd.f32 %v833, %v904
        %v907 = vadd.f32 %v834, %v905
        %s908 = sld [smem:[#allocation3 + $0x2d]]
        %v909 = vstv %s908
        %v910 = vmul.f32 %v909, %v899
        %v911 = vmul.f32 %v909, %v900
        %v912 = vadd.f32 %v854, %v910
        %v913 = vadd.f32 %v855, %v911
        %s914 = sld [smem:[#allocation3 + $0x51]]
        %v915 = vstv %s914
        %v916 = vmul.f32 %v915, %v899
        %v917 = vmul.f32 %v915, %v900
        %v918 = vadd.f32 %v875, %v916
        %v919 = vadd.f32 %v876, %v917
        %s920 = sld [smem:[#allocation3 + $0x75]]
        %v921 = vstv %s920
        %v922 = vmul.f32 %v921, %v899
        %v923 = vmul.f32 %v921, %v900
        %v924 = vadd.f32 %v896, %v922
        %v925 = vadd.f32 %v897, %v923
        %s926 = sld [smem:[#allocation3 + $0xc]]
        %v927 = vstv %s926
        %v928 = vmul.f32 %v927, %v899
        %v929 = vmul.f32 %v927, %v900
        %v930 = vmul.f32 %v927, %v901
        %v934 = vrot.slane %v928, 1
        %v935 = vrot.slane %v929, 1
        %v936 = vsel %vm320, %v934, %v935
        %v937 = vrot.slane %v930, 1
        %v938 = vsel %vm320, %v935, %v937
        %v941 = vadd.f32 %v906, %v936
        %v942 = vadd.f32 %v907, %v938
        %s943 = sld [smem:[#allocation3 + $0x30]]
        %v944 = vstv %s943
        %v945 = vmul.f32 %v944, %v899
        %v946 = vmul.f32 %v944, %v900
        %v947 = vmul.f32 %v944, %v901
        %v951 = vrot.slane %v945, 1
        %v952 = vrot.slane %v946, 1
        %v953 = vsel %vm320, %v951, %v952
        %v954 = vrot.slane %v947, 1
        %v955 = vsel %vm320, %v952, %v954
        %v958 = vadd.f32 %v912, %v953
        %v959 = vadd.f32 %v913, %v955
        %s960 = sld [smem:[#allocation3 + $0x54]]
        %v961 = vstv %s960
        %v962 = vmul.f32 %v961, %v899
        %v963 = vmul.f32 %v961, %v900
        %v964 = vmul.f32 %v961, %v901
        %v968 = vrot.slane %v962, 1
        %v969 = vrot.slane %v963, 1
        %v970 = vsel %vm320, %v968, %v969
        %v971 = vrot.slane %v964, 1
        %v972 = vsel %vm320, %v969, %v971
        %v975 = vadd.f32 %v918, %v970
        %v976 = vadd.f32 %v919, %v972
        %s977 = sld [smem:[#allocation3 + $0x78]]
        %v978 = vstv %s977
        %v979 = vmul.f32 %v978, %v899
        %v980 = vmul.f32 %v978, %v900
        %v981 = vmul.f32 %v978, %v901
        %v985 = vrot.slane %v979, 1
        %v986 = vrot.slane %v980, 1
        %v987 = vsel %vm320, %v985, %v986
        %v988 = vrot.slane %v981, 1
        %v989 = vsel %vm320, %v986, %v988
        %v992 = vadd.f32 %v924, %v987
        %v993 = vadd.f32 %v925, %v989
        %s994 = sld [smem:[#allocation3 + $0xf]]
        %v995 = vstv %s994
        %v996 = vmul.f32 %v995, %v899
        %v997 = vmul.f32 %v995, %v900
        %v998 = vmul.f32 %v995, %v901
        %v1002 = vrot.slane %v996, 2
        %v1003 = vrot.slane %v997, 2
        %v1004 = vsel %vm389, %v1002, %v1003
        %v1005 = vrot.slane %v998, 2
        %v1006 = vsel %vm389, %v1003, %v1005
        %v1009 = vadd.f32 %v941, %v1004
        %v1010 = vadd.f32 %v942, %v1006
        %s1011 = sld [smem:[#allocation3 + $0x33]]
        %v1012 = vstv %s1011
        %v1013 = vmul.f32 %v1012, %v899
        %v1014 = vmul.f32 %v1012, %v900
        %v1015 = vmul.f32 %v1012, %v901
        %v1019 = vrot.slane %v1013, 2
        %v1020 = vrot.slane %v1014, 2
        %v1021 = vsel %vm389, %v1019, %v1020
        %v1022 = vrot.slane %v1015, 2
        %v1023 = vsel %vm389, %v1020, %v1022
        %v1026 = vadd.f32 %v958, %v1021
        %v1027 = vadd.f32 %v959, %v1023
        %s1028 = sld [smem:[#allocation3 + $0x57]]
        %v1029 = vstv %s1028
        %v1030 = vmul.f32 %v1029, %v899
        %v1031 = vmul.f32 %v1029, %v900
        %v1032 = vmul.f32 %v1029, %v901
        %v1036 = vrot.slane %v1030, 2
        %v1037 = vrot.slane %v1031, 2
        %v1038 = vsel %vm389, %v1036, %v1037
        %v1039 = vrot.slane %v1032, 2
        %v1040 = vsel %vm389, %v1037, %v1039
        %v1043 = vadd.f32 %v975, %v1038
        %v1044 = vadd.f32 %v976, %v1040
        %s1045 = sld [smem:[#allocation3 + $0x7b]]
        %v1046 = vstv %s1045
        %v1047 = vmul.f32 %v1046, %v899
        %v1048 = vmul.f32 %v1046, %v900
        %v1049 = vmul.f32 %v1046, %v901
        %v1053 = vrot.slane %v1047, 2
        %v1054 = vrot.slane %v1048, 2
        %v1055 = vsel %vm389, %v1053, %v1054
        %v1056 = vrot.slane %v1049, 2
        %v1057 = vsel %vm389, %v1054, %v1056
        %v1060 = vadd.f32 %v992, %v1055
        %v1061 = vadd.f32 %v993, %v1057
        %s1062 = sld [smem:[#allocation3 + $0xa]]
        %v1063 = vstv %s1062
        %v1064 = vmul.f32 %v1063, %v899
        %v1065 = vmul.f32 %v1063, %v900
        %1068 = vrot.lane.b32.xlu0 %v1064, 127
        %v1069 = vpop.permute.xlu0 %1068
        %1070 = vrot.lane.b32.xlu0 %v1065, 127
        %v1071 = vpop.permute.xlu0 %1070
        %v1074 = vadd.f32 %v1009, %v1069
        %v1075 = vadd.f32 %v1010, %v1071
        %s1076 = sld [smem:[#allocation3 + $0x2e]]
        %v1077 = vstv %s1076
        %v1078 = vmul.f32 %v1077, %v899
        %v1079 = vmul.f32 %v1077, %v900
        %1082 = vrot.lane.b32.xlu0 %v1078, 127
        %v1083 = vpop.permute.xlu0 %1082
        %1084 = vrot.lane.b32.xlu0 %v1079, 127
        %v1085 = vpop.permute.xlu0 %1084
        %v1088 = vadd.f32 %v1026, %v1083
        %v1089 = vadd.f32 %v1027, %v1085
        %s1090 = sld [smem:[#allocation3 + $0x52]]
        %v1091 = vstv %s1090
        %v1092 = vmul.f32 %v1091, %v899
        %v1093 = vmul.f32 %v1091, %v900
        %1096 = vrot.lane.b32.xlu0 %v1092, 127
        %v1097 = vpop.permute.xlu0 %1096
        %1098 = vrot.lane.b32.xlu0 %v1093, 127
        %v1099 = vpop.permute.xlu0 %1098
        %v1102 = vadd.f32 %v1043, %v1097
        %v1103 = vadd.f32 %v1044, %v1099
        %s1104 = sld [smem:[#allocation3 + $0x76]]
        %v1105 = vstv %s1104
        %v1106 = vmul.f32 %v1105, %v899
        %v1107 = vmul.f32 %v1105, %v900
        %1110 = vrot.lane.b32.xlu0 %v1106, 127
        %v1111 = vpop.permute.xlu0 %1110
        %1112 = vrot.lane.b32.xlu0 %v1107, 127
        %v1113 = vpop.permute.xlu0 %1112
        %v1116 = vadd.f32 %v1060, %v1111
        %v1117 = vadd.f32 %v1061, %v1113
        %s1118 = sld [smem:[#allocation3 + $0xd]]
        %v1119 = vstv %s1118
        %v1120 = vmul.f32 %v1119, %v899
        %v1121 = vmul.f32 %v1119, %v900
        %v1122 = vmul.f32 %v1119, %v901
        %v1126 = vrot.slane %v1120, 1
        %v1127 = vrot.slane %v1121, 1
        %v1128 = vsel %vm320, %v1126, %v1127
        %v1129 = vrot.slane %v1122, 1
        %v1130 = vsel %vm320, %v1127, %v1129
        %1131 = vrot.lane.b32.xlu0 %v1128, 127
        %v1132 = vpop.permute.xlu0 %1131
        %1133 = vrot.lane.b32.xlu0 %v1130, 127
        %v1134 = vpop.permute.xlu0 %1133
        %v1137 = vadd.f32 %v1074, %v1132
        %v1138 = vadd.f32 %v1075, %v1134
        %s1139 = sld [smem:[#allocation3 + $0x31]]
        %v1140 = vstv %s1139
        %v1141 = vmul.f32 %v1140, %v899
        %v1142 = vmul.f32 %v1140, %v900
        %v1143 = vmul.f32 %v1140, %v901
        %v1147 = vrot.slane %v1141, 1
        %v1148 = vrot.slane %v1142, 1
        %v1149 = vsel %vm320, %v1147, %v1148
        %v1150 = vrot.slane %v1143, 1
        %v1151 = vsel %vm320, %v1148, %v1150
        %1152 = vrot.lane.b32.xlu0 %v1149, 127
        %v1153 = vpop.permute.xlu0 %1152
        %1154 = vrot.lane.b32.xlu0 %v1151, 127
        %v1155 = vpop.permute.xlu0 %1154
        %v1158 = vadd.f32 %v1088, %v1153
        %v1159 = vadd.f32 %v1089, %v1155
        %s1160 = sld [smem:[#allocation3 + $0x55]]
        %v1161 = vstv %s1160
        %v1162 = vmul.f32 %v1161, %v899
        %v1163 = vmul.f32 %v1161, %v900
        %v1164 = vmul.f32 %v1161, %v901
        %v1168 = vrot.slane %v1162, 1
        %v1169 = vrot.slane %v1163, 1
        %v1170 = vsel %vm320, %v1168, %v1169
        %v1171 = vrot.slane %v1164, 1
        %v1172 = vsel %vm320, %v1169, %v1171
        %1173 = vrot.lane.b32.xlu0 %v1170, 127
        %v1174 = vpop.permute.xlu0 %1173
        %1175 = vrot.lane.b32.xlu0 %v1172, 127
        %v1176 = vpop.permute.xlu0 %1175
        %v1179 = vadd.f32 %v1102, %v1174
        %v1180 = vadd.f32 %v1103, %v1176
        %s1181 = sld [smem:[#allocation3 + $0x79]]
        %v1182 = vstv %s1181
        %v1183 = vmul.f32 %v1182, %v899
        %v1184 = vmul.f32 %v1182, %v900
        %v1185 = vmul.f32 %v1182, %v901
        %v1189 = vrot.slane %v1183, 1
        %v1190 = vrot.slane %v1184, 1
        %v1191 = vsel %vm320, %v1189, %v1190
        %v1192 = vrot.slane %v1185, 1
        %v1193 = vsel %vm320, %v1190, %v1192
        %1194 = vrot.lane.b32.xlu0 %v1191, 127
        %v1195 = vpop.permute.xlu0 %1194
        %1196 = vrot.lane.b32.xlu0 %v1193, 127
        %v1197 = vpop.permute.xlu0 %1196
        %v1200 = vadd.f32 %v1116, %v1195
        %v1201 = vadd.f32 %v1117, %v1197
        %s1202 = sld [smem:[#allocation3 + $0x10]]
        %v1203 = vstv %s1202
        %v1204 = vmul.f32 %v1203, %v899
        %v1205 = vmul.f32 %v1203, %v900
        %v1206 = vmul.f32 %v1203, %v901
        %v1210 = vrot.slane %v1204, 2
        %v1211 = vrot.slane %v1205, 2
        %v1212 = vsel %vm389, %v1210, %v1211
        %v1213 = vrot.slane %v1206, 2
        %v1214 = vsel %vm389, %v1211, %v1213
        %1215 = vrot.lane.b32.xlu0 %v1212, 127
        %v1216 = vpop.permute.xlu0 %1215
        %1217 = vrot.lane.b32.xlu0 %v1214, 127
        %v1218 = vpop.permute.xlu0 %1217
        %v1221 = vadd.f32 %v1137, %v1216
        %v1222 = vadd.f32 %v1138, %v1218
        %s1223 = sld [smem:[#allocation3 + $0x34]]
        %v1224 = vstv %s1223
        %v1225 = vmul.f32 %v1224, %v899
        %v1226 = vmul.f32 %v1224, %v900
        %v1227 = vmul.f32 %v1224, %v901
        %v1231 = vrot.slane %v1225, 2
        %v1232 = vrot.slane %v1226, 2
        %v1233 = vsel %vm389, %v1231, %v1232
        %v1234 = vrot.slane %v1227, 2
        %v1235 = vsel %vm389, %v1232, %v1234
        %1236 = vrot.lane.b32.xlu0 %v1233, 127
        %v1237 = vpop.permute.xlu0 %1236
        %1238 = vrot.lane.b32.xlu0 %v1235, 127
        %v1239 = vpop.permute.xlu0 %1238
        %v1242 = vadd.f32 %v1158, %v1237
        %v1243 = vadd.f32 %v1159, %v1239
        %s1244 = sld [smem:[#allocation3 + $0x58]]
        %v1245 = vstv %s1244
        %v1246 = vmul.f32 %v1245, %v899
        %v1247 = vmul.f32 %v1245, %v900
        %v1248 = vmul.f32 %v1245, %v901
        %v1252 = vrot.slane %v1246, 2
        %v1253 = vrot.slane %v1247, 2
        %v1254 = vsel %vm389, %v1252, %v1253
        %v1255 = vrot.slane %v1248, 2
        %v1256 = vsel %vm389, %v1253, %v1255
        %1257 = vrot.lane.b32.xlu0 %v1254, 127
        %v1258 = vpop.permute.xlu0 %1257
        %1259 = vrot.lane.b32.xlu0 %v1256, 127
        %v1260 = vpop.permute.xlu0 %1259
        %v1263 = vadd.f32 %v1179, %v1258
        %v1264 = vadd.f32 %v1180, %v1260
        %s1265 = sld [smem:[#allocation3 + $0x7c]]
        %v1266 = vstv %s1265
        %v1267 = vmul.f32 %v1266, %v899
        %v1268 = vmul.f32 %v1266, %v900
        %v1269 = vmul.f32 %v1266, %v901
        %v1273 = vrot.slane %v1267, 2
        %v1274 = vrot.slane %v1268, 2
        %v1275 = vsel %vm389, %v1273, %v1274
        %v1276 = vrot.slane %v1269, 2
        %v1277 = vsel %vm389, %v1274, %v1276
        %1278 = vrot.lane.b32.xlu0 %v1275, 127
        %v1279 = vpop.permute.xlu0 %1278
        %1280 = vrot.lane.b32.xlu0 %v1277, 127
        %v1281 = vpop.permute.xlu0 %1280
        %v1284 = vadd.f32 %v1200, %v1279
        %v1285 = vadd.f32 %v1201, %v1281
        %s1286 = sld [smem:[#allocation3 + $0xb]]
        %v1287 = vstv %s1286
        %v1288 = vmul.f32 %v1287, %v899
        %v1289 = vmul.f32 %v1287, %v900
        %1292 = vrot.lane.b32.xlu0 %v1288, 126
        %v1293 = vpop.permute.xlu0 %1292
        %1294 = vrot.lane.b32.xlu0 %v1289, 126
        %v1295 = vpop.permute.xlu0 %1294
        %v1298 = vadd.f32 %v1221, %v1293
        %v1299 = vadd.f32 %v1222, %v1295
        %s1300 = sld [smem:[#allocation3 + $0x2f]]
        %v1301 = vstv %s1300
        %v1302 = vmul.f32 %v1301, %v899
        %v1303 = vmul.f32 %v1301, %v900
        %1306 = vrot.lane.b32.xlu0 %v1302, 126
        %v1307 = vpop.permute.xlu0 %1306
        %1308 = vrot.lane.b32.xlu0 %v1303, 126
        %v1309 = vpop.permute.xlu0 %1308
        %v1312 = vadd.f32 %v1242, %v1307
        %v1313 = vadd.f32 %v1243, %v1309
        %s1314 = sld [smem:[#allocation3 + $0x53]]
        %v1315 = vstv %s1314
        %v1316 = vmul.f32 %v1315, %v899
        %v1317 = vmul.f32 %v1315, %v900
        %1320 = vrot.lane.b32.xlu0 %v1316, 126
        %v1321 = vpop.permute.xlu0 %1320
        %1322 = vrot.lane.b32.xlu0 %v1317, 126
        %v1323 = vpop.permute.xlu0 %1322
        %v1326 = vadd.f32 %v1263, %v1321
        %v1327 = vadd.f32 %v1264, %v1323
        %s1328 = sld [smem:[#allocation3 + $0x77]]
        %v1329 = vstv %s1328
        %v1330 = vmul.f32 %v1329, %v899
        %v1331 = vmul.f32 %v1329, %v900
        %1334 = vrot.lane.b32.xlu0 %v1330, 126
        %v1335 = vpop.permute.xlu0 %1334
        %1336 = vrot.lane.b32.xlu0 %v1331, 126
        %v1337 = vpop.permute.xlu0 %1336
        %v1340 = vadd.f32 %v1284, %v1335
        %v1341 = vadd.f32 %v1285, %v1337
        %s1342 = sld [smem:[#allocation3 + $0xe]]
        %v1343 = vstv %s1342
        %v1344 = vmul.f32 %v1343, %v899
        %v1345 = vmul.f32 %v1343, %v900
        %v1346 = vmul.f32 %v1343, %v901
        %v1350 = vrot.slane %v1344, 1
        %v1351 = vrot.slane %v1345, 1
        %v1352 = vsel %vm320, %v1350, %v1351
        %v1353 = vrot.slane %v1346, 1
        %v1354 = vsel %vm320, %v1351, %v1353
        %1355 = vrot.lane.b32.xlu0 %v1352, 126
        %v1356 = vpop.permute.xlu0 %1355
        %1357 = vrot.lane.b32.xlu0 %v1354, 126
        %v1358 = vpop.permute.xlu0 %1357
        %v1361 = vadd.f32 %v1298, %v1356
        %v1362 = vadd.f32 %v1299, %v1358
        %s1363 = sld [smem:[#allocation3 + $0x32]]
        %v1364 = vstv %s1363
        %v1365 = vmul.f32 %v1364, %v899
        %v1366 = vmul.f32 %v1364, %v900
        %v1367 = vmul.f32 %v1364, %v901
        %v1371 = vrot.slane %v1365, 1
        %v1372 = vrot.slane %v1366, 1
        %v1373 = vsel %vm320, %v1371, %v1372
        %v1374 = vrot.slane %v1367, 1
        %v1375 = vsel %vm320, %v1372, %v1374
        %1376 = vrot.lane.b32.xlu0 %v1373, 126
        %v1377 = vpop.permute.xlu0 %1376
        %1378 = vrot.lane.b32.xlu0 %v1375, 126
        %v1379 = vpop.permute.xlu0 %1378
        %v1382 = vadd.f32 %v1312, %v1377
        %v1383 = vadd.f32 %v1313, %v1379
        %s1384 = sld [smem:[#allocation3 + $0x56]]
        %v1385 = vstv %s1384
        %v1386 = vmul.f32 %v1385, %v899
        %v1387 = vmul.f32 %v1385, %v900
        %v1388 = vmul.f32 %v1385, %v901
        %v1392 = vrot.slane %v1386, 1
        %v1393 = vrot.slane %v1387, 1
        %v1394 = vsel %vm320, %v1392, %v1393
        %v1395 = vrot.slane %v1388, 1
        %v1396 = vsel %vm320, %v1393, %v1395
        %1397 = vrot.lane.b32.xlu0 %v1394, 126
        %v1398 = vpop.permute.xlu0 %1397
        %1399 = vrot.lane.b32.xlu0 %v1396, 126
        %v1400 = vpop.permute.xlu0 %1399
        %v1403 = vadd.f32 %v1326, %v1398
        %v1404 = vadd.f32 %v1327, %v1400
        %s1405 = sld [smem:[#allocation3 + $0x7a]]
        %v1406 = vstv %s1405
        %v1407 = vmul.f32 %v1406, %v899
        %v1408 = vmul.f32 %v1406, %v900
        %v1409 = vmul.f32 %v1406, %v901
        %v1413 = vrot.slane %v1407, 1
        %v1414 = vrot.slane %v1408, 1
        %v1415 = vsel %vm320, %v1413, %v1414
        %v1416 = vrot.slane %v1409, 1
        %v1417 = vsel %vm320, %v1414, %v1416
        %1418 = vrot.lane.b32.xlu0 %v1415, 126
        %v1419 = vpop.permute.xlu0 %1418
        %1420 = vrot.lane.b32.xlu0 %v1417, 126
        %v1421 = vpop.permute.xlu0 %1420
        %v1424 = vadd.f32 %v1340, %v1419
        %v1425 = vadd.f32 %v1341, %v1421
        %s1426 = sld [smem:[#allocation3 + $0x11]]
        %v1427 = vstv %s1426
        %v1428 = vmul.f32 %v1427, %v899
        %v1429 = vmul.f32 %v1427, %v900
        %v1430 = vmul.f32 %v1427, %v901
        %v1434 = vrot.slane %v1428, 2
        %v1435 = vrot.slane %v1429, 2
        %v1436 = vsel %vm389, %v1434, %v1435
        %v1437 = vrot.slane %v1430, 2
        %v1438 = vsel %vm389, %v1435, %v1437
        %1439 = vrot.lane.b32.xlu0 %v1436, 126
        %v1440 = vpop.permute.xlu0 %1439
        %1441 = vrot.lane.b32.xlu0 %v1438, 126
        %v1442 = vpop.permute.xlu0 %1441
        %v1445 = vadd.f32 %v1361, %v1440
        %v1446 = vadd.f32 %v1362, %v1442
        %s1447 = sld [smem:[#allocation3 + $0x35]]
        %v1448 = vstv %s1447
        %v1449 = vmul.f32 %v1448, %v899
        %v1450 = vmul.f32 %v1448, %v900
        %v1451 = vmul.f32 %v1448, %v901
        %v1455 = vrot.slane %v1449, 2
        %v1456 = vrot.slane %v1450, 2
        %v1457 = vsel %vm389, %v1455, %v1456
        %v1458 = vrot.slane %v1451, 2
        %v1459 = vsel %vm389, %v1456, %v1458
        %1460 = vrot.lane.b32.xlu0 %v1457, 126
        %v1461 = vpop.permute.xlu0 %1460
        %1462 = vrot.lane.b32.xlu0 %v1459, 126
        %v1463 = vpop.permute.xlu0 %1462
        %v1466 = vadd.f32 %v1382, %v1461
        %v1467 = vadd.f32 %v1383, %v1463
        %s1468 = sld [smem:[#allocation3 + $0x59]]
        %v1469 = vstv %s1468
        %v1470 = vmul.f32 %v1469, %v899
        %v1471 = vmul.f32 %v1469, %v900
        %v1472 = vmul.f32 %v1469, %v901
        %v1476 = vrot.slane %v1470, 2
        %v1477 = vrot.slane %v1471, 2
        %v1478 = vsel %vm389, %v1476, %v1477
        %v1479 = vrot.slane %v1472, 2
        %v1480 = vsel %vm389, %v1477, %v1479
        %1481 = vrot.lane.b32.xlu0 %v1478, 126
        %v1482 = vpop.permute.xlu0 %1481
        %1483 = vrot.lane.b32.xlu0 %v1480, 126
        %v1484 = vpop.permute.xlu0 %1483
        %v1487 = vadd.f32 %v1403, %v1482
        %v1488 = vadd.f32 %v1404, %v1484
        %s1489 = sld [smem:[#allocation3 + $0x7d]]
        %v1490 = vstv %s1489
        %v1491 = vmul.f32 %v1490, %v899
        %v1492 = vmul.f32 %v1490, %v900
        %v1493 = vmul.f32 %v1490, %v901
        %v1497 = vrot.slane %v1491, 2
        %v1498 = vrot.slane %v1492, 2
        %v1499 = vsel %vm389, %v1497, %v1498
        %v1500 = vrot.slane %v1493, 2
        %v1501 = vsel %vm389, %v1498, %v1500
        %1502 = vrot.lane.b32.xlu0 %v1499, 126
        %v1503 = vpop.permute.xlu0 %1502
        %1504 = vrot.lane.b32.xlu0 %v1501, 126
        %v1505 = vpop.permute.xlu0 %1504
        %v1508 = vadd.f32 %v1424, %v1503
        %v1509 = vadd.f32 %v1425, %v1505
        %s1510 = scalar_lea.vmem [#allocation2], 48
        %v1511 = vld [vmem:[%s1510] sm:$0xff]
        %v1512 = vld [vmem:[%s1510 + $0x8] sm:$0xff]
        %v1513 = vld [vmem:[%s1510 + $0x10] sm:$0x3]
        %s1514 = sld [smem:[#allocation3 + $0x12]]
        %v1515 = vstv %s1514
        %v1516 = vmul.f32 %v1515, %v1511
        %v1517 = vmul.f32 %v1515, %v1512
        %v1518 = vadd.f32 %v1445, %v1516
        %v1519 = vadd.f32 %v1446, %v1517
        %s1520 = sld [smem:[#allocation3 + $0x36]]
        %v1521 = vstv %s1520
        %v1522 = vmul.f32 %v1521, %v1511
        %v1523 = vmul.f32 %v1521, %v1512
        %v1524 = vadd.f32 %v1466, %v1522
        %v1525 = vadd.f32 %v1467, %v1523
        %s1526 = sld [smem:[#allocation3 + $0x5a]]
        %v1527 = vstv %s1526
        %v1528 = vmul.f32 %v1527, %v1511
        %v1529 = vmul.f32 %v1527, %v1512
        %v1530 = vadd.f32 %v1487, %v1528
        %v1531 = vadd.f32 %v1488, %v1529
        %s1532 = sld [smem:[#allocation3 + $0x7e]]
        %v1533 = vstv %s1532
        %v1534 = vmul.f32 %v1533, %v1511
        %v1535 = vmul.f32 %v1533, %v1512
        %v1536 = vadd.f32 %v1508, %v1534
        %v1537 = vadd.f32 %v1509, %v1535
        %s1538 = sld [smem:[#allocation3 + $0x15]]
        %v1539 = vstv %s1538
        %v1540 = vmul.f32 %v1539, %v1511
        %v1541 = vmul.f32 %v1539, %v1512
        %v1542 = vmul.f32 %v1539, %v1513
        %v1546 = vrot.slane %v1540, 1
        %v1547 = vrot.slane %v1541, 1
        %v1548 = vsel %vm320, %v1546, %v1547
        %v1549 = vrot.slane %v1542, 1
        %v1550 = vsel %vm320, %v1547, %v1549
        %v1553 = vadd.f32 %v1518, %v1548
        %v1554 = vadd.f32 %v1519, %v1550
        %s1555 = sld [smem:[#allocation3 + $0x39]]
        %v1556 = vstv %s1555
        %v1557 = vmul.f32 %v1556, %v1511
        %v1558 = vmul.f32 %v1556, %v1512
        %v1559 = vmul.f32 %v1556, %v1513
        %v1563 = vrot.slane %v1557, 1
        %v1564 = vrot.slane %v1558, 1
        %v1565 = vsel %vm320, %v1563, %v1564
        %v1566 = vrot.slane %v1559, 1
        %v1567 = vsel %vm320, %v1564, %v1566
        %v1570 = vadd.f32 %v1524, %v1565
        %v1571 = vadd.f32 %v1525, %v1567
        %s1572 = sld [smem:[#allocation3 + $0x5d]]
        %v1573 = vstv %s1572
        %v1574 = vmul.f32 %v1573, %v1511
        %v1575 = vmul.f32 %v1573, %v1512
        %v1576 = vmul.f32 %v1573, %v1513
        %v1580 = vrot.slane %v1574, 1
        %v1581 = vrot.slane %v1575, 1
        %v1582 = vsel %vm320, %v1580, %v1581
        %v1583 = vrot.slane %v1576, 1
        %v1584 = vsel %vm320, %v1581, %v1583
        %v1587 = vadd.f32 %v1530, %v1582
        %v1588 = vadd.f32 %v1531, %v1584
        %s1589 = sld [smem:[#allocation3 + $0x81]]
        %v1590 = vstv %s1589
        %v1591 = vmul.f32 %v1590, %v1511
        %v1592 = vmul.f32 %v1590, %v1512
        %v1593 = vmul.f32 %v1590, %v1513
        %v1597 = vrot.slane %v1591, 1
        %v1598 = vrot.slane %v1592, 1
        %v1599 = vsel %vm320, %v1597, %v1598
        %v1600 = vrot.slane %v1593, 1
        %v1601 = vsel %vm320, %v1598, %v1600
        %v1604 = vadd.f32 %v1536, %v1599
        %v1605 = vadd.f32 %v1537, %v1601
        %s1606 = sld [smem:[#allocation3 + $0x18]]
        %v1607 = vstv %s1606
        %v1608 = vmul.f32 %v1607, %v1511
        %v1609 = vmul.f32 %v1607, %v1512
        %v1610 = vmul.f32 %v1607, %v1513
        %v1614 = vrot.slane %v1608, 2
        %v1615 = vrot.slane %v1609, 2
        %v1616 = vsel %vm389, %v1614, %v1615
        %v1617 = vrot.slane %v1610, 2
        %v1618 = vsel %vm389, %v1615, %v1617
        %v1621 = vadd.f32 %v1553, %v1616
        %v1622 = vadd.f32 %v1554, %v1618
        %s1623 = sld [smem:[#allocation3 + $0x3c]]
        %v1624 = vstv %s1623
        %v1625 = vmul.f32 %v1624, %v1511
        %v1626 = vmul.f32 %v1624, %v1512
        %v1627 = vmul.f32 %v1624, %v1513
        %v1631 = vrot.slane %v1625, 2
        %v1632 = vrot.slane %v1626, 2
        %v1633 = vsel %vm389, %v1631, %v1632
        %v1634 = vrot.slane %v1627, 2
        %v1635 = vsel %vm389, %v1632, %v1634
        %v1638 = vadd.f32 %v1570, %v1633
        %v1639 = vadd.f32 %v1571, %v1635
        %s1640 = sld [smem:[#allocation3 + $0x60]]
        %v1641 = vstv %s1640
        %v1642 = vmul.f32 %v1641, %v1511
        %v1643 = vmul.f32 %v1641, %v1512
        %v1644 = vmul.f32 %v1641, %v1513
        %v1648 = vrot.slane %v1642, 2
        %v1649 = vrot.slane %v1643, 2
        %v1650 = vsel %vm389, %v1648, %v1649
        %v1651 = vrot.slane %v1644, 2
        %v1652 = vsel %vm389, %v1649, %v1651
        %v1655 = vadd.f32 %v1587, %v1650
        %v1656 = vadd.f32 %v1588, %v1652
        %s1657 = sld [smem:[#allocation3 + $0x84]]
        %v1658 = vstv %s1657
        %v1659 = vmul.f32 %v1658, %v1511
        %v1660 = vmul.f32 %v1658, %v1512
        %v1661 = vmul.f32 %v1658, %v1513
        %v1665 = vrot.slane %v1659, 2
        %v1666 = vrot.slane %v1660, 2
        %v1667 = vsel %vm389, %v1665, %v1666
        %v1668 = vrot.slane %v1661, 2
        %v1669 = vsel %vm389, %v1666, %v1668
        %v1672 = vadd.f32 %v1604, %v1667
        %v1673 = vadd.f32 %v1605, %v1669
        %s1674 = sld [smem:[#allocation3 + $0x13]]
        %v1675 = vstv %s1674
        %v1676 = vmul.f32 %v1675, %v1511
        %v1677 = vmul.f32 %v1675, %v1512
        %1680 = vrot.lane.b32.xlu0 %v1676, 127
        %v1681 = vpop.permute.xlu0 %1680
        %1682 = vrot.lane.b32.xlu0 %v1677, 127
        %v1683 = vpop.permute.xlu0 %1682
        %v1686 = vadd.f32 %v1621, %v1681
        %v1687 = vadd.f32 %v1622, %v1683
        %s1688 = sld [smem:[#allocation3 + $0x37]]
        %v1689 = vstv %s1688
        %v1690 = vmul.f32 %v1689, %v1511
        %v1691 = vmul.f32 %v1689, %v1512
        %1694 = vrot.lane.b32.xlu0 %v1690, 127
        %v1695 = vpop.permute.xlu0 %1694
        %1696 = vrot.lane.b32.xlu0 %v1691, 127
        %v1697 = vpop.permute.xlu0 %1696
        %v1700 = vadd.f32 %v1638, %v1695
        %v1701 = vadd.f32 %v1639, %v1697
        %s1702 = sld [smem:[#allocation3 + $0x5b]]
        %v1703 = vstv %s1702
        %v1704 = vmul.f32 %v1703, %v1511
        %v1705 = vmul.f32 %v1703, %v1512
        %1708 = vrot.lane.b32.xlu0 %v1704, 127
        %v1709 = vpop.permute.xlu0 %1708
        %1710 = vrot.lane.b32.xlu0 %v1705, 127
        %v1711 = vpop.permute.xlu0 %1710
        %v1714 = vadd.f32 %v1655, %v1709
        %v1715 = vadd.f32 %v1656, %v1711
        %s1716 = sld [smem:[#allocation3 + $0x7f]]
        %v1717 = vstv %s1716
        %v1718 = vmul.f32 %v1717, %v1511
        %v1719 = vmul.f32 %v1717, %v1512
        %1722 = vrot.lane.b32.xlu0 %v1718, 127
        %v1723 = vpop.permute.xlu0 %1722
        %1724 = vrot.lane.b32.xlu0 %v1719, 127
        %v1725 = vpop.permute.xlu0 %1724
        %v1728 = vadd.f32 %v1672, %v1723
        %v1729 = vadd.f32 %v1673, %v1725
        %s1730 = sld [smem:[#allocation3 + $0x16]]
        %v1731 = vstv %s1730
        %v1732 = vmul.f32 %v1731, %v1511
        %v1733 = vmul.f32 %v1731, %v1512
        %v1734 = vmul.f32 %v1731, %v1513
        %v1738 = vrot.slane %v1732, 1
        %v1739 = vrot.slane %v1733, 1
        %v1740 = vsel %vm320, %v1738, %v1739
        %v1741 = vrot.slane %v1734, 1
        %v1742 = vsel %vm320, %v1739, %v1741
        %1743 = vrot.lane.b32.xlu0 %v1740, 127
        %v1744 = vpop.permute.xlu0 %1743
        %1745 = vrot.lane.b32.xlu0 %v1742, 127
        %v1746 = vpop.permute.xlu0 %1745
        %v1749 = vadd.f32 %v1686, %v1744
        %v1750 = vadd.f32 %v1687, %v1746
        %s1751 = sld [smem:[#allocation3 + $0x3a]]
        %v1752 = vstv %s1751
        %v1753 = vmul.f32 %v1752, %v1511
        %v1754 = vmul.f32 %v1752, %v1512
        %v1755 = vmul.f32 %v1752, %v1513
        %v1759 = vrot.slane %v1753, 1
        %v1760 = vrot.slane %v1754, 1
        %v1761 = vsel %vm320, %v1759, %v1760
        %v1762 = vrot.slane %v1755, 1
        %v1763 = vsel %vm320, %v1760, %v1762
        %1764 = vrot.lane.b32.xlu0 %v1761, 127
        %v1765 = vpop.permute.xlu0 %1764
        %1766 = vrot.lane.b32.xlu0 %v1763, 127
        %v1767 = vpop.permute.xlu0 %1766
        %v1770 = vadd.f32 %v1700, %v1765
        %v1771 = vadd.f32 %v1701, %v1767
        %s1772 = sld [smem:[#allocation3 + $0x5e]]
        %v1773 = vstv %s1772
        %v1774 = vmul.f32 %v1773, %v1511
        %v1775 = vmul.f32 %v1773, %v1512
        %v1776 = vmul.f32 %v1773, %v1513
        %v1780 = vrot.slane %v1774, 1
        %v1781 = vrot.slane %v1775, 1
        %v1782 = vsel %vm320, %v1780, %v1781
        %v1783 = vrot.slane %v1776, 1
        %v1784 = vsel %vm320, %v1781, %v1783
        %1785 = vrot.lane.b32.xlu0 %v1782, 127
        %v1786 = vpop.permute.xlu0 %1785
        %1787 = vrot.lane.b32.xlu0 %v1784, 127
        %v1788 = vpop.permute.xlu0 %1787
        %v1791 = vadd.f32 %v1714, %v1786
        %v1792 = vadd.f32 %v1715, %v1788
        %s1793 = sld [smem:[#allocation3 + $0x82]]
        %v1794 = vstv %s1793
        %v1795 = vmul.f32 %v1794, %v1511
        %v1796 = vmul.f32 %v1794, %v1512
        %v1797 = vmul.f32 %v1794, %v1513
        %v1801 = vrot.slane %v1795, 1
        %v1802 = vrot.slane %v1796, 1
        %v1803 = vsel %vm320, %v1801, %v1802
        %v1804 = vrot.slane %v1797, 1
        %v1805 = vsel %vm320, %v1802, %v1804
        %1806 = vrot.lane.b32.xlu0 %v1803, 127
        %v1807 = vpop.permute.xlu0 %1806
        %1808 = vrot.lane.b32.xlu0 %v1805, 127
        %v1809 = vpop.permute.xlu0 %1808
        %v1812 = vadd.f32 %v1728, %v1807
        %v1813 = vadd.f32 %v1729, %v1809
        %s1814 = sld [smem:[#allocation3 + $0x19]]
        %v1815 = vstv %s1814
        %v1816 = vmul.f32 %v1815, %v1511
        %v1817 = vmul.f32 %v1815, %v1512
        %v1818 = vmul.f32 %v1815, %v1513
        %v1822 = vrot.slane %v1816, 2
        %v1823 = vrot.slane %v1817, 2
        %v1824 = vsel %vm389, %v1822, %v1823
        %v1825 = vrot.slane %v1818, 2
        %v1826 = vsel %vm389, %v1823, %v1825
        %1827 = vrot.lane.b32.xlu0 %v1824, 127
        %v1828 = vpop.permute.xlu0 %1827
        %1829 = vrot.lane.b32.xlu0 %v1826, 127
        %v1830 = vpop.permute.xlu0 %1829
        %v1833 = vadd.f32 %v1749, %v1828
        %v1834 = vadd.f32 %v1750, %v1830
        %s1835 = sld [smem:[#allocation3 + $0x3d]]
        %v1836 = vstv %s1835
        %v1837 = vmul.f32 %v1836, %v1511
        %v1838 = vmul.f32 %v1836, %v1512
        %v1839 = vmul.f32 %v1836, %v1513
        %v1843 = vrot.slane %v1837, 2
        %v1844 = vrot.slane %v1838, 2
        %v1845 = vsel %vm389, %v1843, %v1844
        %v1846 = vrot.slane %v1839, 2
        %v1847 = vsel %vm389, %v1844, %v1846
        %1848 = vrot.lane.b32.xlu0 %v1845, 127
        %v1849 = vpop.permute.xlu0 %1848
        %1850 = vrot.lane.b32.xlu0 %v1847, 127
        %v1851 = vpop.permute.xlu0 %1850
        %v1854 = vadd.f32 %v1770, %v1849
        %v1855 = vadd.f32 %v1771, %v1851
        %s1856 = sld [smem:[#allocation3 + $0x61]]
        %v1857 = vstv %s1856
        %v1858 = vmul.f32 %v1857, %v1511
        %v1859 = vmul.f32 %v1857, %v1512
        %v1860 = vmul.f32 %v1857, %v1513
        %v1864 = vrot.slane %v1858, 2
        %v1865 = vrot.slane %v1859, 2
        %v1866 = vsel %vm389, %v1864, %v1865
        %v1867 = vrot.slane %v1860, 2
        %v1868 = vsel %vm389, %v1865, %v1867
        %1869 = vrot.lane.b32.xlu0 %v1866, 127
        %v1870 = vpop.permute.xlu0 %1869
        %1871 = vrot.lane.b32.xlu0 %v1868, 127
        %v1872 = vpop.permute.xlu0 %1871
        %v1875 = vadd.f32 %v1791, %v1870
        %v1876 = vadd.f32 %v1792, %v1872
        %s1877 = sld [smem:[#allocation3 + $0x85]]
        %v1878 = vstv %s1877
        %v1879 = vmul.f32 %v1878, %v1511
        %v1880 = vmul.f32 %v1878, %v1512
        %v1881 = vmul.f32 %v1878, %v1513
        %v1885 = vrot.slane %v1879, 2
        %v1886 = vrot.slane %v1880, 2
        %v1887 = vsel %vm389, %v1885, %v1886
        %v1888 = vrot.slane %v1881, 2
        %v1889 = vsel %vm389, %v1886, %v1888
        %1890 = vrot.lane.b32.xlu0 %v1887, 127
        %v1891 = vpop.permute.xlu0 %1890
        %1892 = vrot.lane.b32.xlu0 %v1889, 127
        %v1893 = vpop.permute.xlu0 %1892
        %v1896 = vadd.f32 %v1812, %v1891
        %v1897 = vadd.f32 %v1813, %v1893
        %s1898 = sld [smem:[#allocation3 + $0x14]]
        %v1899 = vstv %s1898
        %v1900 = vmul.f32 %v1899, %v1511
        %v1901 = vmul.f32 %v1899, %v1512
        %1904 = vrot.lane.b32.xlu0 %v1900, 126
        %v1905 = vpop.permute.xlu0 %1904
        %1906 = vrot.lane.b32.xlu0 %v1901, 126
        %v1907 = vpop.permute.xlu0 %1906
        %v1910 = vadd.f32 %v1833, %v1905
        %v1911 = vadd.f32 %v1834, %v1907
        %s1912 = sld [smem:[#allocation3 + $0x38]]
        %v1913 = vstv %s1912
        %v1914 = vmul.f32 %v1913, %v1511
        %v1915 = vmul.f32 %v1913, %v1512
        %1918 = vrot.lane.b32.xlu0 %v1914, 126
        %v1919 = vpop.permute.xlu0 %1918
        %1920 = vrot.lane.b32.xlu0 %v1915, 126
        %v1921 = vpop.permute.xlu0 %1920
        %v1924 = vadd.f32 %v1854, %v1919
        %v1925 = vadd.f32 %v1855, %v1921
        %s1926 = sld [smem:[#allocation3 + $0x5c]]
        %v1927 = vstv %s1926
        %v1928 = vmul.f32 %v1927, %v1511
        %v1929 = vmul.f32 %v1927, %v1512
        %1932 = vrot.lane.b32.xlu0 %v1928, 126
        %v1933 = vpop.permute.xlu0 %1932
        %1934 = vrot.lane.b32.xlu0 %v1929, 126
        %v1935 = vpop.permute.xlu0 %1934
        %v1938 = vadd.f32 %v1875, %v1933
        %v1939 = vadd.f32 %v1876, %v1935
        %s1940 = sld [smem:[#allocation3 + $0x80]]
        %v1941 = vstv %s1940
        %v1942 = vmul.f32 %v1941, %v1511
        %v1943 = vmul.f32 %v1941, %v1512
        %1946 = vrot.lane.b32.xlu0 %v1942, 126
        %v1947 = vpop.permute.xlu0 %1946
        %1948 = vrot.lane.b32.xlu0 %v1943, 126
        %v1949 = vpop.permute.xlu0 %1948
        %v1952 = vadd.f32 %v1896, %v1947
        %v1953 = vadd.f32 %v1897, %v1949
        %s1954 = sld [smem:[#allocation3 + $0x17]]
        %v1955 = vstv %s1954
        %v1956 = vmul.f32 %v1955, %v1511
        %v1957 = vmul.f32 %v1955, %v1512
        %v1958 = vmul.f32 %v1955, %v1513
        %v1962 = vrot.slane %v1956, 1
        %v1963 = vrot.slane %v1957, 1
        %v1964 = vsel %vm320, %v1962, %v1963
        %v1965 = vrot.slane %v1958, 1
        %v1966 = vsel %vm320, %v1963, %v1965
        %1967 = vrot.lane.b32.xlu0 %v1964, 126
        %v1968 = vpop.permute.xlu0 %1967
        %1969 = vrot.lane.b32.xlu0 %v1966, 126
        %v1970 = vpop.permute.xlu0 %1969
        %v1973 = vadd.f32 %v1910, %v1968
        %v1974 = vadd.f32 %v1911, %v1970
        %s1975 = sld [smem:[#allocation3 + $0x3b]]
        %v1976 = vstv %s1975
        %v1977 = vmul.f32 %v1976, %v1511
        %v1978 = vmul.f32 %v1976, %v1512
        %v1979 = vmul.f32 %v1976, %v1513
        %v1983 = vrot.slane %v1977, 1
        %v1984 = vrot.slane %v1978, 1
        %v1985 = vsel %vm320, %v1983, %v1984
        %v1986 = vrot.slane %v1979, 1
        %v1987 = vsel %vm320, %v1984, %v1986
        %1988 = vrot.lane.b32.xlu0 %v1985, 126
        %v1989 = vpop.permute.xlu0 %1988
        %1990 = vrot.lane.b32.xlu0 %v1987, 126
        %v1991 = vpop.permute.xlu0 %1990
        %v1994 = vadd.f32 %v1924, %v1989
        %v1995 = vadd.f32 %v1925, %v1991
        %s1996 = sld [smem:[#allocation3 + $0x5f]]
        %v1997 = vstv %s1996
        %v1998 = vmul.f32 %v1997, %v1511
        %v1999 = vmul.f32 %v1997, %v1512
        %v2000 = vmul.f32 %v1997, %v1513
        %v2004 = vrot.slane %v1998, 1
        %v2005 = vrot.slane %v1999, 1
        %v2006 = vsel %vm320, %v2004, %v2005
        %v2007 = vrot.slane %v2000, 1
        %v2008 = vsel %vm320, %v2005, %v2007
        %2009 = vrot.lane.b32.xlu0 %v2006, 126
        %v2010 = vpop.permute.xlu0 %2009
        %2011 = vrot.lane.b32.xlu0 %v2008, 126
        %v2012 = vpop.permute.xlu0 %2011
        %v2015 = vadd.f32 %v1938, %v2010
        %v2016 = vadd.f32 %v1939, %v2012
        %s2017 = sld [smem:[#allocation3 + $0x83]]
        %v2018 = vstv %s2017
        %v2019 = vmul.f32 %v2018, %v1511
        %v2020 = vmul.f32 %v2018, %v1512
        %v2021 = vmul.f32 %v2018, %v1513
        %v2025 = vrot.slane %v2019, 1
        %v2026 = vrot.slane %v2020, 1
        %v2027 = vsel %vm320, %v2025, %v2026
        %v2028 = vrot.slane %v2021, 1
        %v2029 = vsel %vm320, %v2026, %v2028
        %2030 = vrot.lane.b32.xlu0 %v2027, 126
        %v2031 = vpop.permute.xlu0 %2030
        %2032 = vrot.lane.b32.xlu0 %v2029, 126
        %v2033 = vpop.permute.xlu0 %2032
        %v2036 = vadd.f32 %v1952, %v2031
        %v2037 = vadd.f32 %v1953, %v2033
        %s2038 = sld [smem:[#allocation3 + $0x1a]]
        %v2039 = vstv %s2038
        %v2040 = vmul.f32 %v2039, %v1511
        %v2041 = vmul.f32 %v2039, %v1512
        %v2042 = vmul.f32 %v2039, %v1513
        %v2046 = vrot.slane %v2040, 2
        %v2047 = vrot.slane %v2041, 2
        %v2048 = vsel %vm389, %v2046, %v2047
        %v2049 = vrot.slane %v2042, 2
        %v2050 = vsel %vm389, %v2047, %v2049
        %2051 = vrot.lane.b32.xlu0 %v2048, 126
        %v2052 = vpop.permute.xlu0 %2051
        %2053 = vrot.lane.b32.xlu0 %v2050, 126
        %v2054 = vpop.permute.xlu0 %2053
        %v2057 = vadd.f32 %v1973, %v2052
        %v2058 = vadd.f32 %v1974, %v2054
        %s2059 = sld [smem:[#allocation3 + $0x3e]]
        %v2060 = vstv %s2059
        %v2061 = vmul.f32 %v2060, %v1511
        %v2062 = vmul.f32 %v2060, %v1512
        %v2063 = vmul.f32 %v2060, %v1513
        %v2067 = vrot.slane %v2061, 2
        %v2068 = vrot.slane %v2062, 2
        %v2069 = vsel %vm389, %v2067, %v2068
        %v2070 = vrot.slane %v2063, 2
        %v2071 = vsel %vm389, %v2068, %v2070
        %2072 = vrot.lane.b32.xlu0 %v2069, 126
        %v2073 = vpop.permute.xlu0 %2072
        %2074 = vrot.lane.b32.xlu0 %v2071, 126
        %v2075 = vpop.permute.xlu0 %2074
        %v2078 = vadd.f32 %v1994, %v2073
        %v2079 = vadd.f32 %v1995, %v2075
        %s2080 = sld [smem:[#allocation3 + $0x62]]
        %v2081 = vstv %s2080
        %v2082 = vmul.f32 %v2081, %v1511
        %v2083 = vmul.f32 %v2081, %v1512
        %v2084 = vmul.f32 %v2081, %v1513
        %v2088 = vrot.slane %v2082, 2
        %v2089 = vrot.slane %v2083, 2
        %v2090 = vsel %vm389, %v2088, %v2089
        %v2091 = vrot.slane %v2084, 2
        %v2092 = vsel %vm389, %v2089, %v2091
        %2093 = vrot.lane.b32.xlu0 %v2090, 126
        %v2094 = vpop.permute.xlu0 %2093
        %2095 = vrot.lane.b32.xlu0 %v2092, 126
        %v2096 = vpop.permute.xlu0 %2095
        %v2099 = vadd.f32 %v2015, %v2094
        %v2100 = vadd.f32 %v2016, %v2096
        %s2101 = sld [smem:[#allocation3 + $0x86]]
        %v2102 = vstv %s2101
        %v2103 = vmul.f32 %v2102, %v1511
        %v2104 = vmul.f32 %v2102, %v1512
        %v2105 = vmul.f32 %v2102, %v1513
        %v2109 = vrot.slane %v2103, 2
        %v2110 = vrot.slane %v2104, 2
        %v2111 = vsel %vm389, %v2109, %v2110
        %v2112 = vrot.slane %v2105, 2
        %v2113 = vsel %vm389, %v2110, %v2112
        %2114 = vrot.lane.b32.xlu0 %v2111, 126
        %v2115 = vpop.permute.xlu0 %2114
        %2116 = vrot.lane.b32.xlu0 %v2113, 126
        %v2117 = vpop.permute.xlu0 %2116
        %v2120 = vadd.f32 %v2036, %v2115
        %v2121 = vadd.f32 %v2037, %v2117
        %s2122 = scalar_lea.vmem [#allocation2], 72
        %v2123 = vld [vmem:[%s2122] sm:$0xff]
        %v2124 = vld [vmem:[%s2122 + $0x8] sm:$0xff]
        %v2125 = vld [vmem:[%s2122 + $0x10] sm:$0x3]
        %s2126 = sld [smem:[#allocation3 + $0x1b]]
        %v2127 = vstv %s2126
        %v2128 = vmul.f32 %v2127, %v2123
        %v2129 = vmul.f32 %v2127, %v2124
        %v2130 = vadd.f32 %v2057, %v2128
        %v2131 = vadd.f32 %v2058, %v2129
        %s2132 = sld [smem:[#allocation3 + $0x3f]]
        %v2133 = vstv %s2132
        %v2134 = vmul.f32 %v2133, %v2123
        %v2135 = vmul.f32 %v2133, %v2124
        %v2136 = vadd.f32 %v2078, %v2134
        %v2137 = vadd.f32 %v2079, %v2135
        %s2138 = sld [smem:[#allocation3 + $0x63]]
        %v2139 = vstv %s2138
        %v2140 = vmul.f32 %v2139, %v2123
        %v2141 = vmul.f32 %v2139, %v2124
        %v2142 = vadd.f32 %v2099, %v2140
        %v2143 = vadd.f32 %v2100, %v2141
        %s2144 = sld [smem:[#allocation3 + $0x87]]
        %v2145 = vstv %s2144
        %v2146 = vmul.f32 %v2145, %v2123
        %v2147 = vmul.f32 %v2145, %v2124
        %v2148 = vadd.f32 %v2120, %v2146
        %v2149 = vadd.f32 %v2121, %v2147
        %s2150 = sld [smem:[#allocation3 + $0x1e]]
        %v2151 = vstv %s2150
        %v2152 = vmul.f32 %v2151, %v2123
        %v2153 = vmul.f32 %v2151, %v2124
        %v2154 = vmul.f32 %v2151, %v2125
        %v2158 = vrot.slane %v2152, 1
        %v2159 = vrot.slane %v2153, 1
        %v2160 = vsel %vm320, %v2158, %v2159
        %v2161 = vrot.slane %v2154, 1
        %v2162 = vsel %vm320, %v2159, %v2161
        %v2165 = vadd.f32 %v2130, %v2160
        %v2166 = vadd.f32 %v2131, %v2162
        %s2167 = sld [smem:[#allocation3 + $0x42]]
        %v2168 = vstv %s2167
        %v2169 = vmul.f32 %v2168, %v2123
        %v2170 = vmul.f32 %v2168, %v2124
        %v2171 = vmul.f32 %v2168, %v2125
        %v2175 = vrot.slane %v2169, 1
        %v2176 = vrot.slane %v2170, 1
        %v2177 = vsel %vm320, %v2175, %v2176
        %v2178 = vrot.slane %v2171, 1
        %v2179 = vsel %vm320, %v2176, %v2178
        %v2182 = vadd.f32 %v2136, %v2177
        %v2183 = vadd.f32 %v2137, %v2179
        %s2184 = sld [smem:[#allocation3 + $0x66]]
        %v2185 = vstv %s2184
        %v2186 = vmul.f32 %v2185, %v2123
        %v2187 = vmul.f32 %v2185, %v2124
        %v2188 = vmul.f32 %v2185, %v2125
        %v2192 = vrot.slane %v2186, 1
        %v2193 = vrot.slane %v2187, 1
        %v2194 = vsel %vm320, %v2192, %v2193
        %v2195 = vrot.slane %v2188, 1
        %v2196 = vsel %vm320, %v2193, %v2195
        %v2199 = vadd.f32 %v2142, %v2194
        %v2200 = vadd.f32 %v2143, %v2196
        %s2201 = sld [smem:[#allocation3 + $0x8a]]
        %v2202 = vstv %s2201
        %v2203 = vmul.f32 %v2202, %v2123
        %v2204 = vmul.f32 %v2202, %v2124
        %v2205 = vmul.f32 %v2202, %v2125
        %v2209 = vrot.slane %v2203, 1
        %v2210 = vrot.slane %v2204, 1
        %v2211 = vsel %vm320, %v2209, %v2210
        %v2212 = vrot.slane %v2205, 1
        %v2213 = vsel %vm320, %v2210, %v2212
        %v2216 = vadd.f32 %v2148, %v2211
        %v2217 = vadd.f32 %v2149, %v2213
        %s2218 = sld [smem:[#allocation3 + $0x21]]
        %v2219 = vstv %s2218
        %v2220 = vmul.f32 %v2219, %v2123
        %v2221 = vmul.f32 %v2219, %v2124
        %v2222 = vmul.f32 %v2219, %v2125
        %v2226 = vrot.slane %v2220, 2
        %v2227 = vrot.slane %v2221, 2
        %v2228 = vsel %vm389, %v2226, %v2227
        %v2229 = vrot.slane %v2222, 2
        %v2230 = vsel %vm389, %v2227, %v2229
        %v2233 = vadd.f32 %v2165, %v2228
        %v2234 = vadd.f32 %v2166, %v2230
        %s2235 = sld [smem:[#allocation3 + $0x45]]
        %v2236 = vstv %s2235
        %v2237 = vmul.f32 %v2236, %v2123
        %v2238 = vmul.f32 %v2236, %v2124
        %v2239 = vmul.f32 %v2236, %v2125
        %v2243 = vrot.slane %v2237, 2
        %v2244 = vrot.slane %v2238, 2
        %v2245 = vsel %vm389, %v2243, %v2244
        %v2246 = vrot.slane %v2239, 2
        %v2247 = vsel %vm389, %v2244, %v2246
        %v2250 = vadd.f32 %v2182, %v2245
        %v2251 = vadd.f32 %v2183, %v2247
        %s2252 = sld [smem:[#allocation3 + $0x69]]
        %v2253 = vstv %s2252
        %v2254 = vmul.f32 %v2253, %v2123
        %v2255 = vmul.f32 %v2253, %v2124
        %v2256 = vmul.f32 %v2253, %v2125
        %v2260 = vrot.slane %v2254, 2
        %v2261 = vrot.slane %v2255, 2
        %v2262 = vsel %vm389, %v2260, %v2261
        %v2263 = vrot.slane %v2256, 2
        %v2264 = vsel %vm389, %v2261, %v2263
        %v2267 = vadd.f32 %v2199, %v2262
        %v2268 = vadd.f32 %v2200, %v2264
        %s2269 = sld [smem:[#allocation3 + $0x8d]]
        %v2270 = vstv %s2269
        %v2271 = vmul.f32 %v2270, %v2123
        %v2272 = vmul.f32 %v2270, %v2124
        %v2273 = vmul.f32 %v2270, %v2125
        %v2277 = vrot.slane %v2271, 2
        %v2278 = vrot.slane %v2272, 2
        %v2279 = vsel %vm389, %v2277, %v2278
        %v2280 = vrot.slane %v2273, 2
        %v2281 = vsel %vm389, %v2278, %v2280
        %v2284 = vadd.f32 %v2216, %v2279
        %v2285 = vadd.f32 %v2217, %v2281
        %s2286 = sld [smem:[#allocation3 + $0x1c]]
        %v2287 = vstv %s2286
        %v2288 = vmul.f32 %v2287, %v2123
        %v2289 = vmul.f32 %v2287, %v2124
        %2292 = vrot.lane.b32.xlu0 %v2288, 127
        %v2293 = vpop.permute.xlu0 %2292
        %2294 = vrot.lane.b32.xlu0 %v2289, 127
        %v2295 = vpop.permute.xlu0 %2294
        %v2298 = vadd.f32 %v2233, %v2293
        %v2299 = vadd.f32 %v2234, %v2295
        %s2300 = sld [smem:[#allocation3 + $0x40]]
        %v2301 = vstv %s2300
        %v2302 = vmul.f32 %v2301, %v2123
        %v2303 = vmul.f32 %v2301, %v2124
        %2306 = vrot.lane.b32.xlu0 %v2302, 127
        %v2307 = vpop.permute.xlu0 %2306
        %2308 = vrot.lane.b32.xlu0 %v2303, 127
        %v2309 = vpop.permute.xlu0 %2308
        %v2312 = vadd.f32 %v2250, %v2307
        %v2313 = vadd.f32 %v2251, %v2309
        %s2314 = sld [smem:[#allocation3 + $0x64]]
        %v2315 = vstv %s2314
        %v2316 = vmul.f32 %v2315, %v2123
        %v2317 = vmul.f32 %v2315, %v2124
        %2320 = vrot.lane.b32.xlu0 %v2316, 127
        %v2321 = vpop.permute.xlu0 %2320
        %2322 = vrot.lane.b32.xlu0 %v2317, 127
        %v2323 = vpop.permute.xlu0 %2322
        %v2326 = vadd.f32 %v2267, %v2321
        %v2327 = vadd.f32 %v2268, %v2323
        %s2328 = sld [smem:[#allocation3 + $0x88]]
        %v2329 = vstv %s2328
        %v2330 = vmul.f32 %v2329, %v2123
        %v2331 = vmul.f32 %v2329, %v2124
        %2334 = vrot.lane.b32.xlu0 %v2330, 127
        %v2335 = vpop.permute.xlu0 %2334
        %2336 = vrot.lane.b32.xlu0 %v2331, 127
        %v2337 = vpop.permute.xlu0 %2336
        %v2340 = vadd.f32 %v2284, %v2335
        %v2341 = vadd.f32 %v2285, %v2337
        %s2342 = sld [smem:[#allocation3 + $0x1f]]
        %v2343 = vstv %s2342
        %v2344 = vmul.f32 %v2343, %v2123
        %v2345 = vmul.f32 %v2343, %v2124
        %v2346 = vmul.f32 %v2343, %v2125
        %v2350 = vrot.slane %v2344, 1
        %v2351 = vrot.slane %v2345, 1
        %v2352 = vsel %vm320, %v2350, %v2351
        %v2353 = vrot.slane %v2346, 1
        %v2354 = vsel %vm320, %v2351, %v2353
        %2355 = vrot.lane.b32.xlu0 %v2352, 127
        %v2356 = vpop.permute.xlu0 %2355
        %2357 = vrot.lane.b32.xlu0 %v2354, 127
        %v2358 = vpop.permute.xlu0 %2357
        %v2361 = vadd.f32 %v2298, %v2356
        %v2362 = vadd.f32 %v2299, %v2358
        %s2363 = sld [smem:[#allocation3 + $0x43]]
        %v2364 = vstv %s2363
        %v2365 = vmul.f32 %v2364, %v2123
        %v2366 = vmul.f32 %v2364, %v2124
        %v2367 = vmul.f32 %v2364, %v2125
        %v2371 = vrot.slane %v2365, 1
        %v2372 = vrot.slane %v2366, 1
        %v2373 = vsel %vm320, %v2371, %v2372
        %v2374 = vrot.slane %v2367, 1
        %v2375 = vsel %vm320, %v2372, %v2374
        %2376 = vrot.lane.b32.xlu0 %v2373, 127
        %v2377 = vpop.permute.xlu0 %2376
        %2378 = vrot.lane.b32.xlu0 %v2375, 127
        %v2379 = vpop.permute.xlu0 %2378
        %v2382 = vadd.f32 %v2312, %v2377
        %v2383 = vadd.f32 %v2313, %v2379
        %s2384 = sld [smem:[#allocation3 + $0x67]]
        %v2385 = vstv %s2384
        %v2386 = vmul.f32 %v2385, %v2123
        %v2387 = vmul.f32 %v2385, %v2124
        %v2388 = vmul.f32 %v2385, %v2125
        %v2392 = vrot.slane %v2386, 1
        %v2393 = vrot.slane %v2387, 1
        %v2394 = vsel %vm320, %v2392, %v2393
        %v2395 = vrot.slane %v2388, 1
        %v2396 = vsel %vm320, %v2393, %v2395
        %2397 = vrot.lane.b32.xlu0 %v2394, 127
        %v2398 = vpop.permute.xlu0 %2397
        %2399 = vrot.lane.b32.xlu0 %v2396, 127
        %v2400 = vpop.permute.xlu0 %2399
        %v2403 = vadd.f32 %v2326, %v2398
        %v2404 = vadd.f32 %v2327, %v2400
        %s2405 = sld [smem:[#allocation3 + $0x8b]]
        %v2406 = vstv %s2405
        %v2407 = vmul.f32 %v2406, %v2123
        %v2408 = vmul.f32 %v2406, %v2124
        %v2409 = vmul.f32 %v2406, %v2125
        %v2413 = vrot.slane %v2407, 1
        %v2414 = vrot.slane %v2408, 1
        %v2415 = vsel %vm320, %v2413, %v2414
        %v2416 = vrot.slane %v2409, 1
        %v2417 = vsel %vm320, %v2414, %v2416
        %2418 = vrot.lane.b32.xlu0 %v2415, 127
        %v2419 = vpop.permute.xlu0 %2418
        %2420 = vrot.lane.b32.xlu0 %v2417, 127
        %v2421 = vpop.permute.xlu0 %2420
        %v2424 = vadd.f32 %v2340, %v2419
        %v2425 = vadd.f32 %v2341, %v2421
        %s2426 = sld [smem:[#allocation3 + $0x22]]
        %v2427 = vstv %s2426
        %v2428 = vmul.f32 %v2427, %v2123
        %v2429 = vmul.f32 %v2427, %v2124
        %v2430 = vmul.f32 %v2427, %v2125
        %v2434 = vrot.slane %v2428, 2
        %v2435 = vrot.slane %v2429, 2
        %v2436 = vsel %vm389, %v2434, %v2435
        %v2437 = vrot.slane %v2430, 2
        %v2438 = vsel %vm389, %v2435, %v2437
        %2439 = vrot.lane.b32.xlu0 %v2436, 127
        %v2440 = vpop.permute.xlu0 %2439
        %2441 = vrot.lane.b32.xlu0 %v2438, 127
        %v2442 = vpop.permute.xlu0 %2441
        %v2445 = vadd.f32 %v2361, %v2440
        %v2446 = vadd.f32 %v2362, %v2442
        %s2447 = sld [smem:[#allocation3 + $0x46]]
        %v2448 = vstv %s2447
        %v2449 = vmul.f32 %v2448, %v2123
        %v2450 = vmul.f32 %v2448, %v2124
        %v2451 = vmul.f32 %v2448, %v2125
        %v2455 = vrot.slane %v2449, 2
        %v2456 = vrot.slane %v2450, 2
        %v2457 = vsel %vm389, %v2455, %v2456
        %v2458 = vrot.slane %v2451, 2
        %v2459 = vsel %vm389, %v2456, %v2458
        %2460 = vrot.lane.b32.xlu0 %v2457, 127
        %v2461 = vpop.permute.xlu0 %2460
        %2462 = vrot.lane.b32.xlu0 %v2459, 127
        %v2463 = vpop.permute.xlu0 %2462
        %v2466 = vadd.f32 %v2382, %v2461
        %v2467 = vadd.f32 %v2383, %v2463
        %s2468 = sld [smem:[#allocation3 + $0x6a]]
        %v2469 = vstv %s2468
        %v2470 = vmul.f32 %v2469, %v2123
        %v2471 = vmul.f32 %v2469, %v2124
        %v2472 = vmul.f32 %v2469, %v2125
        %v2476 = vrot.slane %v2470, 2
        %v2477 = vrot.slane %v2471, 2
        %v2478 = vsel %vm389, %v2476, %v2477
        %v2479 = vrot.slane %v2472, 2
        %v2480 = vsel %vm389, %v2477, %v2479
        %2481 = vrot.lane.b32.xlu0 %v2478, 127
        %v2482 = vpop.permute.xlu0 %2481
        %2483 = vrot.lane.b32.xlu0 %v2480, 127
        %v2484 = vpop.permute.xlu0 %2483
        %v2487 = vadd.f32 %v2403, %v2482
        %v2488 = vadd.f32 %v2404, %v2484
        %s2489 = sld [smem:[#allocation3 + $0x8e]]
        %v2490 = vstv %s2489
        %v2491 = vmul.f32 %v2490, %v2123
        %v2492 = vmul.f32 %v2490, %v2124
        %v2493 = vmul.f32 %v2490, %v2125
        %v2497 = vrot.slane %v2491, 2
        %v2498 = vrot.slane %v2492, 2
        %v2499 = vsel %vm389, %v2497, %v2498
        %v2500 = vrot.slane %v2493, 2
        %v2501 = vsel %vm389, %v2498, %v2500
        %2502 = vrot.lane.b32.xlu0 %v2499, 127
        %v2503 = vpop.permute.xlu0 %2502
        %2504 = vrot.lane.b32.xlu0 %v2501, 127
        %v2505 = vpop.permute.xlu0 %2504
        %v2508 = vadd.f32 %v2424, %v2503
        %v2509 = vadd.f32 %v2425, %v2505
        %s2510 = sld [smem:[#allocation3 + $0x1d]]
        %v2511 = vstv %s2510
        %v2512 = vmul.f32 %v2511, %v2123
        %v2513 = vmul.f32 %v2511, %v2124
        %2516 = vrot.lane.b32.xlu0 %v2512, 126
        %v2517 = vpop.permute.xlu0 %2516
        %2518 = vrot.lane.b32.xlu0 %v2513, 126
        %v2519 = vpop.permute.xlu0 %2518
        %v2522 = vadd.f32 %v2445, %v2517
        %v2523 = vadd.f32 %v2446, %v2519
        %s2524 = sld [smem:[#allocation3 + $0x41]]
        %v2525 = vstv %s2524
        %v2526 = vmul.f32 %v2525, %v2123
        %v2527 = vmul.f32 %v2525, %v2124
        %2530 = vrot.lane.b32.xlu0 %v2526, 126
        %v2531 = vpop.permute.xlu0 %2530
        %2532 = vrot.lane.b32.xlu0 %v2527, 126
        %v2533 = vpop.permute.xlu0 %2532
        %v2536 = vadd.f32 %v2466, %v2531
        %v2537 = vadd.f32 %v2467, %v2533
        %s2538 = sld [smem:[#allocation3 + $0x65]]
        %v2539 = vstv %s2538
        %v2540 = vmul.f32 %v2539, %v2123
        %v2541 = vmul.f32 %v2539, %v2124
        %2544 = vrot.lane.b32.xlu0 %v2540, 126
        %v2545 = vpop.permute.xlu0 %2544
        %2546 = vrot.lane.b32.xlu0 %v2541, 126
        %v2547 = vpop.permute.xlu0 %2546
        %v2550 = vadd.f32 %v2487, %v2545
        %v2551 = vadd.f32 %v2488, %v2547
        %s2552 = sld [smem:[#allocation3 + $0x89]]
        %v2553 = vstv %s2552
        %v2554 = vmul.f32 %v2553, %v2123
        %v2555 = vmul.f32 %v2553, %v2124
        %2558 = vrot.lane.b32.xlu0 %v2554, 126
        %v2559 = vpop.permute.xlu0 %2558
        %2560 = vrot.lane.b32.xlu0 %v2555, 126
        %v2561 = vpop.permute.xlu0 %2560
        %v2564 = vadd.f32 %v2508, %v2559
        %v2565 = vadd.f32 %v2509, %v2561
        %s2566 = sld [smem:[#allocation3 + $0x20]]
        %v2567 = vstv %s2566
        %v2568 = vmul.f32 %v2567, %v2123
        %v2569 = vmul.f32 %v2567, %v2124
        %v2570 = vmul.f32 %v2567, %v2125
        %v2574 = vrot.slane %v2568, 1
        %v2575 = vrot.slane %v2569, 1
        %v2576 = vsel %vm320, %v2574, %v2575
        %v2577 = vrot.slane %v2570, 1
        %v2578 = vsel %vm320, %v2575, %v2577
        %2579 = vrot.lane.b32.xlu0 %v2576, 126
        %v2580 = vpop.permute.xlu0 %2579
        %2581 = vrot.lane.b32.xlu0 %v2578, 126
        %v2582 = vpop.permute.xlu0 %2581
        %v2585 = vadd.f32 %v2522, %v2580
        %v2586 = vadd.f32 %v2523, %v2582
        %s2587 = sld [smem:[#allocation3 + $0x44]]
        %v2588 = vstv %s2587
        %v2589 = vmul.f32 %v2588, %v2123
        %v2590 = vmul.f32 %v2588, %v2124
        %v2591 = vmul.f32 %v2588, %v2125
        %v2595 = vrot.slane %v2589, 1
        %v2596 = vrot.slane %v2590, 1
        %v2597 = vsel %vm320, %v2595, %v2596
        %v2598 = vrot.slane %v2591, 1
        %v2599 = vsel %vm320, %v2596, %v2598
        %2600 = vrot.lane.b32.xlu0 %v2597, 126
        %v2601 = vpop.permute.xlu0 %2600
        %2602 = vrot.lane.b32.xlu0 %v2599, 126
        %v2603 = vpop.permute.xlu0 %2602
        %v2606 = vadd.f32 %v2536, %v2601
        %v2607 = vadd.f32 %v2537, %v2603
        %s2608 = sld [smem:[#allocation3 + $0x68]]
        %v2609 = vstv %s2608
        %v2610 = vmul.f32 %v2609, %v2123
        %v2611 = vmul.f32 %v2609, %v2124
        %v2612 = vmul.f32 %v2609, %v2125
        %v2616 = vrot.slane %v2610, 1
        %v2617 = vrot.slane %v2611, 1
        %v2618 = vsel %vm320, %v2616, %v2617
        %v2619 = vrot.slane %v2612, 1
        %v2620 = vsel %vm320, %v2617, %v2619
        %2621 = vrot.lane.b32.xlu0 %v2618, 126
        %v2622 = vpop.permute.xlu0 %2621
        %2623 = vrot.lane.b32.xlu0 %v2620, 126
        %v2624 = vpop.permute.xlu0 %2623
        %v2627 = vadd.f32 %v2550, %v2622
        %v2628 = vadd.f32 %v2551, %v2624
        %s2629 = sld [smem:[#allocation3 + $0x8c]]
        %v2630 = vstv %s2629
        %v2631 = vmul.f32 %v2630, %v2123
        %v2632 = vmul.f32 %v2630, %v2124
        %v2633 = vmul.f32 %v2630, %v2125
        %v2637 = vrot.slane %v2631, 1
        %v2638 = vrot.slane %v2632, 1
        %v2639 = vsel %vm320, %v2637, %v2638
        %v2640 = vrot.slane %v2633, 1
        %v2641 = vsel %vm320, %v2638, %v2640
        %2642 = vrot.lane.b32.xlu0 %v2639, 126
        %v2643 = vpop.permute.xlu0 %2642
        %2644 = vrot.lane.b32.xlu0 %v2641, 126
        %v2645 = vpop.permute.xlu0 %2644
        %v2648 = vadd.f32 %v2564, %v2643
        %v2649 = vadd.f32 %v2565, %v2645
        %s2650 = sld [smem:[#allocation3 + $0x23]]
        %v2651 = vstv %s2650
        %v2652 = vmul.f32 %v2651, %v2123
        %v2653 = vmul.f32 %v2651, %v2124
        %v2654 = vmul.f32 %v2651, %v2125
        %v2658 = vrot.slane %v2652, 2
        %v2659 = vrot.slane %v2653, 2
        %v2660 = vsel %vm389, %v2658, %v2659
        %v2661 = vrot.slane %v2654, 2
        %v2662 = vsel %vm389, %v2659, %v2661
        %2663 = vrot.lane.b32.xlu0 %v2660, 126
        %v2664 = vpop.permute.xlu0 %2663
        %2665 = vrot.lane.b32.xlu0 %v2662, 126
        %v2666 = vpop.permute.xlu0 %2665
        %v2669 = vadd.f32 %v2585, %v2664
        %v2670 = vadd.f32 %v2586, %v2666
        %s2671 = sld [smem:[#allocation3 + $0x47]]
        %v2672 = vstv %s2671
        %v2673 = vmul.f32 %v2672, %v2123
        %v2674 = vmul.f32 %v2672, %v2124
        %v2675 = vmul.f32 %v2672, %v2125
        %v2679 = vrot.slane %v2673, 2
        %v2680 = vrot.slane %v2674, 2
        %v2681 = vsel %vm389, %v2679, %v2680
        %v2682 = vrot.slane %v2675, 2
        %v2683 = vsel %vm389, %v2680, %v2682
        %2684 = vrot.lane.b32.xlu0 %v2681, 126
        %v2685 = vpop.permute.xlu0 %2684
        %2686 = vrot.lane.b32.xlu0 %v2683, 126
        %v2687 = vpop.permute.xlu0 %2686
        %v2690 = vadd.f32 %v2606, %v2685
        %v2691 = vadd.f32 %v2607, %v2687
        %s2692 = sld [smem:[#allocation3 + $0x6b]]
        %v2693 = vstv %s2692
        %v2694 = vmul.f32 %v2693, %v2123
        %v2695 = vmul.f32 %v2693, %v2124
        %v2696 = vmul.f32 %v2693, %v2125
        %v2700 = vrot.slane %v2694, 2
        %v2701 = vrot.slane %v2695, 2
        %v2702 = vsel %vm389, %v2700, %v2701
        %v2703 = vrot.slane %v2696, 2
        %v2704 = vsel %vm389, %v2701, %v2703
        %2705 = vrot.lane.b32.xlu0 %v2702, 126
        %v2706 = vpop.permute.xlu0 %2705
        %2707 = vrot.lane.b32.xlu0 %v2704, 126
        %v2708 = vpop.permute.xlu0 %2707
        %v2711 = vadd.f32 %v2627, %v2706
        %v2712 = vadd.f32 %v2628, %v2708
        %s2713 = sld [smem:[#allocation3 + $0x8f]]
        %v2714 = vstv %s2713
        %v2715 = vmul.f32 %v2714, %v2123
        %v2716 = vmul.f32 %v2714, %v2124
        %v2717 = vmul.f32 %v2714, %v2125
        %v2721 = vrot.slane %v2715, 2
        %v2722 = vrot.slane %v2716, 2
        %v2723 = vsel %vm389, %v2721, %v2722
        %v2724 = vrot.slane %v2717, 2
        %v2725 = vsel %vm389, %v2722, %v2724
        %2726 = vrot.lane.b32.xlu0 %v2723, 126
        %v2727 = vpop.permute.xlu0 %2726
        %2728 = vrot.lane.b32.xlu0 %v2725, 126
        %v2729 = vpop.permute.xlu0 %2728
        %v2732 = vadd.f32 %v2648, %v2727
        %v2733 = vadd.f32 %v2649, %v2729
        %v2734 = vrcp.pop %v2669
        %v2735 = vmul.f32 -1.5, %v2734
        %v2736 = vrcp.pop %v2670
        %v2737 = vmul.f32 -1.5, %v2736
        %v2738 = vrcp.pop %v2690
        %v2739 = vmul.f32 -1.5, %v2738
        %v2740 = vrcp.pop %v2691
        %v2741 = vmul.f32 -1.5, %v2740
        %v2742 = vrcp.pop %v2711
        %v2743 = vmul.f32 -1.5, %v2742
        %v2744 = vrcp.pop %v2712
        %v2745 = vmul.f32 -1.5, %v2744
        %v2746 = vrcp.pop %v2732
        %v2747 = vmul.f32 -1.5, %v2746
        %v2748 = vrcp.pop %v2733
        %v2749 = vmul.f32 -1.5, %v2748
        %v2750 = vcombine.low %v2735, %v2743
        %v2751 = vcombine.high %v2735, %v2743
        %v2753 = vunpack.c.l.s4 1983009808
        %v2754 = vunpack.c.0.s8 %v2753
        %v2755 = vlaneseq
        %v2756 = vshrl.u32 %v2755, 7
        %v2757 = vsub.s32 %v2754, %v2756
        %v2758 = vrot.slane %v2750, %v2757
        %v2760 = vunpack.c.l.s4 1983009808
        %v2761 = vunpack.c.0.s8 %v2760
        %v2762 = vlaneseq
        %v2763 = vshrl.u32 %v2762, 7
        %v2764 = vsub.s32 %v2761, %v2763
        %v2765 = vrot.slane %v2751, %v2764
        %v2766 = vcombine.low %v2739, %v2747
        %v2767 = vcombine.high %v2739, %v2747
        %v2769 = vunpack.c.l.s4 1983009808
        %v2770 = vunpack.c.0.s8 %v2769
        %v2771 = vlaneseq
        %v2772 = vshrl.u32 %v2771, 7
        %v2773 = vsub.s32 %v2770, %v2772
        %v2774 = vrot.slane %v2766, %v2773
        %v2776 = vunpack.c.l.s4 1983009808
        %v2777 = vunpack.c.0.s8 %v2776
        %v2778 = vlaneseq
        %v2779 = vshrl.u32 %v2778, 7
        %v2780 = vsub.s32 %v2777, %v2779
        %v2781 = vrot.slane %v2767, %v2780
        %v2782 = vcombine.low %v2758, %v2774
        %v2783 = vcombine.high %v2758, %v2774
        %v2785 = vunpack.c.l.s4 1934713408
        %v2786 = vunpack.c.0.s8 %v2785
        %v2787 = vlaneseq
        %v2788 = vshrl.u32 %v2787, 7
        %v2789 = vsub.s32 %v2786, %v2788
        %v2790 = vrot.slane %v2782, %v2789
        %v2792 = vunpack.c.l.s4 1934713408
        %v2793 = vunpack.c.0.s8 %v2792
        %v2794 = vlaneseq
        %v2795 = vshrl.u32 %v2794, 7
        %v2796 = vsub.s32 %v2793, %v2795
        %v2797 = vrot.slane %v2783, %v2796
        %v2798 = vcombine.low %v2765, %v2781
        %v2799 = vcombine.high %v2765, %v2781
        %v2801 = vunpack.c.l.s4 1934713408
        %v2802 = vunpack.c.0.s8 %v2801
        %v2803 = vlaneseq
        %v2804 = vshrl.u32 %v2803, 7
        %v2805 = vsub.s32 %v2802, %v2804
        %v2806 = vrot.slane %v2798, %v2805
        %v2808 = vunpack.c.l.s4 1934713408
        %v2809 = vunpack.c.0.s8 %v2808
        %v2810 = vlaneseq
        %v2811 = vshrl.u32 %v2810, 7
        %v2812 = vsub.s32 %v2809, %v2811
        %v2813 = vrot.slane %v2799, %v2812
        %v2814 = vcombine.high %v2790, 0.0
        %v2815 = vcombine.high %v2797, 0.0
        %v2816 = vcombine.high %v2806, 0.0
        %v2817 = vcombine.high %v2813, 0.0
        %v2818 = vcombine.low %v2737, %v2745
        %v2819 = vcombine.high %v2737, %v2745
        %v2821 = vunpack.c.l.s4 1983009808
        %v2822 = vunpack.c.0.s8 %v2821
        %v2823 = vlaneseq
        %v2824 = vshrl.u32 %v2823, 7
        %v2825 = vsub.s32 %v2822, %v2824
        %v2826 = vrot.slane %v2818, %v2825
        %v2828 = vunpack.c.l.s4 1983009808
        %v2829 = vunpack.c.0.s8 %v2828
        %v2830 = vlaneseq
        %v2831 = vshrl.u32 %v2830, 7
        %v2832 = vsub.s32 %v2829, %v2831
        %v2833 = vrot.slane %v2819, %v2832
        %v2834 = vcombine.low %v2741, %v2749
        %v2835 = vcombine.high %v2741, %v2749
        %v2837 = vunpack.c.l.s4 1983009808
        %v2838 = vunpack.c.0.s8 %v2837
        %v2839 = vlaneseq
        %v2840 = vshrl.u32 %v2839, 7
        %v2841 = vsub.s32 %v2838, %v2840
        %v2842 = vrot.slane %v2834, %v2841
        %v2844 = vunpack.c.l.s4 1983009808
        %v2845 = vunpack.c.0.s8 %v2844
        %v2846 = vlaneseq
        %v2847 = vshrl.u32 %v2846, 7
        %v2848 = vsub.s32 %v2845, %v2847
        %v2849 = vrot.slane %v2835, %v2848
        %v2850 = vcombine.low %v2826, %v2842
        %v2851 = vcombine.high %v2826, %v2842
        %v2853 = vunpack.c.l.s4 1934713408
        %v2854 = vunpack.c.0.s8 %v2853
        %v2855 = vlaneseq
        %v2856 = vshrl.u32 %v2855, 7
        %v2857 = vsub.s32 %v2854, %v2856
        %v2858 = vrot.slane %v2850, %v2857
        %v2860 = vunpack.c.l.s4 1934713408
        %v2861 = vunpack.c.0.s8 %v2860
        %v2862 = vlaneseq
        %v2863 = vshrl.u32 %v2862, 7
        %v2864 = vsub.s32 %v2861, %v2863
        %v2865 = vrot.slane %v2851, %v2864
        %v2866 = vcombine.low %v2833, %v2849
        %v2867 = vcombine.high %v2833, %v2849
        %v2869 = vunpack.c.l.s4 1934713408
        %v2870 = vunpack.c.0.s8 %v2869
        %v2871 = vlaneseq
        %v2872 = vshrl.u32 %v2871, 7
        %v2873 = vsub.s32 %v2870, %v2872
        %v2874 = vrot.slane %v2866, %v2873
        %v2876 = vunpack.c.l.s4 1934713408
        %v2877 = vunpack.c.0.s8 %v2876
        %v2878 = vlaneseq
        %v2879 = vshrl.u32 %v2878, 7
        %v2880 = vsub.s32 %v2877, %v2879
        %v2881 = vrot.slane %v2867, %v2880
        %v2882 = vcombine.high %v2858, 0.0
        %v2883 = vcombine.high %v2865, 0.0
        %v2884 = vcombine.high %v2874, 0.0
        %v2885 = vcombine.high %v2881, 0.0
        %2887 = vrot.lane.b32.xlu0 %v2814, 16
        %v2888 = vpop.permute.xlu0 %2887
        %2891 = vrot.lane.b32.xlu0 %v2797, 32
        %v2892 = vpop.permute.xlu0 %2891
        %2895 = vrot.lane.b32.xlu0 %v2815, 48
        %v2896 = vpop.permute.xlu0 %2895
        %2899 = vrot.lane.b32.xlu0 %v2806, 64
        %v2900 = vpop.permute.xlu0 %2899
        %2903 = vrot.lane.b32.xlu0 %v2816, 80
        %v2904 = vpop.permute.xlu0 %2903
        %2907 = vrot.lane.b32.xlu0 %v2813, 96
        %v2908 = vpop.permute.xlu0 %2907
        %2911 = vrot.lane.b32.xlu0 %v2817, 112
        %v2912 = vpop.permute.xlu0 %2911
        %2915 = vrot.lane.b32.xlu0 %v2882, 16
        %v2916 = vpop.permute.xlu0 %2915
        %2919 = vrot.lane.b32.xlu0 %v2865, 32
        %v2920 = vpop.permute.xlu0 %2919
        %2923 = vrot.lane.b32.xlu0 %v2883, 48
        %v2924 = vpop.permute.xlu0 %2923
        %2927 = vrot.lane.b32.xlu0 %v2874, 64
        %v2928 = vpop.permute.xlu0 %2927
        %2931 = vrot.lane.b32.xlu0 %v2884, 80
        %v2932 = vpop.permute.xlu0 %2931
        %2935 = vrot.lane.b32.xlu0 %v2881, 96
        %v2936 = vpop.permute.xlu0 %2935
        %2939 = vrot.lane.b32.xlu0 %v2885, 112
        %v2940 = vpop.permute.xlu0 %2939
        %vm2942 = vcmask 130048
        %v2943 = vsel %vm2942, %v2790, %v2888
        %vm2944 = vcmask 261120
        %v2945 = vsel %vm2944, %v2943, %v2892
        %vm2946 = vcmask 392192
        %v2947 = vsel %vm2946, %v2945, %v2896
        %vm2948 = vcmask 523264
        %v2949 = vsel %vm2948, %v2947, %v2900
        %vm2950 = vcmask 654336
        %v2951 = vsel %vm2950, %v2949, %v2904
        %vm2952 = vcmask 785408
        %v2953 = vsel %vm2952, %v2951, %v2908
        %vm2954 = vcmask 916480
        %v2955 = vsel %vm2954, %v2953, %v2912
        %v2956 = vsel %vm2942, %v2858, %v2916
        %v2957 = vsel %vm2944, %v2956, %v2920
        %v2958 = vsel %vm2946, %v2957, %v2924
        %v2959 = vsel %vm2948, %v2958, %v2928
        %v2960 = vsel %vm2950, %v2959, %v2932
        %v2961 = vsel %vm2952, %v2960, %v2936
        %v2962 = vsel %vm2954, %v2961, %v2940
        %v2965 = vcombine.low %v2955, %v2962
        %2967 = vst [vmem:[%s213] sm:$0xff] %v2965
        %s2968 = sand.u32 %s98, 1
        %s2969 = scalar_lea.sflag [#allocation5], %s2968
        %s2970 = sand.u32 %s98, 1
        %s2971 = smul.addr %s2970, 8
        %s2972 = scalar_lea.vmem [#allocation10], %s2971
        // Predicated region
        $region45: #{tpu_custom_call.1} parent=31 // pred_check
          %p2973 = pneg %p108
        $region46: #{tpu_custom_call.1} parent=31 // pred_check_branch
          %2975 = sbr.rel (%p2973) target = $region48
        $region47: #{tpu_custom_call.1} parent=31 // pred_region
          %s2977 = ssub.s32 128, 128
          %2978 = vsyncadd %s2969, %s2977
          %s2979 = smul.addr %s22, 2
          %s2980 = smul.addr %s2979, 64
          %s2981 = scalar_lea.hbm %s3, %s2980
          %s2983 = sshll.u32 %s2972, 4
          %s2984 = int_to_ptr.vmem [resolvable:$true] %s2983
          %2986 = dma.vmem_to_hbm [thread:$0]  %s2984, 128, %s2981, %s2969
        $region48: #{tpu_custom_call.1} parent=31 // pred_fallthru
          _
      $region32: #{tpu_custom_call.1} parent=5 // pred_fallthru
        _
      %p2987 = scmp.le.s32.totalorder 2, %s17
      // Predicated region
      $region49: #{tpu_custom_call.1} parent=5 // pred_check
        %p2988 = pneg %p2987
      $region50: #{tpu_custom_call.1} parent=5 // pred_check_branch
        %2990 = sbr.rel (%p2988) target = $region52
      $region51: #{tpu_custom_call.1} parent=5 // pred_region
        %s2991 = ssub.s32 %s17, 2
        // Predicated region
        $region53: #{tpu_custom_call.1} parent=51 // pred_check
          %p2992 = pneg %p114
        $region54: #{tpu_custom_call.1} parent=51 // pred_check_branch
          %2994 = sbr.rel (%p2992) target = $region56
        $region55: #{tpu_custom_call.1} parent=51 // pred_region
          %s2995 = sand.u32 %s99, 1
          %s2996 = scalar_lea.sflag [#allocation5], %s2995
          %s2997 = sand.u32 %s99, 1
          %s2998 = smul.addr %s2997, 8
          %s2999 = scalar_lea.vmem [#allocation10], %s2998
          %3000 = dma.done %s2996, 128
        $region56: #{tpu_custom_call.1} parent=51 // pred_fallthru
          _
      $region52: #{tpu_custom_call.1} parent=5 // pred_fallthru
        _
    $region6: #{tpu_custom_call.1} parent=1 // loop_footer
      %s21 = sadd.s32 1, %s17
    $region7: #{tpu_custom_call.1} parent=1 // loop_footer_branch
      %16 = sbr.rel target = $region3
    $region8: #{tpu_custom_call.1} parent=1 // loop_exit
      _
    %3001 = vsyncpa [#allocation4], 1
    %s3002 = scalar_lea.sflag [#allocation4], 1
    %3003 = vsyncpa %s3002, 1
    %3004 = vsyncpa [#allocation5], 1
    %s3005 = scalar_lea.sflag [#allocation5], 1
    %3006 = vsyncpa %s3005, 1
    %3007 = vsyncpa [#allocation6], 1
    %s3008 = scalar_lea.sflag [#allocation6], 1
    %3009 = vsyncpa %s3008, 1
    %3010 = vsyncpa [#allocation7], 1
    %s3011 = scalar_lea.sflag [#allocation7], 1
    %3012 = vsyncpa %s3011, 1

</llo_original>
